<compile_context>
chip_gen: v5e
topology: v5e:2x2
jax: 0.10.0
libtpu: 0.0.40
codegen_flags: <defaults>
</compile_context>

<pallas_src>
import jax
import jax.numpy as jnp
import numpy as np
from jax import lax
from jax.experimental import pallas as pl
from jax.experimental.pallas import tpu as pltpu

LOC_EMB = 16          # loc_emb_dim
TIM_EMB = 16          # tim_emb_dim (== LOC_EMB so the branches fuse cleanly)
INPUT_DIM = 5         # input_dim
POINT_SIZE = 2500     # module default vocab (loc embedding is gathered in the wrapper)
NUM_HOURS = 24
FUSED = 3 * LOC_EMB   # 48: fused [loc|arr|dur] working width (one vreg lane-group)
D4 = 3 * INPUT_DIM    # 15: fc4 native width (zero-padded to FUSED inside the kernel)
NUM_SLOTS = 10        # packed weight slots (see pack_params)


# ----------------------------- Pallas kernel ------------------------------- #

def single_dis_kernel(ad_idx_ref, loc_ref, table_ref, w_ref, b_ref, out_ref):
    """One grid step = one block of BT trajectory points.

    ad_idx_ref: (BT, 2)   int32  rows of the arr/dur table: [arr_hour, dur_hour+24]
    loc_ref:    (BT, 48)  bf16   pre-gathered loc embedding in lanes 0..15, zeros elsewhere
    table_ref:  (48, 48)  bf16   arr emb rows 0..23 -> cols 16..31, dur rows 24..47 -> cols 32..47
    w_ref:      (10,48,48) bf16  packed weights, slots:
                  0..3  fused branch ResNet layers (RN1.L1, RN1.L2, RN2.L1, RN2.L2),
                        block-diagonal over the 3 branches
                  4     fused branch Linear(16,5)x3 -> lanes 0..14 (15..47 stay 0)
                  5..8  fc4 ResNet(15) layers, zero-padded into the top-left 15x15
                  9     fc4 Linear(15,1) stored as a ROW: w[9, 0, 0:15]
    b_ref:      (10, 48)  f32    matching biases (zero in all padded lanes)
    out_ref:    (1, BT)   f32    sigmoid scores for this block (lane-dense)
    """
    bt = ad_idx_ref.shape[0]
    n_ad = table_ref.shape[0]                                       # 48 = 2 * NUM_HOURS

    # arr/dur embedding lookup as a tiny bf16 one-hot matmul (K = 48, single MXU tile).
    idx = ad_idx_ref[...]                                           # (BT, 2), dur already offset
    lane = lax.broadcasted_iota(jnp.int32, (bt, n_ad), 1)
    onehot = ((lane == idx[:, 0:1]) | (lane == idx[:, 1:2])).astype(jnp.bfloat16)
    x = jnp.dot(onehot, table_ref[...],
                preferred_element_type=jnp.float32)                 # (BT, 48), lanes 0..15 == 0
    x = x + loc_ref[...].astype(jnp.float32)                        # merge loc into lanes 0..15

    def layer(v_in, k):
        return jnp.dot(v_in.astype(jnp.bfloat16), w_ref[k],
                       preferred_element_type=jnp.float32) + b_ref[pl.ds(k, 1), :]

    # fc1/fc2/fc3 fused: 2x block-diagonal ResNet(48) + block-diagonal Linear -> "point".
    for r in range(2):
        h = jnp.maximum(layer(x, 2 * r), 0.0)
        h = layer(h, 2 * r + 1)
        x = jnp.maximum(h + x, 0.0)
    point = layer(x, 4)          # lanes 0..14 = concat([loc, arr, dur]); lanes 15..47 == 0

    # fc4: 2x ResNet(15) (zero-padded to the 48-lane working width) + Linear(15, 1).
    for r in range(2):
        h = jnp.maximum(layer(point, 5 + 2 * r), 0.0)
        h = layer(h, 6 + 2 * r)
        point = jnp.maximum(h + point, 0.0)

    w_out = w_ref[9][0:1, :]                                        # (1, 48) bf16, row-stored Linear(15,1)
    b_out = b_ref[pl.ds(9, 1), :][:, 0:1]                           # (1, 1)  f32
    z = lax.dot_general(w_out, point.astype(jnp.bfloat16),
                        (((1,), (1,)), ((), ())),
                        preferred_element_type=jnp.float32)         # (1, BT) lane-dense
    out_ref[...] = jax.nn.sigmoid(z + b_out)


# ------------------------------ JAX wrapper -------------------------------- #

def _pick_num_blocks(batch):
    """2 blocks on dual-TensorCore chips (v7x) so both cores get work, else 1."""
    kind = ""
    try:
        kind = jax.devices()[0].device_kind.lower()
    except Exception:
        pass
    if "v7" in kind and batch % 256 == 0:
        return 2
    return 1


def single_dis_forward(x_idx, packed, *, num_blocks=None):
    """Batched forward.  x_idx: int32 (B, 3) rows = [loc_id, arrival_hour, duration_hour].

    Returns (B, 1): row b equals the original module's forward(x_idx[b])."""
    b = x_idx.shape[0]
    if num_blocks is None:
        num_blocks = _pick_num_blocks(b)
    if b % num_blocks != 0 or (num_blocks > 1 and (b // num_blocks) % 128 != 0):
        num_blocks = 1                                   # fall back to a single big block
    block_b = b // num_blocks

    loc_id = jnp.clip(x_idx[:, 0].astype(jnp.int32), 0, packed["emb_loc"].shape[0] - 1)
    arr_id = jnp.clip(x_idx[:, 1].astype(jnp.int32), 0, NUM_HOURS - 1)
    dur_id = jnp.clip(x_idx[:, 2].astype(jnp.int32), 0, NUM_HOURS - 1)

    # Real-vocab-safe loc gather in the wrapper (16 floats/row), padded to 48 lanes.
    loc_e = jnp.take(packed["emb_loc"], loc_id, axis=0)                    # (B, 16)
    loc_pad = jnp.pad(loc_e, ((0, 0), (0, FUSED - LOC_EMB))).astype(jnp.bfloat16)
    ad_idx = jnp.stack([arr_id, dur_id + NUM_HOURS], axis=1)               # (B, 2)

    out = pl.pallas_call(
        single_dis_kernel,
        out_shape=jax.ShapeDtypeStruct((1, b), jnp.float32),
        grid_spec=pltpu.PrefetchScalarGridSpec(
            num_scalar_prefetch=0,
            grid=(num_blocks,),
            in_specs=[
                pl.BlockSpec((block_b, 2), lambda i: (i, 0)),              # streamed arr/dur ids
                pl.BlockSpec((block_b, FUSED), lambda i: (i, 0)),          # streamed loc embedding
                pl.BlockSpec((2 * NUM_HOURS, FUSED), lambda i: (0, 0)),    # resident arr/dur table
                pl.BlockSpec((NUM_SLOTS, FUSED, FUSED), lambda i: (0, 0, 0)),  # resident weights
                pl.BlockSpec((NUM_SLOTS, FUSED), lambda i: (0, 0)),        # resident biases
            ],
            out_specs=pl.BlockSpec((1, block_b), lambda i: (0, i)),        # lane-dense scores
        ),
        compiler_params=pltpu.CompilerParams(
            dimension_semantics=("parallel",)),                            # dual-TC sharding on v7x
    )(ad_idx, loc_pad, packed["table_ad"], packed["W"], packed["B"])
    return out.reshape(b, 1)


# --------------------------- parameter creation ----------------------------- #

def _linear(key, fan_in, fan_out):
    kw, kb = jax.random.split(key)
    bound = 1.0 / np.sqrt(fan_in)
    W = jax.random.uniform(kw, (fan_in, fan_out), jnp.float32, -bound, bound)
    bias = jax.random.uniform(kb, (fan_out,), jnp.float32, -bound, bound)
    return W, bias


def init_params(key):
    """Original (unfused) PyTorch-style parameters."""
    keys = iter(jax.random.split(key, 64))
    p = {}
    p["emb_loc"] = jax.random.normal(next(keys), (POINT_SIZE, LOC_EMB), jnp.float32)
    p["emb_arr"] = jax.random.normal(next(keys), (NUM_HOURS, TIM_EMB), jnp.float32)
    p["emb_dur"] = jax.random.normal(next(keys), (NUM_HOURS, TIM_EMB), jnp.float32)

    # fc1/fc2/fc3: ResNet(16) x2 (each = two Linear(16,16)) + Linear(16, 5)
    rw, rb, lw, lb = [], [], [], []
    for _branch in range(3):
        for _res in range(2):
            for _layer in range(2):
                W, bias = _linear(next(keys), LOC_EMB, LOC_EMB)
                rw.append(W); rb.append(bias)
        W, bias = _linear(next(keys), LOC_EMB, INPUT_DIM)
        lw.append(W); lb.append(bias)
    p["rw123"] = jnp.stack(rw)            # (12, 16, 16), idx = branch*4 + res*2 + layer
    p["rb123"] = jnp.stack(rb)            # (12, 16)
    p["lw123"] = jnp.stack(lw)            # (3, 16, 5)
    p["lb123"] = jnp.stack(lb)            # (3, 5)

    # fc4: ResNet(15) x2 + Linear(15, 1)
    rw4, rb4 = [], []
    for _res in range(2):
        for _layer in range(2):
            W, bias = _linear(next(keys), D4, D4)
            rw4.append(W); rb4.append(bias)
    p["rw4"] = jnp.stack(rw4)             # (4, 15, 15)
    p["rb4"] = jnp.stack(rb4)             # (4, 15)
    W, bias = _linear(next(keys), D4, 1)
    p["lw4"] = W                          # (15, 1)
    p["lb4"] = bias.reshape(1, 1)         # (1, 1)
    return p


def pack_params(p):
    """Pack original params into the fused/padded bf16 layout the kernel expects."""
    # arr/dur fused table: rows 0..23 = arr hours -> cols 16..31, rows 24..47 = dur -> cols 32..47
    table_ad = np.zeros((2 * NUM_HOURS, FUSED), np.float32)
    table_ad[0:NUM_HOURS, 16:32] = np.asarray(p["emb_arr"])
    table_ad[NUM_HOURS:, 32:48] = np.asarray(p["emb_dur"])

    W = np.zeros((NUM_SLOTS, FUSED, FUSED), np.float32)
    Bv = np.zeros((NUM_SLOTS, FUSED), np.float32)

    rw = np.asarray(p["rw123"]); rb = np.asarray(p["rb123"])
    for s in range(4):                      # branch ResNet layers, block-diag over 3 branches
        for br in range(3):
            W[s, br * 16:(br + 1) * 16, br * 16:(br + 1) * 16] = rw[br * 4 + s]
            Bv[s, br * 16:(br + 1) * 16] = rb[br * 4 + s]

    lw = np.asarray(p["lw123"]); lb = np.asarray(p["lb123"])
    for br in range(3):                     # branch Linear(16,5), block-diag -> 15 lanes (+33 zero)
        W[4, br * 16:(br + 1) * 16, br * INPUT_DIM:(br + 1) * INPUT_DIM] = lw[br]
        Bv[4, br * INPUT_DIM:(br + 1) * INPUT_DIM] = lb[br]

    rw4 = np.asarray(p["rw4"]); rb4 = np.asarray(p["rb4"])
    for s in range(4):                      # fc4 ResNet(15) layers, zero-padded into 48x48
        W[5 + s, 0:D4, 0:D4] = rw4[s]
        Bv[5 + s, 0:D4] = rb4[s]

    W[9, 0, 0:D4] = np.asarray(p["lw4"])[:, 0]     # fc4 Linear(15,1) stored as a row
    Bv[9, 0] = float(np.asarray(p["lb4"]).reshape(()))

    return dict(emb_loc=jnp.asarray(p["emb_loc"], jnp.float32),
                table_ad=jnp.asarray(table_ad, jnp.bfloat16),
                W=jnp.asarray(W, jnp.bfloat16),
                B=jnp.asarray(Bv, jnp.float32))


# ---------------------------- plain-JAX reference --------------------------- #

def reference_forward(x_idx, p):
    """Batched reference using the original (unfused) f32 weights. x_idx: (B, 3)."""
    def resnet(x, W1, b1, W2, b2):
        h = jnp.maximum(x @ W1 + b1, 0.0)
        h = h @ W2 + b2
        return jnp.maximum(h + x, 0.0)

    emb = [p["emb_loc"][x_idx[:, 0]], p["emb_arr"][x_idx[:, 1]], p["emb_dur"][x_idx[:, 2]]]
    outs = []
    for br in range(3):
        x = emb[br]
        for r in range(2):
            k = br * 4 + r * 2
            x = resnet(x, p["rw123"][k], p["rb123"][k], p["rw123"][k + 1], p["rb123"][k + 1])
        outs.append(x @ p["lw123"][br] + p["lb123"][br])
    point = jnp.concatenate(outs, axis=-1)                     # (B, 15)
    for r in range(2):
        k = r * 2
        point = resnet(point, p["rw4"][k], p["rb4"][k], p["rw4"][k + 1], p["rb4"][k + 1])
    return jax.nn.sigmoid(point @ p["lw4"] + p["lb4"])          # (B, 1)


# ----------------------------------- main ----------------------------------- #

if __name__ == "__main__":
    key = jax.random.PRNGKey(0)
    kp, kx = jax.random.split(key)
    params = init_params(kp)
    packed = pack_params(params)

    B = 512  # batch of trajectory points; each row = [loc_id, arrival_hour, duration_hour]
    k1, k2, k3 = jax.random.split(kx, 3)
    x = jnp.stack([
        jax.random.randint(k1, (B,), 0, POINT_SIZE),
        jax.random.randint(k2, (B,), 0, NUM_HOURS),
        jax.random.randint(k3, (B,), 0, NUM_HOURS),
    ], axis=1).astype(jnp.int32)                               # (B, 3)

    out = jax.block_until_ready(single_dis_forward(x, packed))
    ref = jax.block_until_ready(reference_forward(x, params))

    # Tolerance covers bf16 weights/activations on the MXU path vs. the f32 XLA
    # reference (which itself uses bf16-class MXU passes at default precision);
    # any structural/wiring error is orders of magnitude larger.
    np.testing.assert_allclose(np.asarray(out), np.asarray(ref), rtol=3e-2, atol=3e-2)

    print("KERNEL_OK")
</pallas_src>

<mosaic_0001>
module attributes {stable_mosaic.version = 11 : i64} {
  func.func @single_dis_kernel(%arg0: i32, %arg1: memref<512x2xi32, #tpu.memory_space<vmem>>, %arg2: memref<512x48xbf16, #tpu.memory_space<vmem>>, %arg3: memref<48x48xbf16, #tpu.memory_space<vmem>>, %arg4: memref<10x48x48xbf16, #tpu.memory_space<vmem>>, %arg5: memref<10x48xf32, #tpu.memory_space<vmem>>, %arg6: memref<1x512xf32, #tpu.memory_space<vmem>>) attributes {dimension_semantics = [#tpu.dimension_semantics<parallel>], iteration_bounds = array<i64: 1>, scalar_prefetch = 0 : i64, scratch_operands = 0 : i64, tpu.core_type = #tpu.core_type<tc>, window_params = [{transform_indices = @transform_0, window_bounds = array<i64: 512, 2>}, {transform_indices = @transform_1, window_bounds = array<i64: 512, 48>}, {pipeline_mode = #tpu.pipeline_mode<synchronous>, transform_indices = @transform_2, window_bounds = array<i64: 48, 48>}, {pipeline_mode = #tpu.pipeline_mode<synchronous>, transform_indices = @transform_3, window_bounds = array<i64: 10, 48, 48>}, {pipeline_mode = #tpu.pipeline_mode<synchronous>, transform_indices = @transform_4, window_bounds = array<i64: 10, 48>}, {transform_indices = @transform_5, window_bounds = array<i64: 1, 512>}]} {
    %c0 = arith.constant 0 : index
    %c0_0 = arith.constant 0 : index
    %0 = vector.load %arg1[%c0, %c0_0] : memref<512x2xi32, #tpu.memory_space<vmem>>, vector<512x2xi32>
    %1 = tpu.iota {dimensions = array<i32: 1>} : vector<512x48xi32>
    %2 = vector.extract_strided_slice %0 {offsets = [0, 0], sizes = [512, 1], strides = [1, 1]} : vector<512x2xi32> to vector<512x1xi32>
    %3 = vector.broadcast %2 : vector<512x1xi32> to vector<512x48xi32>
    %4 = arith.cmpi eq, %1, %3 : vector<512x48xi32>
    %5 = vector.extract_strided_slice %0 {offsets = [0, 1], sizes = [512, 1], strides = [1, 1]} : vector<512x2xi32> to vector<512x1xi32>
    %6 = vector.broadcast %5 : vector<512x1xi32> to vector<512x48xi32>
    %7 = arith.cmpi eq, %1, %6 : vector<512x48xi32>
    %8 = arith.ori %4, %7 : vector<512x48xi1>
    %9 = arith.extui %8 : vector<512x48xi1> to vector<512x48xi32>
    %10 = arith.sitofp %9 : vector<512x48xi32> to vector<512x48xf32>
    %11 = arith.truncf %10 : vector<512x48xf32> to vector<512x48xbf16>
    %c0_1 = arith.constant 0 : index
    %c0_2 = arith.constant 0 : index
    %12 = vector.load %arg3[%c0_1, %c0_2] : memref<48x48xbf16, #tpu.memory_space<vmem>>, vector<48x48xbf16>
    %cst = arith.constant dense<0.000000e+00> : vector<512x48xf32>
    %13 = tpu.matmul %11, %12, %cst {dimension_numbers = #tpu.dot_dimension_numbers<[1], [0], [0], [1], [0, 0, 1, 1], [], []>} : vector<512x48xbf16>, vector<48x48xbf16>, vector<512x48xf32> -> vector<512x48xf32>
    %c0_3 = arith.constant 0 : index
    %c0_4 = arith.constant 0 : index
    %14 = vector.load %arg2[%c0_3, %c0_4] : memref<512x48xbf16, #tpu.memory_space<vmem>>, vector<512x48xbf16>
    %15 = arith.extf %14 : vector<512x48xbf16> to vector<512x48xf32>
    %16 = arith.addf %13, %15 : vector<512x48xf32>
    %17 = arith.truncf %16 : vector<512x48xf32> to vector<512x48xbf16>
    %c0_5 = arith.constant 0 : index
    %c0_6 = arith.constant 0 : index
    %c0_7 = arith.constant 0 : index
    %18 = vector.load %arg4[%c0_5, %c0_6, %c0_7] : memref<10x48x48xbf16, #tpu.memory_space<vmem>>, vector<1x48x48xbf16>
    %19 = vector.shape_cast %18 : vector<1x48x48xbf16> to vector<48x48xbf16>
    %cst_8 = arith.constant dense<0.000000e+00> : vector<512x48xf32>
    %20 = tpu.matmul %17, %19, %cst_8 {dimension_numbers = #tpu.dot_dimension_numbers<[1], [0], [0], [1], [0, 0, 1, 1], [], []>} : vector<512x48xbf16>, vector<48x48xbf16>, vector<512x48xf32> -> vector<512x48xf32>
    %c0_9 = arith.constant 0 : index
    %c0_10 = arith.constant 0 : index
    %21 = vector.load %arg5[%c0_9, %c0_10] : memref<10x48xf32, #tpu.memory_space<vmem>>, vector<1x48xf32>
    %22 = vector.broadcast %21 : vector<1x48xf32> to vector<512x48xf32>
    %23 = arith.addf %20, %22 : vector<512x48xf32>
    %cst_11 = arith.constant 0.000000e+00 : f32
    %24 = vector.broadcast %cst_11 : f32 to vector<512x48xf32>
    %25 = arith.maximumf %23, %24 : vector<512x48xf32>
    %26 = arith.truncf %25 : vector<512x48xf32> to vector<512x48xbf16>
    %c1 = arith.constant 1 : index
    %c0_12 = arith.constant 0 : index
    %c0_13 = arith.constant 0 : index
    %27 = vector.load %arg4[%c1, %c0_12, %c0_13] : memref<10x48x48xbf16, #tpu.memory_space<vmem>>, vector<1x48x48xbf16>
    %28 = vector.shape_cast %27 : vector<1x48x48xbf16> to vector<48x48xbf16>
    %cst_14 = arith.constant dense<0.000000e+00> : vector<512x48xf32>
    %29 = tpu.matmul %26, %28, %cst_14 {dimension_numbers = #tpu.dot_dimension_numbers<[1], [0], [0], [1], [0, 0, 1, 1], [], []>} : vector<512x48xbf16>, vector<48x48xbf16>, vector<512x48xf32> -> vector<512x48xf32>
    %c1_15 = arith.constant 1 : index
    %c0_16 = arith.constant 0 : index
    %30 = vector.load %arg5[%c1_15, %c0_16] : memref<10x48xf32, #tpu.memory_space<vmem>>, vector<1x48xf32>
    %31 = vector.broadcast %30 : vector<1x48xf32> to vector<512x48xf32>
    %32 = arith.addf %29, %31 : vector<512x48xf32>
    %33 = arith.addf %32, %16 : vector<512x48xf32>
    %cst_17 = arith.constant 0.000000e+00 : f32
    %34 = vector.broadcast %cst_17 : f32 to vector<512x48xf32>
    %35 = arith.maximumf %33, %34 : vector<512x48xf32>
    %36 = arith.truncf %35 : vector<512x48xf32> to vector<512x48xbf16>
    %c2 = arith.constant 2 : index
    %c0_18 = arith.constant 0 : index
    %c0_19 = arith.constant 0 : index
    %37 = vector.load %arg4[%c2, %c0_18, %c0_19] : memref<10x48x48xbf16, #tpu.memory_space<vmem>>, vector<1x48x48xbf16>
    %38 = vector.shape_cast %37 : vector<1x48x48xbf16> to vector<48x48xbf16>
    %cst_20 = arith.constant dense<0.000000e+00> : vector<512x48xf32>
    %39 = tpu.matmul %36, %38, %cst_20 {dimension_numbers = #tpu.dot_dimension_numbers<[1], [0], [0], [1], [0, 0, 1, 1], [], []>} : vector<512x48xbf16>, vector<48x48xbf16>, vector<512x48xf32> -> vector<512x48xf32>
    %c2_21 = arith.constant 2 : index
    %c0_22 = arith.constant 0 : index
    %40 = vector.load %arg5[%c2_21, %c0_22] : memref<10x48xf32, #tpu.memory_space<vmem>>, vector<1x48xf32>
    %41 = vector.broadcast %40 : vector<1x48xf32> to vector<512x48xf32>
    %42 = arith.addf %39, %41 : vector<512x48xf32>
    %cst_23 = arith.constant 0.000000e+00 : f32
    %43 = vector.broadcast %cst_23 : f32 to vector<512x48xf32>
    %44 = arith.maximumf %42, %43 : vector<512x48xf32>
    %45 = arith.truncf %44 : vector<512x48xf32> to vector<512x48xbf16>
    %c3 = arith.constant 3 : index
    %c0_24 = arith.constant 0 : index
    %c0_25 = arith.constant 0 : index
    %46 = vector.load %arg4[%c3, %c0_24, %c0_25] : memref<10x48x48xbf16, #tpu.memory_space<vmem>>, vector<1x48x48xbf16>
    %47 = vector.shape_cast %46 : vector<1x48x48xbf16> to vector<48x48xbf16>
    %cst_26 = arith.constant dense<0.000000e+00> : vector<512x48xf32>
    %48 = tpu.matmul %45, %47, %cst_26 {dimension_numbers = #tpu.dot_dimension_numbers<[1], [0], [0], [1], [0, 0, 1, 1], [], []>} : vector<512x48xbf16>, vector<48x48xbf16>, vector<512x48xf32> -> vector<512x48xf32>
    %c3_27 = arith.constant 3 : index
    %c0_28 = arith.constant 0 : index
    %49 = vector.load %arg5[%c3_27, %c0_28] : memref<10x48xf32, #tpu.memory_space<vmem>>, vector<1x48xf32>
    %50 = vector.broadcast %49 : vector<1x48xf32> to vector<512x48xf32>
    %51 = arith.addf %48, %50 : vector<512x48xf32>
    %52 = arith.addf %51, %35 : vector<512x48xf32>
    %cst_29 = arith.constant 0.000000e+00 : f32
    %53 = vector.broadcast %cst_29 : f32 to vector<512x48xf32>
    %54 = arith.maximumf %52, %53 : vector<512x48xf32>
    %55 = arith.truncf %54 : vector<512x48xf32> to vector<512x48xbf16>
    %c4 = arith.constant 4 : index
    %c0_30 = arith.constant 0 : index
    %c0_31 = arith.constant 0 : index
    %56 = vector.load %arg4[%c4, %c0_30, %c0_31] : memref<10x48x48xbf16, #tpu.memory_space<vmem>>, vector<1x48x48xbf16>
    %57 = vector.shape_cast %56 : vector<1x48x48xbf16> to vector<48x48xbf16>
    %cst_32 = arith.constant dense<0.000000e+00> : vector<512x48xf32>
    %58 = tpu.matmul %55, %57, %cst_32 {dimension_numbers = #tpu.dot_dimension_numbers<[1], [0], [0], [1], [0, 0, 1, 1], [], []>} : vector<512x48xbf16>, vector<48x48xbf16>, vector<512x48xf32> -> vector<512x48xf32>
    %c4_33 = arith.constant 4 : index
    %c0_34 = arith.constant 0 : index
    %59 = vector.load %arg5[%c4_33, %c0_34] : memref<10x48xf32, #tpu.memory_space<vmem>>, vector<1x48xf32>
    %60 = vector.broadcast %59 : vector<1x48xf32> to vector<512x48xf32>
    %61 = arith.addf %58, %60 : vector<512x48xf32>
    %62 = arith.truncf %61 : vector<512x48xf32> to vector<512x48xbf16>
    %c5 = arith.constant 5 : index
    %c0_35 = arith.constant 0 : index
    %c0_36 = arith.constant 0 : index
    %63 = vector.load %arg4[%c5, %c0_35, %c0_36] : memref<10x48x48xbf16, #tpu.memory_space<vmem>>, vector<1x48x48xbf16>
    %64 = vector.shape_cast %63 : vector<1x48x48xbf16> to vector<48x48xbf16>
    %cst_37 = arith.constant dense<0.000000e+00> : vector<512x48xf32>
    %65 = tpu.matmul %62, %64, %cst_37 {dimension_numbers = #tpu.dot_dimension_numbers<[1], [0], [0], [1], [0, 0, 1, 1], [], []>} : vector<512x48xbf16>, vector<48x48xbf16>, vector<512x48xf32> -> vector<512x48xf32>
    %c5_38 = arith.constant 5 : index
    %c0_39 = arith.constant 0 : index
    %66 = vector.load %arg5[%c5_38, %c0_39] : memref<10x48xf32, #tpu.memory_space<vmem>>, vector<1x48xf32>
    %67 = vector.broadcast %66 : vector<1x48xf32> to vector<512x48xf32>
    %68 = arith.addf %65, %67 : vector<512x48xf32>
    %cst_40 = arith.constant 0.000000e+00 : f32
    %69 = vector.broadcast %cst_40 : f32 to vector<512x48xf32>
    %70 = arith.maximumf %68, %69 : vector<512x48xf32>
    %71 = arith.truncf %70 : vector<512x48xf32> to vector<512x48xbf16>
    %c6 = arith.constant 6 : index
    %c0_41 = arith.constant 0 : index
    %c0_42 = arith.constant 0 : index
    %72 = vector.load %arg4[%c6, %c0_41, %c0_42] : memref<10x48x48xbf16, #tpu.memory_space<vmem>>, vector<1x48x48xbf16>
    %73 = vector.shape_cast %72 : vector<1x48x48xbf16> to vector<48x48xbf16>
    %cst_43 = arith.constant dense<0.000000e+00> : vector<512x48xf32>
    %74 = tpu.matmul %71, %73, %cst_43 {dimension_numbers = #tpu.dot_dimension_numbers<[1], [0], [0], [1], [0, 0, 1, 1], [], []>} : vector<512x48xbf16>, vector<48x48xbf16>, vector<512x48xf32> -> vector<512x48xf32>
    %c6_44 = arith.constant 6 : index
    %c0_45 = arith.constant 0 : index
    %75 = vector.load %arg5[%c6_44, %c0_45] : memref<10x48xf32, #tpu.memory_space<vmem>>, vector<1x48xf32>
    %76 = vector.broadcast %75 : vector<1x48xf32> to vector<512x48xf32>
    %77 = arith.addf %74, %76 : vector<512x48xf32>
    %78 = arith.addf %77, %61 : vector<512x48xf32>
    %cst_46 = arith.constant 0.000000e+00 : f32
    %79 = vector.broadcast %cst_46 : f32 to vector<512x48xf32>
    %80 = arith.maximumf %78, %79 : vector<512x48xf32>
    %81 = arith.truncf %80 : vector<512x48xf32> to vector<512x48xbf16>
    %c7 = arith.constant 7 : index
    %c0_47 = arith.constant 0 : index
    %c0_48 = arith.constant 0 : index
    %82 = vector.load %arg4[%c7, %c0_47, %c0_48] : memref<10x48x48xbf16, #tpu.memory_space<vmem>>, vector<1x48x48xbf16>
    %83 = vector.shape_cast %82 : vector<1x48x48xbf16> to vector<48x48xbf16>
    %cst_49 = arith.constant dense<0.000000e+00> : vector<512x48xf32>
    %84 = tpu.matmul %81, %83, %cst_49 {dimension_numbers = #tpu.dot_dimension_numbers<[1], [0], [0], [1], [0, 0, 1, 1], [], []>} : vector<512x48xbf16>, vector<48x48xbf16>, vector<512x48xf32> -> vector<512x48xf32>
    %c7_50 = arith.constant 7 : index
    %c0_51 = arith.constant 0 : index
    %85 = vector.load %arg5[%c7_50, %c0_51] : memref<10x48xf32, #tpu.memory_space<vmem>>, vector<1x48xf32>
    %86 = vector.broadcast %85 : vector<1x48xf32> to vector<512x48xf32>
    %87 = arith.addf %84, %86 : vector<512x48xf32>
    %cst_52 = arith.constant 0.000000e+00 : f32
    %88 = vector.broadcast %cst_52 : f32 to vector<512x48xf32>
    %89 = arith.maximumf %87, %88 : vector<512x48xf32>
    %90 = arith.truncf %89 : vector<512x48xf32> to vector<512x48xbf16>
    %c8 = arith.constant 8 : index
    %c0_53 = arith.constant 0 : index
    %c0_54 = arith.constant 0 : index
    %91 = vector.load %arg4[%c8, %c0_53, %c0_54] : memref<10x48x48xbf16, #tpu.memory_space<vmem>>, vector<1x48x48xbf16>
    %92 = vector.shape_cast %91 : vector<1x48x48xbf16> to vector<48x48xbf16>
    %cst_55 = arith.constant dense<0.000000e+00> : vector<512x48xf32>
    %93 = tpu.matmul %90, %92, %cst_55 {dimension_numbers = #tpu.dot_dimension_numbers<[1], [0], [0], [1], [0, 0, 1, 1], [], []>} : vector<512x48xbf16>, vector<48x48xbf16>, vector<512x48xf32> -> vector<512x48xf32>
    %c8_56 = arith.constant 8 : index
    %c0_57 = arith.constant 0 : index
    %94 = vector.load %arg5[%c8_56, %c0_57] : memref<10x48xf32, #tpu.memory_space<vmem>>, vector<1x48xf32>
    %95 = vector.broadcast %94 : vector<1x48xf32> to vector<512x48xf32>
    %96 = arith.addf %93, %95 : vector<512x48xf32>
    %97 = arith.addf %96, %80 : vector<512x48xf32>
    %cst_58 = arith.constant 0.000000e+00 : f32
    %98 = vector.broadcast %cst_58 : f32 to vector<512x48xf32>
    %99 = arith.maximumf %97, %98 : vector<512x48xf32>
    %c9 = arith.constant 9 : index
    %c0_59 = arith.constant 0 : index
    %c0_60 = arith.constant 0 : index
    %100 = vector.load %arg4[%c9, %c0_59, %c0_60] : memref<10x48x48xbf16, #tpu.memory_space<vmem>>, vector<1x48x48xbf16>
    %101 = vector.shape_cast %100 : vector<1x48x48xbf16> to vector<48x48xbf16>
    %102 = vector.extract_strided_slice %101 {offsets = [0, 0], sizes = [1, 48], strides = [1, 1]} : vector<48x48xbf16> to vector<1x48xbf16>
    %c9_61 = arith.constant 9 : index
    %c0_62 = arith.constant 0 : index
    %103 = vector.load %arg5[%c9_61, %c0_62] : memref<10x48xf32, #tpu.memory_space<vmem>>, vector<1x48xf32>
    %104 = vector.extract_strided_slice %103 {offsets = [0, 0], sizes = [1, 1], strides = [1, 1]} : vector<1x48xf32> to vector<1x1xf32>
    %105 = arith.truncf %99 : vector<512x48xf32> to vector<512x48xbf16>
    %cst_63 = arith.constant dense<0.000000e+00> : vector<1x512xf32>
    %106 = tpu.matmul %102, %105, %cst_63 {dimension_numbers = #tpu.dot_dimension_numbers<[1], [1], [0], [0], [0, 0, 1, 0], [], []>} : vector<1x48xbf16>, vector<512x48xbf16>, vector<1x512xf32> -> vector<1x512xf32>
    %107 = vector.broadcast %104 : vector<1x1xf32> to vector<1x512xf32>
    %108 = arith.addf %106, %107 : vector<1x512xf32>
    %109 = arith.negf %108 : vector<1x512xf32>
    %110 = math.exp %109 : vector<1x512xf32>
    %cst_64 = arith.constant 1.000000e+00 : f32
    %111 = vector.broadcast %cst_64 : f32 to vector<1x512xf32>
    %112 = arith.addf %111, %110 : vector<1x512xf32>
    %113 = arith.divf %111, %112 : vector<1x512xf32>
    %c0_65 = arith.constant 0 : index
    %c0_66 = arith.constant 0 : index
    %114 = vector.load %arg6[%c0_65, %c0_66] : memref<1x512xf32, #tpu.memory_space<vmem>>, vector<1x512xf32>
    tpu.vector_store %arg6[%c0_65, %c0_66], %113 {strides = array<i32>} : memref<1x512xf32, #tpu.memory_space<vmem>>, vector<1x512xf32>,
    return
  }
  func.func @transform_0(%arg0: i32) -> (i32, i32) {
    %c0_i32 = arith.constant 0 : i32
    %c0_i32_0 = arith.constant 0 : i32
    return %arg0, %c0_i32 : i32, i32
  }
  func.func @transform_1(%arg0: i32) -> (i32, i32) {
    %c0_i32 = arith.constant 0 : i32
    %c0_i32_0 = arith.constant 0 : i32
    return %arg0, %c0_i32 : i32, i32
  }
  func.func @transform_2(%arg0: i32) -> (i32, i32) {
    %c0_i32 = arith.constant 0 : i32
    %c0_i32_0 = arith.constant 0 : i32
    %c0_i32_1 = arith.constant 0 : i32
    return %c0_i32, %c0_i32_0 : i32, i32
  }
  func.func @transform_3(%arg0: i32) -> (i32, i32, i32) {
    %c0_i32 = arith.constant 0 : i32
    %c0_i32_0 = arith.constant 0 : i32
    %c0_i32_1 = arith.constant 0 : i32
    %c0_i32_2 = arith.constant 0 : i32
    return %c0_i32, %c0_i32_0, %c0_i32_1 : i32, i32, i32
  }
  func.func @transform_4(%arg0: i32) -> (i32, i32) {
    %c0_i32 = arith.constant 0 : i32
    %c0_i32_0 = arith.constant 0 : i32
    %c0_i32_1 = arith.constant 0 : i32
    return %c0_i32, %c0_i32_0 : i32, i32
  }
  func.func @transform_5(%arg0: i32) -> (i32, i32) {
    %c0_i32 = arith.constant 0 : i32
    %c0_i32_0 = arith.constant 0 : i32
    return %c0_i32, %arg0 : i32, i32
  }
}

</mosaic_0001>

<llo_original>
// kernel: tpu_custom_call.1
$region0: #{tpu_custom_call.1}
  #allocation0 [shape = 'u32[]', space=smem, size = 0x4, offset = 0x4, fixed_abs, tag = 'smem constant byte address 0x4 - core index']
  #allocation1 [shape = 'u32[72,128]{1,0:T(1,128)}', space=vmem, size = 0x9000, scoped, tag = 'internal scratch']
  %s0 = inlined_call_operand.vmem [shape: s32[512,2], index: 0, kind: input, shape index: {}]
  %s1 = inlined_call_operand.vmem [shape: bf16[512,48], index: 1, kind: input, shape index: {}]
  %s2 = inlined_call_operand.vmem [shape: bf16[48,48], index: 2, kind: input, shape index: {}]
  %s3 = inlined_call_operand.vmem [shape: bf16[10,48,48], index: 3, kind: input, shape index: {}]
  %s4 = inlined_call_operand.vmem [shape: f32[10,48], index: 4, kind: input, shape index: {}]
  %s5 = inlined_call_operand.hbm [shape: f32[1,512], index: 5, kind: output, shape index: {}]
  %s6 = sld [smem:[#allocation0]]
  $region30: #{tpu_custom_call.1} parent=0
    _
  %s8 = ssub.s32 1, %s6
  %s9 = scalar_select 0, %s8, %s6
  $region1: #{tpu_custom_call.1} parent=0
    #allocation2 [shape = 'u8[2048]{0}', space=vmem, size = 0x800, scoped, tag = 'output window, operand 0, single buffered']
    #allocation3 [shape = 's32[1]{0}', space=sflag, size = 0x4, scoped, tag = 'scoped memory for tpu_custom_call.1']
    %10 = vsyncpa [#allocation3], 0
    // Predicated region
    $region2: #{tpu_custom_call.1} parent=1 // pred_check
      _
    $region3: #{tpu_custom_call.1} parent=1 // pred_check_branch
      %12 = sbr.rel (0) target = $region5
    $region4: #{tpu_custom_call.1} parent=1 // pred_region
      _
    $region5: #{tpu_custom_call.1} parent=1 // pred_fallthru
      _
    // Predicated region
    $region6: #{tpu_custom_call.1} parent=1 // pred_check
      _
    $region7: #{tpu_custom_call.1} parent=1 // pred_check_branch
      %14 = sbr.rel (0) target = $region9
    $region8: #{tpu_custom_call.1} parent=1 // pred_region
      _
    $region9: #{tpu_custom_call.1} parent=1 // pred_fallthru
      _
    // Predicated region
    $region10: #{tpu_custom_call.1} parent=1 // pred_check
      _
    $region11: #{tpu_custom_call.1} parent=1 // pred_check_branch
      %16 = sbr.rel (0) target = $region13
    $region12: #{tpu_custom_call.1} parent=1 // pred_region
      _
    $region13: #{tpu_custom_call.1} parent=1 // pred_fallthru
      _
    // Predicated region
    $region14: #{tpu_custom_call.1} parent=1 // pred_check
      _
    $region15: #{tpu_custom_call.1} parent=1 // pred_check_branch
      %18 = sbr.rel (0) target = $region17
    $region16: #{tpu_custom_call.1} parent=1 // pred_region
      _
    $region17: #{tpu_custom_call.1} parent=1 // pred_fallthru
      _
    // Predicated region
    $region18: #{tpu_custom_call.1} parent=1 // pred_check
      _
    $region19: #{tpu_custom_call.1} parent=1 // pred_check_branch
      %20 = sbr.rel (0) target = $region21
    $region20: #{tpu_custom_call.1} parent=1 // pred_region
      _
    $region21: #{tpu_custom_call.1} parent=1 // pred_fallthru
      _
    %v22 = vld [vmem:[%s0] sm:$0xff]
    %v23 = vld [vmem:[%s0 + $0x8] sm:$0xff]
    %v24 = vld [vmem:[%s0 + $0x10] sm:$0xff]
    %v25 = vld [vmem:[%s0 + $0x18] sm:$0xff]
    %v26 = vld [vmem:[%s0 + $0x20] sm:$0xff]
    %v27 = vld [vmem:[%s0 + $0x28] sm:$0xff]
    %v28 = vld [vmem:[%s0 + $0x30] sm:$0xff]
    %v29 = vld [vmem:[%s0 + $0x38] sm:$0xff]
    %v30 = vld [vmem:[%s0 + $0x40] sm:$0xff]
    %v31 = vld [vmem:[%s0 + $0x48] sm:$0xff]
    %v32 = vld [vmem:[%s0 + $0x50] sm:$0xff]
    %v33 = vld [vmem:[%s0 + $0x58] sm:$0xff]
    %v34 = vld [vmem:[%s0 + $0x60] sm:$0xff]
    %v35 = vld [vmem:[%s0 + $0x68] sm:$0xff]
    %v36 = vld [vmem:[%s0 + $0x70] sm:$0xff]
    %v37 = vld [vmem:[%s0 + $0x78] sm:$0xff]
    %v38 = vld [vmem:[%s0 + $0x80] sm:$0xff]
    %v39 = vld [vmem:[%s0 + $0x88] sm:$0xff]
    %v40 = vld [vmem:[%s0 + $0x90] sm:$0xff]
    %v41 = vld [vmem:[%s0 + $0x98] sm:$0xff]
    %v42 = vld [vmem:[%s0 + $0xa0] sm:$0xff]
    %v43 = vld [vmem:[%s0 + $0xa8] sm:$0xff]
    %v44 = vld [vmem:[%s0 + $0xb0] sm:$0xff]
    %v45 = vld [vmem:[%s0 + $0xb8] sm:$0xff]
    %v46 = vld [vmem:[%s0 + $0xc0] sm:$0xff]
    %v47 = vld [vmem:[%s0 + $0xc8] sm:$0xff]
    %v48 = vld [vmem:[%s0 + $0xd0] sm:$0xff]
    %v49 = vld [vmem:[%s0 + $0xd8] sm:$0xff]
    %v50 = vld [vmem:[%s0 + $0xe0] sm:$0xff]
    %v51 = vld [vmem:[%s0 + $0xe8] sm:$0xff]
    %v52 = vld [vmem:[%s0 + $0xf0] sm:$0xff]
    %v53 = vld [vmem:[%s0 + $0xf8] sm:$0xff]
    %v54 = vld [vmem:[%s0 + $0x100] sm:$0xff]
    %v55 = vld [vmem:[%s0 + $0x108] sm:$0xff]
    %v56 = vld [vmem:[%s0 + $0x110] sm:$0xff]
    %v57 = vld [vmem:[%s0 + $0x118] sm:$0xff]
    %v58 = vld [vmem:[%s0 + $0x120] sm:$0xff]
    %v59 = vld [vmem:[%s0 + $0x128] sm:$0xff]
    %v60 = vld [vmem:[%s0 + $0x130] sm:$0xff]
    %v61 = vld [vmem:[%s0 + $0x138] sm:$0xff]
    %v62 = vld [vmem:[%s0 + $0x140] sm:$0xff]
    %v63 = vld [vmem:[%s0 + $0x148] sm:$0xff]
    %v64 = vld [vmem:[%s0 + $0x150] sm:$0xff]
    %v65 = vld [vmem:[%s0 + $0x158] sm:$0xff]
    %v66 = vld [vmem:[%s0 + $0x160] sm:$0xff]
    %v67 = vld [vmem:[%s0 + $0x168] sm:$0xff]
    %v68 = vld [vmem:[%s0 + $0x170] sm:$0xff]
    %v69 = vld [vmem:[%s0 + $0x178] sm:$0xff]
    %v70 = vld [vmem:[%s0 + $0x180] sm:$0xff]
    %v71 = vld [vmem:[%s0 + $0x188] sm:$0xff]
    %v72 = vld [vmem:[%s0 + $0x190] sm:$0xff]
    %v73 = vld [vmem:[%s0 + $0x198] sm:$0xff]
    %v74 = vld [vmem:[%s0 + $0x1a0] sm:$0xff]
    %v75 = vld [vmem:[%s0 + $0x1a8] sm:$0xff]
    %v76 = vld [vmem:[%s0 + $0x1b0] sm:$0xff]
    %v77 = vld [vmem:[%s0 + $0x1b8] sm:$0xff]
    %v78 = vld [vmem:[%s0 + $0x1c0] sm:$0xff]
    %v79 = vld [vmem:[%s0 + $0x1c8] sm:$0xff]
    %v80 = vld [vmem:[%s0 + $0x1d0] sm:$0xff]
    %v81 = vld [vmem:[%s0 + $0x1d8] sm:$0xff]
    %v82 = vld [vmem:[%s0 + $0x1e0] sm:$0xff]
    %v83 = vld [vmem:[%s0 + $0x1e8] sm:$0xff]
    %v84 = vld [vmem:[%s0 + $0x1f0] sm:$0xff]
    %v85 = vld [vmem:[%s0 + $0x1f8] sm:$0xff]
    %v86 = vlaneseq
    %v87 = vand.u32 %v86, 127
    %88 = vset.pattern.permute.xlu0 0
    %89 = vperm.xlu0 %88, %v22
    %v90 = vpop.permute.xlu0 %89
    %91 = vset.pattern.permute.xlu0 0
    %92 = vperm.xlu0 %91, %v23
    %v93 = vpop.permute.xlu0 %92
    %94 = vset.pattern.permute.xlu0 0
    %95 = vperm.xlu0 %94, %v24
    %v96 = vpop.permute.xlu0 %95
    %97 = vset.pattern.permute.xlu0 0
    %98 = vperm.xlu0 %97, %v25
    %v99 = vpop.permute.xlu0 %98
    %100 = vset.pattern.permute.xlu0 0
    %101 = vperm.xlu0 %100, %v26
    %v102 = vpop.permute.xlu0 %101
    %103 = vset.pattern.permute.xlu0 0
    %104 = vperm.xlu0 %103, %v27
    %v105 = vpop.permute.xlu0 %104
    %106 = vset.pattern.permute.xlu0 0
    %107 = vperm.xlu0 %106, %v28
    %v108 = vpop.permute.xlu0 %107
    %109 = vset.pattern.permute.xlu0 0
    %110 = vperm.xlu0 %109, %v29
    %v111 = vpop.permute.xlu0 %110
    %112 = vset.pattern.permute.xlu0 0
    %113 = vperm.xlu0 %112, %v30
    %v114 = vpop.permute.xlu0 %113
    %115 = vset.pattern.permute.xlu0 0
    %116 = vperm.xlu0 %115, %v31
    %v117 = vpop.permute.xlu0 %116
    %118 = vset.pattern.permute.xlu0 0
    %119 = vperm.xlu0 %118, %v32
    %v120 = vpop.permute.xlu0 %119
    %121 = vset.pattern.permute.xlu0 0
    %122 = vperm.xlu0 %121, %v33
    %v123 = vpop.permute.xlu0 %122
    %124 = vset.pattern.permute.xlu0 0
    %125 = vperm.xlu0 %124, %v34
    %v126 = vpop.permute.xlu0 %125
    %127 = vset.pattern.permute.xlu0 0
    %128 = vperm.xlu0 %127, %v35
    %v129 = vpop.permute.xlu0 %128
    %130 = vset.pattern.permute.xlu0 0
    %131 = vperm.xlu0 %130, %v36
    %v132 = vpop.permute.xlu0 %131
    %133 = vset.pattern.permute.xlu0 0
    %134 = vperm.xlu0 %133, %v37
    %v135 = vpop.permute.xlu0 %134
    %136 = vset.pattern.permute.xlu0 0
    %137 = vperm.xlu0 %136, %v38
    %v138 = vpop.permute.xlu0 %137
    %139 = vset.pattern.permute.xlu0 0
    %140 = vperm.xlu0 %139, %v39
    %v141 = vpop.permute.xlu0 %140
    %142 = vset.pattern.permute.xlu0 0
    %143 = vperm.xlu0 %142, %v40
    %v144 = vpop.permute.xlu0 %143
    %145 = vset.pattern.permute.xlu0 0
    %146 = vperm.xlu0 %145, %v41
    %v147 = vpop.permute.xlu0 %146
    %148 = vset.pattern.permute.xlu0 0
    %149 = vperm.xlu0 %148, %v42
    %v150 = vpop.permute.xlu0 %149
    %151 = vset.pattern.permute.xlu0 0
    %152 = vperm.xlu0 %151, %v43
    %v153 = vpop.permute.xlu0 %152
    %154 = vset.pattern.permute.xlu0 0
    %155 = vperm.xlu0 %154, %v44
    %v156 = vpop.permute.xlu0 %155
    %157 = vset.pattern.permute.xlu0 0
    %158 = vperm.xlu0 %157, %v45
    %v159 = vpop.permute.xlu0 %158
    %160 = vset.pattern.permute.xlu0 0
    %161 = vperm.xlu0 %160, %v46
    %v162 = vpop.permute.xlu0 %161
    %163 = vset.pattern.permute.xlu0 0
    %164 = vperm.xlu0 %163, %v47
    %v165 = vpop.permute.xlu0 %164
    %166 = vset.pattern.permute.xlu0 0
    %167 = vperm.xlu0 %166, %v48
    %v168 = vpop.permute.xlu0 %167
    %169 = vset.pattern.permute.xlu0 0
    %170 = vperm.xlu0 %169, %v49
    %v171 = vpop.permute.xlu0 %170
    %172 = vset.pattern.permute.xlu0 0
    %173 = vperm.xlu0 %172, %v50
    %v174 = vpop.permute.xlu0 %173
    %175 = vset.pattern.permute.xlu0 0
    %176 = vperm.xlu0 %175, %v51
    %v177 = vpop.permute.xlu0 %176
    %178 = vset.pattern.permute.xlu0 0
    %179 = vperm.xlu0 %178, %v52
    %v180 = vpop.permute.xlu0 %179
    %181 = vset.pattern.permute.xlu0 0
    %182 = vperm.xlu0 %181, %v53
    %v183 = vpop.permute.xlu0 %182
    %184 = vset.pattern.permute.xlu0 0
    %185 = vperm.xlu0 %184, %v54
    %v186 = vpop.permute.xlu0 %185
    %187 = vset.pattern.permute.xlu0 0
    %188 = vperm.xlu0 %187, %v55
    %v189 = vpop.permute.xlu0 %188
    %190 = vset.pattern.permute.xlu0 0
    %191 = vperm.xlu0 %190, %v56
    %v192 = vpop.permute.xlu0 %191
    %193 = vset.pattern.permute.xlu0 0
    %194 = vperm.xlu0 %193, %v57
    %v195 = vpop.permute.xlu0 %194
    %196 = vset.pattern.permute.xlu0 0
    %197 = vperm.xlu0 %196, %v58
    %v198 = vpop.permute.xlu0 %197
    %199 = vset.pattern.permute.xlu0 0
    %200 = vperm.xlu0 %199, %v59
    %v201 = vpop.permute.xlu0 %200
    %202 = vset.pattern.permute.xlu0 0
    %203 = vperm.xlu0 %202, %v60
    %v204 = vpop.permute.xlu0 %203
    %205 = vset.pattern.permute.xlu0 0
    %206 = vperm.xlu0 %205, %v61
    %v207 = vpop.permute.xlu0 %206
    %208 = vset.pattern.permute.xlu0 0
    %209 = vperm.xlu0 %208, %v62
    %v210 = vpop.permute.xlu0 %209
    %211 = vset.pattern.permute.xlu0 0
    %212 = vperm.xlu0 %211, %v63
    %v213 = vpop.permute.xlu0 %212
    %214 = vset.pattern.permute.xlu0 0
    %215 = vperm.xlu0 %214, %v64
    %v216 = vpop.permute.xlu0 %215
    %217 = vset.pattern.permute.xlu0 0
    %218 = vperm.xlu0 %217, %v65
    %v219 = vpop.permute.xlu0 %218
    %220 = vset.pattern.permute.xlu0 0
    %221 = vperm.xlu0 %220, %v66
    %v222 = vpop.permute.xlu0 %221
    %223 = vset.pattern.permute.xlu0 0
    %224 = vperm.xlu0 %223, %v67
    %v225 = vpop.permute.xlu0 %224
    %226 = vset.pattern.permute.xlu0 0
    %227 = vperm.xlu0 %226, %v68
    %v228 = vpop.permute.xlu0 %227
    %229 = vset.pattern.permute.xlu0 0
    %230 = vperm.xlu0 %229, %v69
    %v231 = vpop.permute.xlu0 %230
    %232 = vset.pattern.permute.xlu0 0
    %233 = vperm.xlu0 %232, %v70
    %v234 = vpop.permute.xlu0 %233
    %235 = vset.pattern.permute.xlu0 0
    %236 = vperm.xlu0 %235, %v71
    %v237 = vpop.permute.xlu0 %236
    %238 = vset.pattern.permute.xlu0 0
    %239 = vperm.xlu0 %238, %v72
    %v240 = vpop.permute.xlu0 %239
    %241 = vset.pattern.permute.xlu0 0
    %242 = vperm.xlu0 %241, %v73
    %v243 = vpop.permute.xlu0 %242
    %244 = vset.pattern.permute.xlu0 0
    %245 = vperm.xlu0 %244, %v74
    %v246 = vpop.permute.xlu0 %245
    %247 = vset.pattern.permute.xlu0 0
    %248 = vperm.xlu0 %247, %v75
    %v249 = vpop.permute.xlu0 %248
    %250 = vset.pattern.permute.xlu0 0
    %251 = vperm.xlu0 %250, %v76
    %v252 = vpop.permute.xlu0 %251
    %253 = vset.pattern.permute.xlu0 0
    %254 = vperm.xlu0 %253, %v77
    %v255 = vpop.permute.xlu0 %254
    %256 = vset.pattern.permute.xlu0 0
    %257 = vperm.xlu0 %256, %v78
    %v258 = vpop.permute.xlu0 %257
    %259 = vset.pattern.permute.xlu0 0
    %260 = vperm.xlu0 %259, %v79
    %v261 = vpop.permute.xlu0 %260
    %262 = vset.pattern.permute.xlu0 0
    %263 = vperm.xlu0 %262, %v80
    %v264 = vpop.permute.xlu0 %263
    %265 = vset.pattern.permute.xlu0 0
    %266 = vperm.xlu0 %265, %v81
    %v267 = vpop.permute.xlu0 %266
    %268 = vset.pattern.permute.xlu0 0
    %269 = vperm.xlu0 %268, %v82
    %v270 = vpop.permute.xlu0 %269
    %271 = vset.pattern.permute.xlu0 0
    %272 = vperm.xlu0 %271, %v83
    %v273 = vpop.permute.xlu0 %272
    %274 = vset.pattern.permute.xlu0 0
    %275 = vperm.xlu0 %274, %v84
    %v276 = vpop.permute.xlu0 %275
    %277 = vset.pattern.permute.xlu0 0
    %278 = vperm.xlu0 %277, %v85
    %v279 = vpop.permute.xlu0 %278
    %vm280 = vcmp.eq.s32.totalorder %v87, %v90
    %vm281 = vcmp.eq.s32.totalorder %v87, %v93
    %vm282 = vcmp.eq.s32.totalorder %v87, %v96
    %vm283 = vcmp.eq.s32.totalorder %v87, %v99
    %vm284 = vcmp.eq.s32.totalorder %v87, %v102
    %vm285 = vcmp.eq.s32.totalorder %v87, %v105
    %vm286 = vcmp.eq.s32.totalorder %v87, %v108
    %vm287 = vcmp.eq.s32.totalorder %v87, %v111
    %vm288 = vcmp.eq.s32.totalorder %v87, %v114
    %vm289 = vcmp.eq.s32.totalorder %v87, %v117
    %vm290 = vcmp.eq.s32.totalorder %v87, %v120
    %vm291 = vcmp.eq.s32.totalorder %v87, %v123
    %vm292 = vcmp.eq.s32.totalorder %v87, %v126
    %vm293 = vcmp.eq.s32.totalorder %v87, %v129
    %vm294 = vcmp.eq.s32.totalorder %v87, %v132
    %vm295 = vcmp.eq.s32.totalorder %v87, %v135
    %vm296 = vcmp.eq.s32.totalorder %v87, %v138
    %vm297 = vcmp.eq.s32.totalorder %v87, %v141
    %vm298 = vcmp.eq.s32.totalorder %v87, %v144
    %vm299 = vcmp.eq.s32.totalorder %v87, %v147
    %vm300 = vcmp.eq.s32.totalorder %v87, %v150
    %vm301 = vcmp.eq.s32.totalorder %v87, %v153
    %vm302 = vcmp.eq.s32.totalorder %v87, %v156
    %vm303 = vcmp.eq.s32.totalorder %v87, %v159
    %vm304 = vcmp.eq.s32.totalorder %v87, %v162
    %vm305 = vcmp.eq.s32.totalorder %v87, %v165
    %vm306 = vcmp.eq.s32.totalorder %v87, %v168
    %vm307 = vcmp.eq.s32.totalorder %v87, %v171
    %vm308 = vcmp.eq.s32.totalorder %v87, %v174
    %vm309 = vcmp.eq.s32.totalorder %v87, %v177
    %vm310 = vcmp.eq.s32.totalorder %v87, %v180
    %vm311 = vcmp.eq.s32.totalorder %v87, %v183
    %vm312 = vcmp.eq.s32.totalorder %v87, %v186
    %vm313 = vcmp.eq.s32.totalorder %v87, %v189
    %vm314 = vcmp.eq.s32.totalorder %v87, %v192
    %vm315 = vcmp.eq.s32.totalorder %v87, %v195
    %vm316 = vcmp.eq.s32.totalorder %v87, %v198
    %vm317 = vcmp.eq.s32.totalorder %v87, %v201
    %vm318 = vcmp.eq.s32.totalorder %v87, %v204
    %vm319 = vcmp.eq.s32.totalorder %v87, %v207
    %vm320 = vcmp.eq.s32.totalorder %v87, %v210
    %vm321 = vcmp.eq.s32.totalorder %v87, %v213
    %vm322 = vcmp.eq.s32.totalorder %v87, %v216
    %vm323 = vcmp.eq.s32.totalorder %v87, %v219
    %vm324 = vcmp.eq.s32.totalorder %v87, %v222
    %vm325 = vcmp.eq.s32.totalorder %v87, %v225
    %vm326 = vcmp.eq.s32.totalorder %v87, %v228
    %vm327 = vcmp.eq.s32.totalorder %v87, %v231
    %vm328 = vcmp.eq.s32.totalorder %v87, %v234
    %vm329 = vcmp.eq.s32.totalorder %v87, %v237
    %vm330 = vcmp.eq.s32.totalorder %v87, %v240
    %vm331 = vcmp.eq.s32.totalorder %v87, %v243
    %vm332 = vcmp.eq.s32.totalorder %v87, %v246
    %vm333 = vcmp.eq.s32.totalorder %v87, %v249
    %vm334 = vcmp.eq.s32.totalorder %v87, %v252
    %vm335 = vcmp.eq.s32.totalorder %v87, %v255
    %vm336 = vcmp.eq.s32.totalorder %v87, %v258
    %vm337 = vcmp.eq.s32.totalorder %v87, %v261
    %vm338 = vcmp.eq.s32.totalorder %v87, %v264
    %vm339 = vcmp.eq.s32.totalorder %v87, %v267
    %vm340 = vcmp.eq.s32.totalorder %v87, %v270
    %vm341 = vcmp.eq.s32.totalorder %v87, %v273
    %vm342 = vcmp.eq.s32.totalorder %v87, %v276
    %vm343 = vcmp.eq.s32.totalorder %v87, %v279
    %344 = vset.pattern.permute.xlu0 1
    %345 = vperm.xlu0 %344, %v22
    %v346 = vpop.permute.xlu0 %345
    %347 = vset.pattern.permute.xlu0 1
    %348 = vperm.xlu0 %347, %v23
    %v349 = vpop.permute.xlu0 %348
    %350 = vset.pattern.permute.xlu0 1
    %351 = vperm.xlu0 %350, %v24
    %v352 = vpop.permute.xlu0 %351
    %353 = vset.pattern.permute.xlu0 1
    %354 = vperm.xlu0 %353, %v25
    %v355 = vpop.permute.xlu0 %354
    %356 = vset.pattern.permute.xlu0 1
    %357 = vperm.xlu0 %356, %v26
    %v358 = vpop.permute.xlu0 %357
    %359 = vset.pattern.permute.xlu0 1
    %360 = vperm.xlu0 %359, %v27
    %v361 = vpop.permute.xlu0 %360
    %362 = vset.pattern.permute.xlu0 1
    %363 = vperm.xlu0 %362, %v28
    %v364 = vpop.permute.xlu0 %363
    %365 = vset.pattern.permute.xlu0 1
    %366 = vperm.xlu0 %365, %v29
    %v367 = vpop.permute.xlu0 %366
    %368 = vset.pattern.permute.xlu0 1
    %369 = vperm.xlu0 %368, %v30
    %v370 = vpop.permute.xlu0 %369
    %371 = vset.pattern.permute.xlu0 1
    %372 = vperm.xlu0 %371, %v31
    %v373 = vpop.permute.xlu0 %372
    %374 = vset.pattern.permute.xlu0 1
    %375 = vperm.xlu0 %374, %v32
    %v376 = vpop.permute.xlu0 %375
    %377 = vset.pattern.permute.xlu0 1
    %378 = vperm.xlu0 %377, %v33
    %v379 = vpop.permute.xlu0 %378
    %380 = vset.pattern.permute.xlu0 1
    %381 = vperm.xlu0 %380, %v34
    %v382 = vpop.permute.xlu0 %381
    %383 = vset.pattern.permute.xlu0 1
    %384 = vperm.xlu0 %383, %v35
    %v385 = vpop.permute.xlu0 %384
    %386 = vset.pattern.permute.xlu0 1
    %387 = vperm.xlu0 %386, %v36
    %v388 = vpop.permute.xlu0 %387
    %389 = vset.pattern.permute.xlu0 1
    %390 = vperm.xlu0 %389, %v37
    %v391 = vpop.permute.xlu0 %390
    %392 = vset.pattern.permute.xlu0 1
    %393 = vperm.xlu0 %392, %v38
    %v394 = vpop.permute.xlu0 %393
    %395 = vset.pattern.permute.xlu0 1
    %396 = vperm.xlu0 %395, %v39
    %v397 = vpop.permute.xlu0 %396
    %398 = vset.pattern.permute.xlu0 1
    %399 = vperm.xlu0 %398, %v40
    %v400 = vpop.permute.xlu0 %399
    %401 = vset.pattern.permute.xlu0 1
    %402 = vperm.xlu0 %401, %v41
    %v403 = vpop.permute.xlu0 %402
    %404 = vset.pattern.permute.xlu0 1
    %405 = vperm.xlu0 %404, %v42
    %v406 = vpop.permute.xlu0 %405
    %407 = vset.pattern.permute.xlu0 1
    %408 = vperm.xlu0 %407, %v43
    %v409 = vpop.permute.xlu0 %408
    %410 = vset.pattern.permute.xlu0 1
    %411 = vperm.xlu0 %410, %v44
    %v412 = vpop.permute.xlu0 %411
    %413 = vset.pattern.permute.xlu0 1
    %414 = vperm.xlu0 %413, %v45
    %v415 = vpop.permute.xlu0 %414
    %416 = vset.pattern.permute.xlu0 1
    %417 = vperm.xlu0 %416, %v46
    %v418 = vpop.permute.xlu0 %417
    %419 = vset.pattern.permute.xlu0 1
    %420 = vperm.xlu0 %419, %v47
    %v421 = vpop.permute.xlu0 %420
    %422 = vset.pattern.permute.xlu0 1
    %423 = vperm.xlu0 %422, %v48
    %v424 = vpop.permute.xlu0 %423
    %425 = vset.pattern.permute.xlu0 1
    %426 = vperm.xlu0 %425, %v49
    %v427 = vpop.permute.xlu0 %426
    %428 = vset.pattern.permute.xlu0 1
    %429 = vperm.xlu0 %428, %v50
    %v430 = vpop.permute.xlu0 %429
    %431 = vset.pattern.permute.xlu0 1
    %432 = vperm.xlu0 %431, %v51
    %v433 = vpop.permute.xlu0 %432
    %434 = vset.pattern.permute.xlu0 1
    %435 = vperm.xlu0 %434, %v52
    %v436 = vpop.permute.xlu0 %435
    %437 = vset.pattern.permute.xlu0 1
    %438 = vperm.xlu0 %437, %v53
    %v439 = vpop.permute.xlu0 %438
    %440 = vset.pattern.permute.xlu0 1
    %441 = vperm.xlu0 %440, %v54
    %v442 = vpop.permute.xlu0 %441
    %443 = vset.pattern.permute.xlu0 1
    %444 = vperm.xlu0 %443, %v55
    %v445 = vpop.permute.xlu0 %444
    %446 = vset.pattern.permute.xlu0 1
    %447 = vperm.xlu0 %446, %v56
    %v448 = vpop.permute.xlu0 %447
    %449 = vset.pattern.permute.xlu0 1
    %450 = vperm.xlu0 %449, %v57
    %v451 = vpop.permute.xlu0 %450
    %452 = vset.pattern.permute.xlu0 1
    %453 = vperm.xlu0 %452, %v58
    %v454 = vpop.permute.xlu0 %453
    %455 = vset.pattern.permute.xlu0 1
    %456 = vperm.xlu0 %455, %v59
    %v457 = vpop.permute.xlu0 %456
    %458 = vset.pattern.permute.xlu0 1
    %459 = vperm.xlu0 %458, %v60
    %v460 = vpop.permute.xlu0 %459
    %461 = vset.pattern.permute.xlu0 1
    %462 = vperm.xlu0 %461, %v61
    %v463 = vpop.permute.xlu0 %462
    %464 = vset.pattern.permute.xlu0 1
    %465 = vperm.xlu0 %464, %v62
    %v466 = vpop.permute.xlu0 %465
    %467 = vset.pattern.permute.xlu0 1
    %468 = vperm.xlu0 %467, %v63
    %v469 = vpop.permute.xlu0 %468
    %470 = vset.pattern.permute.xlu0 1
    %471 = vperm.xlu0 %470, %v64
    %v472 = vpop.permute.xlu0 %471
    %473 = vset.pattern.permute.xlu0 1
    %474 = vperm.xlu0 %473, %v65
    %v475 = vpop.permute.xlu0 %474
    %476 = vset.pattern.permute.xlu0 1
    %477 = vperm.xlu0 %476, %v66
    %v478 = vpop.permute.xlu0 %477
    %479 = vset.pattern.permute.xlu0 1
    %480 = vperm.xlu0 %479, %v67
    %v481 = vpop.permute.xlu0 %480
    %482 = vset.pattern.permute.xlu0 1
    %483 = vperm.xlu0 %482, %v68
    %v484 = vpop.permute.xlu0 %483
    %485 = vset.pattern.permute.xlu0 1
    %486 = vperm.xlu0 %485, %v69
    %v487 = vpop.permute.xlu0 %486
    %488 = vset.pattern.permute.xlu0 1
    %489 = vperm.xlu0 %488, %v70
    %v490 = vpop.permute.xlu0 %489
    %491 = vset.pattern.permute.xlu0 1
    %492 = vperm.xlu0 %491, %v71
    %v493 = vpop.permute.xlu0 %492
    %494 = vset.pattern.permute.xlu0 1
    %495 = vperm.xlu0 %494, %v72
    %v496 = vpop.permute.xlu0 %495
    %497 = vset.pattern.permute.xlu0 1
    %498 = vperm.xlu0 %497, %v73
    %v499 = vpop.permute.xlu0 %498
    %500 = vset.pattern.permute.xlu0 1
    %501 = vperm.xlu0 %500, %v74
    %v502 = vpop.permute.xlu0 %501
    %503 = vset.pattern.permute.xlu0 1
    %504 = vperm.xlu0 %503, %v75
    %v505 = vpop.permute.xlu0 %504
    %506 = vset.pattern.permute.xlu0 1
    %507 = vperm.xlu0 %506, %v76
    %v508 = vpop.permute.xlu0 %507
    %509 = vset.pattern.permute.xlu0 1
    %510 = vperm.xlu0 %509, %v77
    %v511 = vpop.permute.xlu0 %510
    %512 = vset.pattern.permute.xlu0 1
    %513 = vperm.xlu0 %512, %v78
    %v514 = vpop.permute.xlu0 %513
    %515 = vset.pattern.permute.xlu0 1
    %516 = vperm.xlu0 %515, %v79
    %v517 = vpop.permute.xlu0 %516
    %518 = vset.pattern.permute.xlu0 1
    %519 = vperm.xlu0 %518, %v80
    %v520 = vpop.permute.xlu0 %519
    %521 = vset.pattern.permute.xlu0 1
    %522 = vperm.xlu0 %521, %v81
    %v523 = vpop.permute.xlu0 %522
    %524 = vset.pattern.permute.xlu0 1
    %525 = vperm.xlu0 %524, %v82
    %v526 = vpop.permute.xlu0 %525
    %527 = vset.pattern.permute.xlu0 1
    %528 = vperm.xlu0 %527, %v83
    %v529 = vpop.permute.xlu0 %528
    %530 = vset.pattern.permute.xlu0 1
    %531 = vperm.xlu0 %530, %v84
    %v532 = vpop.permute.xlu0 %531
    %533 = vset.pattern.permute.xlu0 1
    %534 = vperm.xlu0 %533, %v85
    %v535 = vpop.permute.xlu0 %534
    %vm536 = vcmp.eq.s32.totalorder %v87, %v346
    %vm537 = vcmp.eq.s32.totalorder %v87, %v349
    %vm538 = vcmp.eq.s32.totalorder %v87, %v352
    %vm539 = vcmp.eq.s32.totalorder %v87, %v355
    %vm540 = vcmp.eq.s32.totalorder %v87, %v358
    %vm541 = vcmp.eq.s32.totalorder %v87, %v361
    %vm542 = vcmp.eq.s32.totalorder %v87, %v364
    %vm543 = vcmp.eq.s32.totalorder %v87, %v367
    %vm544 = vcmp.eq.s32.totalorder %v87, %v370
    %vm545 = vcmp.eq.s32.totalorder %v87, %v373
    %vm546 = vcmp.eq.s32.totalorder %v87, %v376
    %vm547 = vcmp.eq.s32.totalorder %v87, %v379
    %vm548 = vcmp.eq.s32.totalorder %v87, %v382
    %vm549 = vcmp.eq.s32.totalorder %v87, %v385
    %vm550 = vcmp.eq.s32.totalorder %v87, %v388
    %vm551 = vcmp.eq.s32.totalorder %v87, %v391
    %vm552 = vcmp.eq.s32.totalorder %v87, %v394
    %vm553 = vcmp.eq.s32.totalorder %v87, %v397
    %vm554 = vcmp.eq.s32.totalorder %v87, %v400
    %vm555 = vcmp.eq.s32.totalorder %v87, %v403
    %vm556 = vcmp.eq.s32.totalorder %v87, %v406
    %vm557 = vcmp.eq.s32.totalorder %v87, %v409
    %vm558 = vcmp.eq.s32.totalorder %v87, %v412
    %vm559 = vcmp.eq.s32.totalorder %v87, %v415
    %vm560 = vcmp.eq.s32.totalorder %v87, %v418
    %vm561 = vcmp.eq.s32.totalorder %v87, %v421
    %vm562 = vcmp.eq.s32.totalorder %v87, %v424
    %vm563 = vcmp.eq.s32.totalorder %v87, %v427
    %vm564 = vcmp.eq.s32.totalorder %v87, %v430
    %vm565 = vcmp.eq.s32.totalorder %v87, %v433
    %vm566 = vcmp.eq.s32.totalorder %v87, %v436
    %vm567 = vcmp.eq.s32.totalorder %v87, %v439
    %vm568 = vcmp.eq.s32.totalorder %v87, %v442
    %vm569 = vcmp.eq.s32.totalorder %v87, %v445
    %vm570 = vcmp.eq.s32.totalorder %v87, %v448
    %vm571 = vcmp.eq.s32.totalorder %v87, %v451
    %vm572 = vcmp.eq.s32.totalorder %v87, %v454
    %vm573 = vcmp.eq.s32.totalorder %v87, %v457
    %vm574 = vcmp.eq.s32.totalorder %v87, %v460
    %vm575 = vcmp.eq.s32.totalorder %v87, %v463
    %vm576 = vcmp.eq.s32.totalorder %v87, %v466
    %vm577 = vcmp.eq.s32.totalorder %v87, %v469
    %vm578 = vcmp.eq.s32.totalorder %v87, %v472
    %vm579 = vcmp.eq.s32.totalorder %v87, %v475
    %vm580 = vcmp.eq.s32.totalorder %v87, %v478
    %vm581 = vcmp.eq.s32.totalorder %v87, %v481
    %vm582 = vcmp.eq.s32.totalorder %v87, %v484
    %vm583 = vcmp.eq.s32.totalorder %v87, %v487
    %vm584 = vcmp.eq.s32.totalorder %v87, %v490
    %vm585 = vcmp.eq.s32.totalorder %v87, %v493
    %vm586 = vcmp.eq.s32.totalorder %v87, %v496
    %vm587 = vcmp.eq.s32.totalorder %v87, %v499
    %vm588 = vcmp.eq.s32.totalorder %v87, %v502
    %vm589 = vcmp.eq.s32.totalorder %v87, %v505
    %vm590 = vcmp.eq.s32.totalorder %v87, %v508
    %vm591 = vcmp.eq.s32.totalorder %v87, %v511
    %vm592 = vcmp.eq.s32.totalorder %v87, %v514
    %vm593 = vcmp.eq.s32.totalorder %v87, %v517
    %vm594 = vcmp.eq.s32.totalorder %v87, %v520
    %vm595 = vcmp.eq.s32.totalorder %v87, %v523
    %vm596 = vcmp.eq.s32.totalorder %v87, %v526
    %vm597 = vcmp.eq.s32.totalorder %v87, %v529
    %vm598 = vcmp.eq.s32.totalorder %v87, %v532
    %vm599 = vcmp.eq.s32.totalorder %v87, %v535
    %vm600 = vmor %vm280, %vm536
    %vm601 = vmor %vm281, %vm537
    %vm602 = vmor %vm282, %vm538
    %vm603 = vmor %vm283, %vm539
    %vm604 = vmor %vm284, %vm540
    %vm605 = vmor %vm285, %vm541
    %vm606 = vmor %vm286, %vm542
    %vm607 = vmor %vm287, %vm543
    %vm608 = vmor %vm288, %vm544
    %vm609 = vmor %vm289, %vm545
    %vm610 = vmor %vm290, %vm546
    %vm611 = vmor %vm291, %vm547
    %vm612 = vmor %vm292, %vm548
    %vm613 = vmor %vm293, %vm549
    %vm614 = vmor %vm294, %vm550
    %vm615 = vmor %vm295, %vm551
    %vm616 = vmor %vm296, %vm552
    %vm617 = vmor %vm297, %vm553
    %vm618 = vmor %vm298, %vm554
    %vm619 = vmor %vm299, %vm555
    %vm620 = vmor %vm300, %vm556
    %vm621 = vmor %vm301, %vm557
    %vm622 = vmor %vm302, %vm558
    %vm623 = vmor %vm303, %vm559
    %vm624 = vmor %vm304, %vm560
    %vm625 = vmor %vm305, %vm561
    %vm626 = vmor %vm306, %vm562
    %vm627 = vmor %vm307, %vm563
    %vm628 = vmor %vm308, %vm564
    %vm629 = vmor %vm309, %vm565
    %vm630 = vmor %vm310, %vm566
    %vm631 = vmor %vm311, %vm567
    %vm632 = vmor %vm312, %vm568
    %vm633 = vmor %vm313, %vm569
    %vm634 = vmor %vm314, %vm570
    %vm635 = vmor %vm315, %vm571
    %vm636 = vmor %vm316, %vm572
    %vm637 = vmor %vm317, %vm573
    %vm638 = vmor %vm318, %vm574
    %vm639 = vmor %vm319, %vm575
    %vm640 = vmor %vm320, %vm576
    %vm641 = vmor %vm321, %vm577
    %vm642 = vmor %vm322, %vm578
    %vm643 = vmor %vm323, %vm579
    %vm644 = vmor %vm324, %vm580
    %vm645 = vmor %vm325, %vm581
    %vm646 = vmor %vm326, %vm582
    %vm647 = vmor %vm327, %vm583
    %vm648 = vmor %vm328, %vm584
    %vm649 = vmor %vm329, %vm585
    %vm650 = vmor %vm330, %vm586
    %vm651 = vmor %vm331, %vm587
    %vm652 = vmor %vm332, %vm588
    %vm653 = vmor %vm333, %vm589
    %vm654 = vmor %vm334, %vm590
    %vm655 = vmor %vm335, %vm591
    %vm656 = vmor %vm336, %vm592
    %vm657 = vmor %vm337, %vm593
    %vm658 = vmor %vm338, %vm594
    %vm659 = vmor %vm339, %vm595
    %vm660 = vmor %vm340, %vm596
    %vm661 = vmor %vm341, %vm597
    %vm662 = vmor %vm342, %vm598
    %vm663 = vmor %vm343, %vm599
    %v664 = vsel %vm600, 1, 0
    %v665 = vsel %vm601, 1, 0
    %v666 = vsel %vm602, 1, 0
    %v667 = vsel %vm603, 1, 0
    %v668 = vsel %vm604, 1, 0
    %v669 = vsel %vm605, 1, 0
    %v670 = vsel %vm606, 1, 0
    %v671 = vsel %vm607, 1, 0
    %v672 = vsel %vm608, 1, 0
    %v673 = vsel %vm609, 1, 0
    %v674 = vsel %vm610, 1, 0
    %v675 = vsel %vm611, 1, 0
    %v676 = vsel %vm612, 1, 0
    %v677 = vsel %vm613, 1, 0
    %v678 = vsel %vm614, 1, 0
    %v679 = vsel %vm615, 1, 0
    %v680 = vsel %vm616, 1, 0
    %v681 = vsel %vm617, 1, 0
    %v682 = vsel %vm618, 1, 0
    %v683 = vsel %vm619, 1, 0
    %v684 = vsel %vm620, 1, 0
    %v685 = vsel %vm621, 1, 0
    %v686 = vsel %vm622, 1, 0
    %v687 = vsel %vm623, 1, 0
    %v688 = vsel %vm624, 1, 0
    %v689 = vsel %vm625, 1, 0
    %v690 = vsel %vm626, 1, 0
    %v691 = vsel %vm627, 1, 0
    %v692 = vsel %vm628, 1, 0
    %v693 = vsel %vm629, 1, 0
    %v694 = vsel %vm630, 1, 0
    %v695 = vsel %vm631, 1, 0
    %v696 = vsel %vm632, 1, 0
    %v697 = vsel %vm633, 1, 0
    %v698 = vsel %vm634, 1, 0
    %v699 = vsel %vm635, 1, 0
    %v700 = vsel %vm636, 1, 0
    %v701 = vsel %vm637, 1, 0
    %v702 = vsel %vm638, 1, 0
    %v703 = vsel %vm639, 1, 0
    %v704 = vsel %vm640, 1, 0
    %v705 = vsel %vm641, 1, 0
    %v706 = vsel %vm642, 1, 0
    %v707 = vsel %vm643, 1, 0
    %v708 = vsel %vm644, 1, 0
    %v709 = vsel %vm645, 1, 0
    %v710 = vsel %vm646, 1, 0
    %v711 = vsel %vm647, 1, 0
    %v712 = vsel %vm648, 1, 0
    %v713 = vsel %vm649, 1, 0
    %v714 = vsel %vm650, 1, 0
    %v715 = vsel %vm651, 1, 0
    %v716 = vsel %vm652, 1, 0
    %v717 = vsel %vm653, 1, 0
    %v718 = vsel %vm654, 1, 0
    %v719 = vsel %vm655, 1, 0
    %v720 = vsel %vm656, 1, 0
    %v721 = vsel %vm657, 1, 0
    %v722 = vsel %vm658, 1, 0
    %v723 = vsel %vm659, 1, 0
    %v724 = vsel %vm660, 1, 0
    %v725 = vsel %vm661, 1, 0
    %v726 = vsel %vm662, 1, 0
    %v727 = vsel %vm663, 1, 0
    %v728 = vcvt.s32.f32 %v664
    %v729 = vcvt.s32.f32 %v665
    %v730 = vcvt.s32.f32 %v666
    %v731 = vcvt.s32.f32 %v667
    %v732 = vcvt.s32.f32 %v668
    %v733 = vcvt.s32.f32 %v669
    %v734 = vcvt.s32.f32 %v670
    %v735 = vcvt.s32.f32 %v671
    %v736 = vcvt.s32.f32 %v672
    %v737 = vcvt.s32.f32 %v673
    %v738 = vcvt.s32.f32 %v674
    %v739 = vcvt.s32.f32 %v675
    %v740 = vcvt.s32.f32 %v676
    %v741 = vcvt.s32.f32 %v677
    %v742 = vcvt.s32.f32 %v678
    %v743 = vcvt.s32.f32 %v679
    %v744 = vcvt.s32.f32 %v680
    %v745 = vcvt.s32.f32 %v681
    %v746 = vcvt.s32.f32 %v682
    %v747 = vcvt.s32.f32 %v683
    %v748 = vcvt.s32.f32 %v684
    %v749 = vcvt.s32.f32 %v685
    %v750 = vcvt.s32.f32 %v686
    %v751 = vcvt.s32.f32 %v687
    %v752 = vcvt.s32.f32 %v688
    %v753 = vcvt.s32.f32 %v689
    %v754 = vcvt.s32.f32 %v690
    %v755 = vcvt.s32.f32 %v691
    %v756 = vcvt.s32.f32 %v692
    %v757 = vcvt.s32.f32 %v693
    %v758 = vcvt.s32.f32 %v694
    %v759 = vcvt.s32.f32 %v695
    %v760 = vcvt.s32.f32 %v696
    %v761 = vcvt.s32.f32 %v697
    %v762 = vcvt.s32.f32 %v698
    %v763 = vcvt.s32.f32 %v699
    %v764 = vcvt.s32.f32 %v700
    %v765 = vcvt.s32.f32 %v701
    %v766 = vcvt.s32.f32 %v702
    %v767 = vcvt.s32.f32 %v703
    %v768 = vcvt.s32.f32 %v704
    %v769 = vcvt.s32.f32 %v705
    %v770 = vcvt.s32.f32 %v706
    %v771 = vcvt.s32.f32 %v707
    %v772 = vcvt.s32.f32 %v708
    %v773 = vcvt.s32.f32 %v709
    %v774 = vcvt.s32.f32 %v710
    %v775 = vcvt.s32.f32 %v711
    %v776 = vcvt.s32.f32 %v712
    %v777 = vcvt.s32.f32 %v713
    %v778 = vcvt.s32.f32 %v714
    %v779 = vcvt.s32.f32 %v715
    %v780 = vcvt.s32.f32 %v716
    %v781 = vcvt.s32.f32 %v717
    %v782 = vcvt.s32.f32 %v718
    %v783 = vcvt.s32.f32 %v719
    %v784 = vcvt.s32.f32 %v720
    %v785 = vcvt.s32.f32 %v721
    %v786 = vcvt.s32.f32 %v722
    %v787 = vcvt.s32.f32 %v723
    %v788 = vcvt.s32.f32 %v724
    %v789 = vcvt.s32.f32 %v725
    %v790 = vcvt.s32.f32 %v726
    %v791 = vcvt.s32.f32 %v727
    %v792 = vpack.c.bf16 %v729, %v728
    %v793 = vpack.c.bf16 %v731, %v730
    %v794 = vpack.c.bf16 %v733, %v732
    %v795 = vpack.c.bf16 %v735, %v734
    %v796 = vpack.c.bf16 %v737, %v736
    %v797 = vpack.c.bf16 %v739, %v738
    %v798 = vpack.c.bf16 %v741, %v740
    %v799 = vpack.c.bf16 %v743, %v742
    %v800 = vpack.c.bf16 %v745, %v744
    %v801 = vpack.c.bf16 %v747, %v746
    %v802 = vpack.c.bf16 %v749, %v748
    %v803 = vpack.c.bf16 %v751, %v750
    %v804 = vpack.c.bf16 %v753, %v752
    %v805 = vpack.c.bf16 %v755, %v754
    %v806 = vpack.c.bf16 %v757, %v756
    %v807 = vpack.c.bf16 %v759, %v758
    %v808 = vpack.c.bf16 %v761, %v760
    %v809 = vpack.c.bf16 %v763, %v762
    %v810 = vpack.c.bf16 %v765, %v764
    %v811 = vpack.c.bf16 %v767, %v766
    %v812 = vpack.c.bf16 %v769, %v768
    %v813 = vpack.c.bf16 %v771, %v770
    %v814 = vpack.c.bf16 %v773, %v772
    %v815 = vpack.c.bf16 %v775, %v774
    %v816 = vpack.c.bf16 %v777, %v776
    %v817 = vpack.c.bf16 %v779, %v778
    %v818 = vpack.c.bf16 %v781, %v780
    %v819 = vpack.c.bf16 %v783, %v782
    %v820 = vpack.c.bf16 %v785, %v784
    %v821 = vpack.c.bf16 %v787, %v786
    %v822 = vpack.c.bf16 %v789, %v788
    %v823 = vpack.c.bf16 %v791, %v790
    %v824 = vld [vmem:[%s2] sm:$0xf]
    %v825 = vld [vmem:[%s2 + $0x4] sm:$0xf]
    %v826 = vld [vmem:[%s2 + $0x8] sm:$0xf]
    %v827 = vld [vmem:[%s2 + $0xc] sm:$0xf]
    %v828 = vld [vmem:[%s2 + $0x10] sm:$0xf]
    %v829 = vld [vmem:[%s2 + $0x14] sm:$0xf]
    %v830 = vld [vmem:[%s1] sm:$0xf]
    %v831 = vld [vmem:[%s1 + $0x4] sm:$0xf]
    %v832 = vld [vmem:[%s1 + $0x8] sm:$0xf]
    %v833 = vld [vmem:[%s1 + $0xc] sm:$0xf]
    %v834 = vld [vmem:[%s1 + $0x10] sm:$0xf]
    %v835 = vld [vmem:[%s1 + $0x14] sm:$0xf]
    %v836 = vld [vmem:[%s1 + $0x18] sm:$0xf]
    %v837 = vld [vmem:[%s1 + $0x1c] sm:$0xf]
    %v838 = vld [vmem:[%s1 + $0x20] sm:$0xf]
    %v839 = vld [vmem:[%s1 + $0x24] sm:$0xf]
    %v840 = vld [vmem:[%s1 + $0x28] sm:$0xf]
    %v841 = vld [vmem:[%s1 + $0x2c] sm:$0xf]
    %v842 = vld [vmem:[%s1 + $0x30] sm:$0xf]
    %v843 = vld [vmem:[%s1 + $0x34] sm:$0xf]
    %v844 = vld [vmem:[%s1 + $0x38] sm:$0xf]
    %v845 = vld [vmem:[%s1 + $0x3c] sm:$0xf]
    %v846 = vld [vmem:[%s1 + $0x40] sm:$0xf]
    %v847 = vld [vmem:[%s1 + $0x44] sm:$0xf]
    %v848 = vld [vmem:[%s1 + $0x48] sm:$0xf]
    %v849 = vld [vmem:[%s1 + $0x4c] sm:$0xf]
    %v850 = vld [vmem:[%s1 + $0x50] sm:$0xf]
    %v851 = vld [vmem:[%s1 + $0x54] sm:$0xf]
    %v852 = vld [vmem:[%s1 + $0x58] sm:$0xf]
    %v853 = vld [vmem:[%s1 + $0x5c] sm:$0xf]
    %v854 = vld [vmem:[%s1 + $0x60] sm:$0xf]
    %v855 = vld [vmem:[%s1 + $0x64] sm:$0xf]
    %v856 = vld [vmem:[%s1 + $0x68] sm:$0xf]
    %v857 = vld [vmem:[%s1 + $0x6c] sm:$0xf]
    %v858 = vld [vmem:[%s1 + $0x70] sm:$0xf]
    %v859 = vld [vmem:[%s1 + $0x74] sm:$0xf]
    %v860 = vld [vmem:[%s1 + $0x78] sm:$0xf]
    %v861 = vld [vmem:[%s1 + $0x7c] sm:$0xf]
    %v862 = vld [vmem:[%s1 + $0x80] sm:$0xf]
    %v863 = vld [vmem:[%s1 + $0x84] sm:$0xf]
    %v864 = vld [vmem:[%s1 + $0x88] sm:$0xf]
    %v865 = vld [vmem:[%s1 + $0x8c] sm:$0xf]
    %v866 = vld [vmem:[%s1 + $0x90] sm:$0xf]
    %v867 = vld [vmem:[%s1 + $0x94] sm:$0xf]
    %v868 = vld [vmem:[%s1 + $0x98] sm:$0xf]
    %v869 = vld [vmem:[%s1 + $0x9c] sm:$0xf]
    %v870 = vld [vmem:[%s1 + $0xa0] sm:$0xf]
    %v871 = vld [vmem:[%s1 + $0xa4] sm:$0xf]
    %v872 = vld [vmem:[%s1 + $0xa8] sm:$0xf]
    %v873 = vld [vmem:[%s1 + $0xac] sm:$0xf]
    %v874 = vld [vmem:[%s1 + $0xb0] sm:$0xf]
    %v875 = vld [vmem:[%s1 + $0xb4] sm:$0xf]
    %v876 = vld [vmem:[%s1 + $0xb8] sm:$0xf]
    %v877 = vld [vmem:[%s1 + $0xbc] sm:$0xf]
    %v878 = vld [vmem:[%s1 + $0xc0] sm:$0xf]
    %v879 = vld [vmem:[%s1 + $0xc4] sm:$0xf]
    %v880 = vld [vmem:[%s1 + $0xc8] sm:$0xf]
    %v881 = vld [vmem:[%s1 + $0xcc] sm:$0xf]
    %v882 = vld [vmem:[%s1 + $0xd0] sm:$0xf]
    %v883 = vld [vmem:[%s1 + $0xd4] sm:$0xf]
    %v884 = vld [vmem:[%s1 + $0xd8] sm:$0xf]
    %v885 = vld [vmem:[%s1 + $0xdc] sm:$0xf]
    %v886 = vld [vmem:[%s1 + $0xe0] sm:$0xf]
    %v887 = vld [vmem:[%s1 + $0xe4] sm:$0xf]
    %v888 = vld [vmem:[%s1 + $0xe8] sm:$0xf]
    %v889 = vld [vmem:[%s1 + $0xec] sm:$0xf]
    %v890 = vld [vmem:[%s1 + $0xf0] sm:$0xf]
    %v891 = vld [vmem:[%s1 + $0xf4] sm:$0xf]
    %v892 = vld [vmem:[%s1 + $0xf8] sm:$0xf]
    %v893 = vld [vmem:[%s1 + $0xfc] sm:$0xf]
    %v894 = vunpack.c.l.bf16 %v830
    %v895 = vunpack.c.l.bf16 %v831
    %v896 = vunpack.c.l.bf16 %v832
    %v897 = vunpack.c.l.bf16 %v833
    %v898 = vunpack.c.l.bf16 %v834
    %v899 = vunpack.c.l.bf16 %v835
    %v900 = vunpack.c.l.bf16 %v836
    %v901 = vunpack.c.l.bf16 %v837
    %v902 = vunpack.c.l.bf16 %v838
    %v903 = vunpack.c.l.bf16 %v839
    %v904 = vunpack.c.l.bf16 %v840
    %v905 = vunpack.c.l.bf16 %v841
    %v906 = vunpack.c.l.bf16 %v842
    %v907 = vunpack.c.l.bf16 %v843
    %v908 = vunpack.c.l.bf16 %v844
    %v909 = vunpack.c.l.bf16 %v845
    %v910 = vunpack.c.l.bf16 %v846
    %v911 = vunpack.c.l.bf16 %v847
    %v912 = vunpack.c.l.bf16 %v848
    %v913 = vunpack.c.l.bf16 %v849
    %v914 = vunpack.c.l.bf16 %v850
    %v915 = vunpack.c.l.bf16 %v851
    %v916 = vunpack.c.l.bf16 %v852
    %v917 = vunpack.c.l.bf16 %v853
    %v918 = vunpack.c.l.bf16 %v854
    %v919 = vunpack.c.l.bf16 %v855
    %v920 = vunpack.c.l.bf16 %v856
    %v921 = vunpack.c.l.bf16 %v857
    %v922 = vunpack.c.l.bf16 %v858
    %v923 = vunpack.c.l.bf16 %v859
    %v924 = vunpack.c.l.bf16 %v860
    %v925 = vunpack.c.l.bf16 %v861
    %v926 = vunpack.c.l.bf16 %v862
    %v927 = vunpack.c.l.bf16 %v863
    %v928 = vunpack.c.l.bf16 %v864
    %v929 = vunpack.c.l.bf16 %v865
    %v930 = vunpack.c.l.bf16 %v866
    %v931 = vunpack.c.l.bf16 %v867
    %v932 = vunpack.c.l.bf16 %v868
    %v933 = vunpack.c.l.bf16 %v869
    %v934 = vunpack.c.l.bf16 %v870
    %v935 = vunpack.c.l.bf16 %v871
    %v936 = vunpack.c.l.bf16 %v872
    %v937 = vunpack.c.l.bf16 %v873
    %v938 = vunpack.c.l.bf16 %v874
    %v939 = vunpack.c.l.bf16 %v875
    %v940 = vunpack.c.l.bf16 %v876
    %v941 = vunpack.c.l.bf16 %v877
    %v942 = vunpack.c.l.bf16 %v878
    %v943 = vunpack.c.l.bf16 %v879
    %v944 = vunpack.c.l.bf16 %v880
    %v945 = vunpack.c.l.bf16 %v881
    %v946 = vunpack.c.l.bf16 %v882
    %v947 = vunpack.c.l.bf16 %v883
    %v948 = vunpack.c.l.bf16 %v884
    %v949 = vunpack.c.l.bf16 %v885
    %v950 = vunpack.c.l.bf16 %v886
    %v951 = vunpack.c.l.bf16 %v887
    %v952 = vunpack.c.l.bf16 %v888
    %v953 = vunpack.c.l.bf16 %v889
    %v954 = vunpack.c.l.bf16 %v890
    %v955 = vunpack.c.l.bf16 %v891
    %v956 = vunpack.c.l.bf16 %v892
    %v957 = vunpack.c.l.bf16 %v893
    %v964 = vunpack.c.l.b16 %v824
    %v965 = vunpack.c.l.b16 %v825
    %v966 = vunpack.c.l.b16 %v826
    %v967 = vunpack.c.l.b16 %v827
    %v968 = vunpack.c.l.b16 %v828
    %v969 = vunpack.c.l.b16 %v829
    %v970 = vpack.c.b16 %v965, %v964
    %v971 = vpack.c.b16 %v967, %v966
    %v972 = vpack.c.b16 %v969, %v968
    %vm976 = vcmask 392192
    %v978 = vsel %vm976, %v792, 0
    %v981 = vsel %vm976, %v793, 0
    %v984 = vsel %vm976, %v794, 0
    %v987 = vsel %vm976, %v795, 0
    %v990 = vsel %vm976, %v796, 0
    %v993 = vsel %vm976, %v797, 0
    %v996 = vsel %vm976, %v798, 0
    %v999 = vsel %vm976, %v799, 0
    %v1002 = vsel %vm976, %v800, 0
    %v1005 = vsel %vm976, %v801, 0
    %v1008 = vsel %vm976, %v802, 0
    %v1011 = vsel %vm976, %v803, 0
    %v1014 = vsel %vm976, %v804, 0
    %v1017 = vsel %vm976, %v805, 0
    %v1020 = vsel %vm976, %v806, 0
    %v1023 = vsel %vm976, %v807, 0
    %v1026 = vsel %vm976, %v808, 0
    %v1029 = vsel %vm976, %v809, 0
    %v1032 = vsel %vm976, %v810, 0
    %v1035 = vsel %vm976, %v811, 0
    %v1038 = vsel %vm976, %v812, 0
    %v1041 = vsel %vm976, %v813, 0
    %v1044 = vsel %vm976, %v814, 0
    %v1047 = vsel %vm976, %v815, 0
    %v1050 = vsel %vm976, %v816, 0
    %v1053 = vsel %vm976, %v817, 0
    %v1056 = vsel %vm976, %v818, 0
    %v1059 = vsel %vm976, %v819, 0
    %v1062 = vsel %vm976, %v820, 0
    %v1065 = vsel %vm976, %v821, 0
    %v1068 = vsel %vm976, %v822, 0
    %v1071 = vsel %vm976, %v823, 0
    %1073 = vmatpush.bf16.msra.mxu0 0
    %1074 = vmatpush.bf16.msra.mxu0 0
    %1075 = vmatpush.bf16.msra.mxu0 0
    %1076 = vmatpush.bf16.msra.mxu0 0
    %1077 = vmatpush.bf16.msra.mxu0 0
    %1078 = vmatpush.bf16.msra.mxu0 %v972
    %1079 = vmatpush.bf16.msra.mxu0 %v971
    %1080 = vmatpush.bf16.msra.mxu0 %v970
    %1081 = vmatmul.bf16.gmra.mxu0 %v978
    %v1082 = vpop.f32.mrf.mxu0
    %v1083 = vadd.f32 %v894, %v1082
    %v1084 = vpop.f32.mrf.mxu0
    %v1085 = vadd.f32 %v895, %v1084
    %1086 = vmatmul.bf16.gmra.mxu0 %v981
    %v1087 = vpop.f32.mrf.mxu0
    %v1088 = vadd.f32 %v896, %v1087
    %v1089 = vpop.f32.mrf.mxu0
    %v1090 = vadd.f32 %v897, %v1089
    %1091 = vmatmul.bf16.gmra.mxu0 %v984
    %v1092 = vpop.f32.mrf.mxu0
    %v1093 = vadd.f32 %v898, %v1092
    %v1094 = vpop.f32.mrf.mxu0
    %v1095 = vadd.f32 %v899, %v1094
    %1096 = vmatmul.bf16.gmra.mxu0 %v987
    %v1097 = vpop.f32.mrf.mxu0
    %v1098 = vadd.f32 %v900, %v1097
    %v1099 = vpop.f32.mrf.mxu0
    %v1100 = vadd.f32 %v901, %v1099
    %1101 = vmatmul.bf16.gmra.mxu0 %v990
    %v1102 = vpop.f32.mrf.mxu0
    %v1103 = vadd.f32 %v902, %v1102
    %v1104 = vpop.f32.mrf.mxu0
    %v1105 = vadd.f32 %v903, %v1104
    %1106 = vmatmul.bf16.gmra.mxu0 %v993
    %v1107 = vpop.f32.mrf.mxu0
    %v1108 = vadd.f32 %v904, %v1107
    %v1109 = vpop.f32.mrf.mxu0
    %v1110 = vadd.f32 %v905, %v1109
    %1111 = vmatmul.bf16.gmra.mxu0 %v996
    %v1112 = vpop.f32.mrf.mxu0
    %v1113 = vadd.f32 %v906, %v1112
    %v1114 = vpop.f32.mrf.mxu0
    %v1115 = vadd.f32 %v907, %v1114
    %1116 = vmatmul.bf16.gmra.mxu0 %v999
    %v1117 = vpop.f32.mrf.mxu0
    %v1118 = vadd.f32 %v908, %v1117
    %v1119 = vpop.f32.mrf.mxu0
    %v1120 = vadd.f32 %v909, %v1119
    %1121 = vmatmul.bf16.gmra.mxu0 %v1002
    %v1122 = vpop.f32.mrf.mxu0
    %v1123 = vadd.f32 %v910, %v1122
    %v1124 = vpop.f32.mrf.mxu0
    %v1125 = vadd.f32 %v911, %v1124
    %1126 = vmatmul.bf16.gmra.mxu0 %v1005
    %v1127 = vpop.f32.mrf.mxu0
    %v1128 = vadd.f32 %v912, %v1127
    %v1129 = vpop.f32.mrf.mxu0
    %v1130 = vadd.f32 %v913, %v1129
    %1131 = vmatmul.bf16.gmra.mxu0 %v1008
    %v1132 = vpop.f32.mrf.mxu0
    %v1133 = vadd.f32 %v914, %v1132
    %v1134 = vpop.f32.mrf.mxu0
    %v1135 = vadd.f32 %v915, %v1134
    %1136 = vmatmul.bf16.gmra.mxu0 %v1011
    %v1137 = vpop.f32.mrf.mxu0
    %v1138 = vadd.f32 %v916, %v1137
    %v1139 = vpop.f32.mrf.mxu0
    %v1140 = vadd.f32 %v917, %v1139
    %1141 = vmatmul.bf16.gmra.mxu0 %v1014
    %v1142 = vpop.f32.mrf.mxu0
    %v1143 = vadd.f32 %v918, %v1142
    %v1144 = vpop.f32.mrf.mxu0
    %v1145 = vadd.f32 %v919, %v1144
    %1146 = vmatmul.bf16.gmra.mxu0 %v1017
    %v1147 = vpop.f32.mrf.mxu0
    %v1148 = vadd.f32 %v920, %v1147
    %v1149 = vpop.f32.mrf.mxu0
    %v1150 = vadd.f32 %v921, %v1149
    %1151 = vmatmul.bf16.gmra.mxu0 %v1020
    %v1152 = vpop.f32.mrf.mxu0
    %v1153 = vadd.f32 %v922, %v1152
    %v1154 = vpop.f32.mrf.mxu0
    %v1155 = vadd.f32 %v923, %v1154
    %1156 = vmatmul.bf16.gmra.mxu0 %v1023
    %v1157 = vpop.f32.mrf.mxu0
    %v1158 = vadd.f32 %v924, %v1157
    %v1159 = vpop.f32.mrf.mxu0
    %v1160 = vadd.f32 %v925, %v1159
    %1161 = vmatmul.bf16.gmra.mxu0 %v1026
    %v1162 = vpop.f32.mrf.mxu0
    %v1163 = vadd.f32 %v926, %v1162
    %v1164 = vpop.f32.mrf.mxu0
    %v1165 = vadd.f32 %v927, %v1164
    %1166 = vmatmul.bf16.gmra.mxu0 %v1029
    %v1167 = vpop.f32.mrf.mxu0
    %v1168 = vadd.f32 %v928, %v1167
    %v1169 = vpop.f32.mrf.mxu0
    %v1170 = vadd.f32 %v929, %v1169
    %1171 = vmatmul.bf16.gmra.mxu0 %v1032
    %v1172 = vpop.f32.mrf.mxu0
    %v1173 = vadd.f32 %v930, %v1172
    %v1174 = vpop.f32.mrf.mxu0
    %v1175 = vadd.f32 %v931, %v1174
    %1176 = vmatmul.bf16.gmra.mxu0 %v1035
    %v1177 = vpop.f32.mrf.mxu0
    %v1178 = vadd.f32 %v932, %v1177
    %v1179 = vpop.f32.mrf.mxu0
    %v1180 = vadd.f32 %v933, %v1179
    %1181 = vmatmul.bf16.gmra.mxu0 %v1038
    %v1182 = vpop.f32.mrf.mxu0
    %v1183 = vadd.f32 %v934, %v1182
    %v1184 = vpop.f32.mrf.mxu0
    %v1185 = vadd.f32 %v935, %v1184
    %1186 = vmatmul.bf16.gmra.mxu0 %v1041
    %v1187 = vpop.f32.mrf.mxu0
    %v1188 = vadd.f32 %v936, %v1187
    %v1189 = vpop.f32.mrf.mxu0
    %v1190 = vadd.f32 %v937, %v1189
    %1191 = vmatmul.bf16.gmra.mxu0 %v1044
    %v1192 = vpop.f32.mrf.mxu0
    %v1193 = vadd.f32 %v938, %v1192
    %v1194 = vpop.f32.mrf.mxu0
    %v1195 = vadd.f32 %v939, %v1194
    %1196 = vmatmul.bf16.gmra.mxu0 %v1047
    %v1197 = vpop.f32.mrf.mxu0
    %v1198 = vadd.f32 %v940, %v1197
    %v1199 = vpop.f32.mrf.mxu0
    %v1200 = vadd.f32 %v941, %v1199
    %1201 = vmatmul.bf16.gmra.mxu0 %v1050
    %v1202 = vpop.f32.mrf.mxu0
    %v1203 = vadd.f32 %v942, %v1202
    %v1204 = vpop.f32.mrf.mxu0
    %v1205 = vadd.f32 %v943, %v1204
    %1206 = vmatmul.bf16.gmra.mxu0 %v1053
    %v1207 = vpop.f32.mrf.mxu0
    %v1208 = vadd.f32 %v944, %v1207
    %v1209 = vpop.f32.mrf.mxu0
    %v1210 = vadd.f32 %v945, %v1209
    %1211 = vmatmul.bf16.gmra.mxu0 %v1056
    %v1212 = vpop.f32.mrf.mxu0
    %v1213 = vadd.f32 %v946, %v1212
    %v1214 = vpop.f32.mrf.mxu0
    %v1215 = vadd.f32 %v947, %v1214
    %1216 = vmatmul.bf16.gmra.mxu0 %v1059
    %v1217 = vpop.f32.mrf.mxu0
    %v1218 = vadd.f32 %v948, %v1217
    %v1219 = vpop.f32.mrf.mxu0
    %v1220 = vadd.f32 %v949, %v1219
    %1221 = vmatmul.bf16.gmra.mxu0 %v1062
    %v1222 = vpop.f32.mrf.mxu0
    %v1223 = vadd.f32 %v950, %v1222
    %v1224 = vpop.f32.mrf.mxu0
    %v1225 = vadd.f32 %v951, %v1224
    %1226 = vmatmul.bf16.gmra.mxu0 %v1065
    %v1227 = vpop.f32.mrf.mxu0
    %v1228 = vadd.f32 %v952, %v1227
    %v1229 = vpop.f32.mrf.mxu0
    %v1230 = vadd.f32 %v953, %v1229
    %1231 = vmatmul.bf16.gmra.mxu0 %v1068
    %v1232 = vpop.f32.mrf.mxu0
    %v1233 = vadd.f32 %v954, %v1232
    %v1234 = vpop.f32.mrf.mxu0
    %v1235 = vadd.f32 %v955, %v1234
    %1236 = vmatmul.bf16.gmra.mxu0 %v1071
    %v1237 = vpop.f32.mrf.mxu0
    %v1238 = vadd.f32 %v956, %v1237
    %v1239 = vpop.f32.mrf.mxu0
    %v1240 = vadd.f32 %v957, %v1239
    %1241 = vdwg.mxu0
    %v1242 = vpack.c.bf16 %v1085, %v1083
    %v1243 = vpack.c.bf16 %v1090, %v1088
    %v1244 = vpack.c.bf16 %v1095, %v1093
    %v1245 = vpack.c.bf16 %v1100, %v1098
    %v1246 = vpack.c.bf16 %v1105, %v1103
    %v1247 = vpack.c.bf16 %v1110, %v1108
    %v1248 = vpack.c.bf16 %v1115, %v1113
    %v1249 = vpack.c.bf16 %v1120, %v1118
    %v1250 = vpack.c.bf16 %v1125, %v1123
    %v1251 = vpack.c.bf16 %v1130, %v1128
    %v1252 = vpack.c.bf16 %v1135, %v1133
    %v1253 = vpack.c.bf16 %v1140, %v1138
    %v1254 = vpack.c.bf16 %v1145, %v1143
    %v1255 = vpack.c.bf16 %v1150, %v1148
    %v1256 = vpack.c.bf16 %v1155, %v1153
    %v1257 = vpack.c.bf16 %v1160, %v1158
    %v1258 = vpack.c.bf16 %v1165, %v1163
    %v1259 = vpack.c.bf16 %v1170, %v1168
    %v1260 = vpack.c.bf16 %v1175, %v1173
    %v1261 = vpack.c.bf16 %v1180, %v1178
    %v1262 = vpack.c.bf16 %v1185, %v1183
    %v1263 = vpack.c.bf16 %v1190, %v1188
    %v1264 = vpack.c.bf16 %v1195, %v1193
    %v1265 = vpack.c.bf16 %v1200, %v1198
    %v1266 = vpack.c.bf16 %v1205, %v1203
    %v1267 = vpack.c.bf16 %v1210, %v1208
    %v1268 = vpack.c.bf16 %v1215, %v1213
    %v1269 = vpack.c.bf16 %v1220, %v1218
    %v1270 = vpack.c.bf16 %v1225, %v1223
    %v1271 = vpack.c.bf16 %v1230, %v1228
    %v1272 = vpack.c.bf16 %v1235, %v1233
    %v1273 = vpack.c.bf16 %v1240, %v1238
    %v1274 = vld [vmem:[%s3] sm:$0xf]
    %v1275 = vld [vmem:[%s3 + $0x4] sm:$0xf]
    %v1276 = vld [vmem:[%s3 + $0x8] sm:$0xf]
    %v1277 = vld [vmem:[%s3 + $0xc] sm:$0xf]
    %v1278 = vld [vmem:[%s3 + $0x10] sm:$0xf]
    %v1279 = vld [vmem:[%s3 + $0x14] sm:$0xf]
    %v1280 = vld [vmem:[%s4] sm:$0x1]
    %v1281 = vperm.slane %v1280, 0
    %v1288 = vunpack.c.l.b16 %v1274
    %v1289 = vunpack.c.l.b16 %v1275
    %v1290 = vunpack.c.l.b16 %v1276
    %v1291 = vunpack.c.l.b16 %v1277
    %v1292 = vunpack.c.l.b16 %v1278
    %v1293 = vunpack.c.l.b16 %v1279
    %v1294 = vpack.c.b16 %v1289, %v1288
    %v1295 = vpack.c.b16 %v1291, %v1290
    %v1296 = vpack.c.b16 %v1293, %v1292
    %v1301 = vsel %vm976, %v1242, 0
    %v1304 = vsel %vm976, %v1243, 0
    %v1307 = vsel %vm976, %v1244, 0
    %v1310 = vsel %vm976, %v1245, 0
    %v1313 = vsel %vm976, %v1246, 0
    %v1316 = vsel %vm976, %v1247, 0
    %v1319 = vsel %vm976, %v1248, 0
    %v1322 = vsel %vm976, %v1249, 0
    %v1325 = vsel %vm976, %v1250, 0
    %v1328 = vsel %vm976, %v1251, 0
    %v1331 = vsel %vm976, %v1252, 0
    %v1334 = vsel %vm976, %v1253, 0
    %v1337 = vsel %vm976, %v1254, 0
    %v1340 = vsel %vm976, %v1255, 0
    %v1343 = vsel %vm976, %v1256, 0
    %v1346 = vsel %vm976, %v1257, 0
    %v1349 = vsel %vm976, %v1258, 0
    %v1352 = vsel %vm976, %v1259, 0
    %v1355 = vsel %vm976, %v1260, 0
    %v1358 = vsel %vm976, %v1261, 0
    %v1361 = vsel %vm976, %v1262, 0
    %v1364 = vsel %vm976, %v1263, 0
    %v1367 = vsel %vm976, %v1264, 0
    %v1370 = vsel %vm976, %v1265, 0
    %v1373 = vsel %vm976, %v1266, 0
    %v1376 = vsel %vm976, %v1267, 0
    %v1379 = vsel %vm976, %v1268, 0
    %v1382 = vsel %vm976, %v1269, 0
    %v1385 = vsel %vm976, %v1270, 0
    %v1388 = vsel %vm976, %v1271, 0
    %v1391 = vsel %vm976, %v1272, 0
    %v1394 = vsel %vm976, %v1273, 0
    %1396 = vmatpush.bf16.msra.mxu0 0
    %1397 = vmatpush.bf16.msra.mxu0 0
    %1398 = vmatpush.bf16.msra.mxu0 0
    %1399 = vmatpush.bf16.msra.mxu0 0
    %1400 = vmatpush.bf16.msra.mxu0 0
    %1401 = vmatpush.bf16.msra.mxu0 %v1296
    %1402 = vmatpush.bf16.msra.mxu0 %v1295
    %1403 = vmatpush.bf16.msra.mxu0 %v1294
    %1404 = vmatmul.bf16.gmra.mxu0 %v1301
    %v1405 = vpop.f32.mrf.mxu0
    %v1406 = vadd.f32 %v1281, %v1405
    %v1407 = vpop.f32.mrf.mxu0
    %v1408 = vadd.f32 %v1281, %v1407
    %1409 = vmatmul.bf16.gmra.mxu0 %v1304
    %v1410 = vpop.f32.mrf.mxu0
    %v1411 = vadd.f32 %v1281, %v1410
    %v1412 = vpop.f32.mrf.mxu0
    %v1413 = vadd.f32 %v1281, %v1412
    %1414 = vmatmul.bf16.gmra.mxu0 %v1307
    %v1415 = vpop.f32.mrf.mxu0
    %v1416 = vadd.f32 %v1281, %v1415
    %v1417 = vpop.f32.mrf.mxu0
    %v1418 = vadd.f32 %v1281, %v1417
    %1419 = vmatmul.bf16.gmra.mxu0 %v1310
    %v1420 = vpop.f32.mrf.mxu0
    %v1421 = vadd.f32 %v1281, %v1420
    %v1422 = vpop.f32.mrf.mxu0
    %v1423 = vadd.f32 %v1281, %v1422
    %1424 = vmatmul.bf16.gmra.mxu0 %v1313
    %v1425 = vpop.f32.mrf.mxu0
    %v1426 = vadd.f32 %v1281, %v1425
    %v1427 = vpop.f32.mrf.mxu0
    %v1428 = vadd.f32 %v1281, %v1427
    %1429 = vmatmul.bf16.gmra.mxu0 %v1316
    %v1430 = vpop.f32.mrf.mxu0
    %v1431 = vadd.f32 %v1281, %v1430
    %v1432 = vpop.f32.mrf.mxu0
    %v1433 = vadd.f32 %v1281, %v1432
    %1434 = vmatmul.bf16.gmra.mxu0 %v1319
    %v1435 = vpop.f32.mrf.mxu0
    %v1436 = vadd.f32 %v1281, %v1435
    %v1437 = vpop.f32.mrf.mxu0
    %v1438 = vadd.f32 %v1281, %v1437
    %1439 = vmatmul.bf16.gmra.mxu0 %v1322
    %v1440 = vpop.f32.mrf.mxu0
    %v1441 = vadd.f32 %v1281, %v1440
    %v1442 = vpop.f32.mrf.mxu0
    %v1443 = vadd.f32 %v1281, %v1442
    %1444 = vmatmul.bf16.gmra.mxu0 %v1325
    %v1445 = vpop.f32.mrf.mxu0
    %v1446 = vadd.f32 %v1281, %v1445
    %v1447 = vpop.f32.mrf.mxu0
    %v1448 = vadd.f32 %v1281, %v1447
    %1449 = vmatmul.bf16.gmra.mxu0 %v1328
    %v1450 = vpop.f32.mrf.mxu0
    %v1451 = vadd.f32 %v1281, %v1450
    %v1452 = vpop.f32.mrf.mxu0
    %v1453 = vadd.f32 %v1281, %v1452
    %1454 = vmatmul.bf16.gmra.mxu0 %v1331
    %v1455 = vpop.f32.mrf.mxu0
    %v1456 = vadd.f32 %v1281, %v1455
    %v1457 = vpop.f32.mrf.mxu0
    %v1458 = vadd.f32 %v1281, %v1457
    %1459 = vmatmul.bf16.gmra.mxu0 %v1334
    %v1460 = vpop.f32.mrf.mxu0
    %v1461 = vadd.f32 %v1281, %v1460
    %v1462 = vpop.f32.mrf.mxu0
    %v1463 = vadd.f32 %v1281, %v1462
    %1464 = vmatmul.bf16.gmra.mxu0 %v1337
    %v1465 = vpop.f32.mrf.mxu0
    %v1466 = vadd.f32 %v1281, %v1465
    %v1467 = vpop.f32.mrf.mxu0
    %v1468 = vadd.f32 %v1281, %v1467
    %1469 = vmatmul.bf16.gmra.mxu0 %v1340
    %v1470 = vpop.f32.mrf.mxu0
    %v1471 = vadd.f32 %v1281, %v1470
    %v1472 = vpop.f32.mrf.mxu0
    %v1473 = vadd.f32 %v1281, %v1472
    %1474 = vmatmul.bf16.gmra.mxu0 %v1343
    %v1475 = vpop.f32.mrf.mxu0
    %v1476 = vadd.f32 %v1281, %v1475
    %v1477 = vpop.f32.mrf.mxu0
    %v1478 = vadd.f32 %v1281, %v1477
    %1479 = vmatmul.bf16.gmra.mxu0 %v1346
    %v1480 = vpop.f32.mrf.mxu0
    %v1481 = vadd.f32 %v1281, %v1480
    %v1482 = vpop.f32.mrf.mxu0
    %v1483 = vadd.f32 %v1281, %v1482
    %1484 = vmatmul.bf16.gmra.mxu0 %v1349
    %v1485 = vpop.f32.mrf.mxu0
    %v1486 = vadd.f32 %v1281, %v1485
    %v1487 = vpop.f32.mrf.mxu0
    %v1488 = vadd.f32 %v1281, %v1487
    %1489 = vmatmul.bf16.gmra.mxu0 %v1352
    %v1490 = vpop.f32.mrf.mxu0
    %v1491 = vadd.f32 %v1281, %v1490
    %v1492 = vpop.f32.mrf.mxu0
    %v1493 = vadd.f32 %v1281, %v1492
    %1494 = vmatmul.bf16.gmra.mxu0 %v1355
    %v1495 = vpop.f32.mrf.mxu0
    %v1496 = vadd.f32 %v1281, %v1495
    %v1497 = vpop.f32.mrf.mxu0
    %v1498 = vadd.f32 %v1281, %v1497
    %1499 = vmatmul.bf16.gmra.mxu0 %v1358
    %v1500 = vpop.f32.mrf.mxu0
    %v1501 = vadd.f32 %v1281, %v1500
    %v1502 = vpop.f32.mrf.mxu0
    %v1503 = vadd.f32 %v1281, %v1502
    %1504 = vmatmul.bf16.gmra.mxu0 %v1361
    %v1505 = vpop.f32.mrf.mxu0
    %v1506 = vadd.f32 %v1281, %v1505
    %v1507 = vpop.f32.mrf.mxu0
    %v1508 = vadd.f32 %v1281, %v1507
    %1509 = vmatmul.bf16.gmra.mxu0 %v1364
    %v1510 = vpop.f32.mrf.mxu0
    %v1511 = vadd.f32 %v1281, %v1510
    %v1512 = vpop.f32.mrf.mxu0
    %v1513 = vadd.f32 %v1281, %v1512
    %1514 = vmatmul.bf16.gmra.mxu0 %v1367
    %v1515 = vpop.f32.mrf.mxu0
    %v1516 = vadd.f32 %v1281, %v1515
    %v1517 = vpop.f32.mrf.mxu0
    %v1518 = vadd.f32 %v1281, %v1517
    %1519 = vmatmul.bf16.gmra.mxu0 %v1370
    %v1520 = vpop.f32.mrf.mxu0
    %v1521 = vadd.f32 %v1281, %v1520
    %v1522 = vpop.f32.mrf.mxu0
    %v1523 = vadd.f32 %v1281, %v1522
    %1524 = vmatmul.bf16.gmra.mxu0 %v1373
    %v1525 = vpop.f32.mrf.mxu0
    %v1526 = vadd.f32 %v1281, %v1525
    %v1527 = vpop.f32.mrf.mxu0
    %v1528 = vadd.f32 %v1281, %v1527
    %1529 = vmatmul.bf16.gmra.mxu0 %v1376
    %v1530 = vpop.f32.mrf.mxu0
    %v1531 = vadd.f32 %v1281, %v1530
    %v1532 = vpop.f32.mrf.mxu0
    %v1533 = vadd.f32 %v1281, %v1532
    %1534 = vmatmul.bf16.gmra.mxu0 %v1379
    %v1535 = vpop.f32.mrf.mxu0
    %v1536 = vadd.f32 %v1281, %v1535
    %v1537 = vpop.f32.mrf.mxu0
    %v1538 = vadd.f32 %v1281, %v1537
    %1539 = vmatmul.bf16.gmra.mxu0 %v1382
    %v1540 = vpop.f32.mrf.mxu0
    %v1541 = vadd.f32 %v1281, %v1540
    %v1542 = vpop.f32.mrf.mxu0
    %v1543 = vadd.f32 %v1281, %v1542
    %1544 = vmatmul.bf16.gmra.mxu0 %v1385
    %v1545 = vpop.f32.mrf.mxu0
    %v1546 = vadd.f32 %v1281, %v1545
    %v1547 = vpop.f32.mrf.mxu0
    %v1548 = vadd.f32 %v1281, %v1547
    %1549 = vmatmul.bf16.gmra.mxu0 %v1388
    %v1550 = vpop.f32.mrf.mxu0
    %v1551 = vadd.f32 %v1281, %v1550
    %v1552 = vpop.f32.mrf.mxu0
    %v1553 = vadd.f32 %v1281, %v1552
    %1554 = vmatmul.bf16.gmra.mxu0 %v1391
    %v1555 = vpop.f32.mrf.mxu0
    %v1556 = vadd.f32 %v1281, %v1555
    %v1557 = vpop.f32.mrf.mxu0
    %v1558 = vadd.f32 %v1281, %v1557
    %1559 = vmatmul.bf16.gmra.mxu0 %v1394
    %v1560 = vpop.f32.mrf.mxu0
    %v1561 = vadd.f32 %v1281, %v1560
    %v1562 = vpop.f32.mrf.mxu0
    %v1563 = vadd.f32 %v1281, %v1562
    %1564 = vdwg.mxu0
    %v1565 = vmax.f32 %v1406, 0.0
    %v1566 = vmax.f32 %v1408, 0.0
    %v1567 = vmax.f32 %v1411, 0.0
    %v1568 = vmax.f32 %v1413, 0.0
    %v1569 = vmax.f32 %v1416, 0.0
    %v1570 = vmax.f32 %v1418, 0.0
    %v1571 = vmax.f32 %v1421, 0.0
    %v1572 = vmax.f32 %v1423, 0.0
    %v1573 = vmax.f32 %v1426, 0.0
    %v1574 = vmax.f32 %v1428, 0.0
    %v1575 = vmax.f32 %v1431, 0.0
    %v1576 = vmax.f32 %v1433, 0.0
    %v1577 = vmax.f32 %v1436, 0.0
    %v1578 = vmax.f32 %v1438, 0.0
    %v1579 = vmax.f32 %v1441, 0.0
    %v1580 = vmax.f32 %v1443, 0.0
    %v1581 = vmax.f32 %v1446, 0.0
    %v1582 = vmax.f32 %v1448, 0.0
    %v1583 = vmax.f32 %v1451, 0.0
    %v1584 = vmax.f32 %v1453, 0.0
    %v1585 = vmax.f32 %v1456, 0.0
    %v1586 = vmax.f32 %v1458, 0.0
    %v1587 = vmax.f32 %v1461, 0.0
    %v1588 = vmax.f32 %v1463, 0.0
    %v1589 = vmax.f32 %v1466, 0.0
    %v1590 = vmax.f32 %v1468, 0.0
    %v1591 = vmax.f32 %v1471, 0.0
    %v1592 = vmax.f32 %v1473, 0.0
    %v1593 = vmax.f32 %v1476, 0.0
    %v1594 = vmax.f32 %v1478, 0.0
    %v1595 = vmax.f32 %v1481, 0.0
    %v1596 = vmax.f32 %v1483, 0.0
    %v1597 = vmax.f32 %v1486, 0.0
    %v1598 = vmax.f32 %v1488, 0.0
    %v1599 = vmax.f32 %v1491, 0.0
    %v1600 = vmax.f32 %v1493, 0.0
    %v1601 = vmax.f32 %v1496, 0.0
    %v1602 = vmax.f32 %v1498, 0.0
    %v1603 = vmax.f32 %v1501, 0.0
    %v1604 = vmax.f32 %v1503, 0.0
    %v1605 = vmax.f32 %v1506, 0.0
    %v1606 = vmax.f32 %v1508, 0.0
    %v1607 = vmax.f32 %v1511, 0.0
    %v1608 = vmax.f32 %v1513, 0.0
    %v1609 = vmax.f32 %v1516, 0.0
    %v1610 = vmax.f32 %v1518, 0.0
    %v1611 = vmax.f32 %v1521, 0.0
    %v1612 = vmax.f32 %v1523, 0.0
    %v1613 = vmax.f32 %v1526, 0.0
    %v1614 = vmax.f32 %v1528, 0.0
    %v1615 = vmax.f32 %v1531, 0.0
    %v1616 = vmax.f32 %v1533, 0.0
    %v1617 = vmax.f32 %v1536, 0.0
    %v1618 = vmax.f32 %v1538, 0.0
    %v1619 = vmax.f32 %v1541, 0.0
    %v1620 = vmax.f32 %v1543, 0.0
    %v1621 = vmax.f32 %v1546, 0.0
    %v1622 = vmax.f32 %v1548, 0.0
    %v1623 = vmax.f32 %v1551, 0.0
    %v1624 = vmax.f32 %v1553, 0.0
    %v1625 = vmax.f32 %v1556, 0.0
    %v1626 = vmax.f32 %v1558, 0.0
    %v1627 = vmax.f32 %v1561, 0.0
    %v1628 = vmax.f32 %v1563, 0.0
    %v1629 = vpack.c.bf16 %v1566, %v1565
    %v1630 = vpack.c.bf16 %v1568, %v1567
    %v1631 = vpack.c.bf16 %v1570, %v1569
    %v1632 = vpack.c.bf16 %v1572, %v1571
    %v1633 = vpack.c.bf16 %v1574, %v1573
    %v1634 = vpack.c.bf16 %v1576, %v1575
    %v1635 = vpack.c.bf16 %v1578, %v1577
    %v1636 = vpack.c.bf16 %v1580, %v1579
    %v1637 = vpack.c.bf16 %v1582, %v1581
    %v1638 = vpack.c.bf16 %v1584, %v1583
    %v1639 = vpack.c.bf16 %v1586, %v1585
    %v1640 = vpack.c.bf16 %v1588, %v1587
    %v1641 = vpack.c.bf16 %v1590, %v1589
    %v1642 = vpack.c.bf16 %v1592, %v1591
    %v1643 = vpack.c.bf16 %v1594, %v1593
    %v1644 = vpack.c.bf16 %v1596, %v1595
    %v1645 = vpack.c.bf16 %v1598, %v1597
    %v1646 = vpack.c.bf16 %v1600, %v1599
    %v1647 = vpack.c.bf16 %v1602, %v1601
    %v1648 = vpack.c.bf16 %v1604, %v1603
    %v1649 = vpack.c.bf16 %v1606, %v1605
    %v1650 = vpack.c.bf16 %v1608, %v1607
    %v1651 = vpack.c.bf16 %v1610, %v1609
    %v1652 = vpack.c.bf16 %v1612, %v1611
    %v1653 = vpack.c.bf16 %v1614, %v1613
    %v1654 = vpack.c.bf16 %v1616, %v1615
    %v1655 = vpack.c.bf16 %v1618, %v1617
    %v1656 = vpack.c.bf16 %v1620, %v1619
    %v1657 = vpack.c.bf16 %v1622, %v1621
    %v1658 = vpack.c.bf16 %v1624, %v1623
    %v1659 = vpack.c.bf16 %v1626, %v1625
    %v1660 = vpack.c.bf16 %v1628, %v1627
    %s1661 = scalar_lea.vmem %s3, 24
    %v1662 = vld [vmem:[%s1661] sm:$0xf]
    %v1663 = vld [vmem:[%s1661 + $0x4] sm:$0xf]
    %v1664 = vld [vmem:[%s1661 + $0x8] sm:$0xf]
    %v1665 = vld [vmem:[%s1661 + $0xc] sm:$0xf]
    %v1666 = vld [vmem:[%s1661 + $0x10] sm:$0xf]
    %v1667 = vld [vmem:[%s1661 + $0x14] sm:$0xf]
    %v1668 = vld [vmem:[%s4 + $0x1] sm:$0x1]
    %v1669 = vperm.slane %v1668, 0
    %v1676 = vunpack.c.l.b16 %v1662
    %v1677 = vunpack.c.l.b16 %v1663
    %v1678 = vunpack.c.l.b16 %v1664
    %v1679 = vunpack.c.l.b16 %v1665
    %v1680 = vunpack.c.l.b16 %v1666
    %v1681 = vunpack.c.l.b16 %v1667
    %v1682 = vpack.c.b16 %v1677, %v1676
    %v1683 = vpack.c.b16 %v1679, %v1678
    %v1684 = vpack.c.b16 %v1681, %v1680
    %v1689 = vsel %vm976, %v1629, 0
    %v1692 = vsel %vm976, %v1630, 0
    %v1695 = vsel %vm976, %v1631, 0
    %v1698 = vsel %vm976, %v1632, 0
    %v1701 = vsel %vm976, %v1633, 0
    %v1704 = vsel %vm976, %v1634, 0
    %v1707 = vsel %vm976, %v1635, 0
    %v1710 = vsel %vm976, %v1636, 0
    %v1713 = vsel %vm976, %v1637, 0
    %v1716 = vsel %vm976, %v1638, 0
    %v1719 = vsel %vm976, %v1639, 0
    %v1722 = vsel %vm976, %v1640, 0
    %v1725 = vsel %vm976, %v1641, 0
    %v1728 = vsel %vm976, %v1642, 0
    %v1731 = vsel %vm976, %v1643, 0
    %v1734 = vsel %vm976, %v1644, 0
    %v1737 = vsel %vm976, %v1645, 0
    %v1740 = vsel %vm976, %v1646, 0
    %v1743 = vsel %vm976, %v1647, 0
    %v1746 = vsel %vm976, %v1648, 0
    %v1749 = vsel %vm976, %v1649, 0
    %v1752 = vsel %vm976, %v1650, 0
    %v1755 = vsel %vm976, %v1651, 0
    %v1758 = vsel %vm976, %v1652, 0
    %v1761 = vsel %vm976, %v1653, 0
    %v1764 = vsel %vm976, %v1654, 0
    %v1767 = vsel %vm976, %v1655, 0
    %v1770 = vsel %vm976, %v1656, 0
    %v1773 = vsel %vm976, %v1657, 0
    %v1776 = vsel %vm976, %v1658, 0
    %v1779 = vsel %vm976, %v1659, 0
    %v1782 = vsel %vm976, %v1660, 0
    %1784 = vmatpush.bf16.msra.mxu0 0
    %1785 = vmatpush.bf16.msra.mxu0 0
    %1786 = vmatpush.bf16.msra.mxu0 0
    %1787 = vmatpush.bf16.msra.mxu0 0
    %1788 = vmatpush.bf16.msra.mxu0 0
    %1789 = vmatpush.bf16.msra.mxu0 %v1684
    %1790 = vmatpush.bf16.msra.mxu0 %v1683
    %1791 = vmatpush.bf16.msra.mxu0 %v1682
    %1792 = vmatmul.bf16.gmra.mxu0 %v1689
    %v1793 = vpop.f32.mrf.mxu0
    %v1794 = vadd.f32 %v1669, %v1793
    %v1795 = vpop.f32.mrf.mxu0
    %v1796 = vadd.f32 %v1669, %v1795
    %1797 = vmatmul.bf16.gmra.mxu0 %v1692
    %v1798 = vpop.f32.mrf.mxu0
    %v1799 = vadd.f32 %v1669, %v1798
    %v1800 = vpop.f32.mrf.mxu0
    %v1801 = vadd.f32 %v1669, %v1800
    %1802 = vmatmul.bf16.gmra.mxu0 %v1695
    %v1803 = vpop.f32.mrf.mxu0
    %v1804 = vadd.f32 %v1669, %v1803
    %v1805 = vpop.f32.mrf.mxu0
    %v1806 = vadd.f32 %v1669, %v1805
    %1807 = vmatmul.bf16.gmra.mxu0 %v1698
    %v1808 = vpop.f32.mrf.mxu0
    %v1809 = vadd.f32 %v1669, %v1808
    %v1810 = vpop.f32.mrf.mxu0
    %v1811 = vadd.f32 %v1669, %v1810
    %1812 = vmatmul.bf16.gmra.mxu0 %v1701
    %v1813 = vpop.f32.mrf.mxu0
    %v1814 = vadd.f32 %v1669, %v1813
    %v1815 = vpop.f32.mrf.mxu0
    %v1816 = vadd.f32 %v1669, %v1815
    %1817 = vmatmul.bf16.gmra.mxu0 %v1704
    %v1818 = vpop.f32.mrf.mxu0
    %v1819 = vadd.f32 %v1669, %v1818
    %v1820 = vpop.f32.mrf.mxu0
    %v1821 = vadd.f32 %v1669, %v1820
    %1822 = vmatmul.bf16.gmra.mxu0 %v1707
    %v1823 = vpop.f32.mrf.mxu0
    %v1824 = vadd.f32 %v1669, %v1823
    %v1825 = vpop.f32.mrf.mxu0
    %v1826 = vadd.f32 %v1669, %v1825
    %1827 = vmatmul.bf16.gmra.mxu0 %v1710
    %v1828 = vpop.f32.mrf.mxu0
    %v1829 = vadd.f32 %v1669, %v1828
    %v1830 = vpop.f32.mrf.mxu0
    %v1831 = vadd.f32 %v1669, %v1830
    %1832 = vmatmul.bf16.gmra.mxu0 %v1713
    %v1833 = vpop.f32.mrf.mxu0
    %v1834 = vadd.f32 %v1669, %v1833
    %v1835 = vpop.f32.mrf.mxu0
    %v1836 = vadd.f32 %v1669, %v1835
    %1837 = vmatmul.bf16.gmra.mxu0 %v1716
    %v1838 = vpop.f32.mrf.mxu0
    %v1839 = vadd.f32 %v1669, %v1838
    %v1840 = vpop.f32.mrf.mxu0
    %v1841 = vadd.f32 %v1669, %v1840
    %1842 = vmatmul.bf16.gmra.mxu0 %v1719
    %v1843 = vpop.f32.mrf.mxu0
    %v1844 = vadd.f32 %v1669, %v1843
    %v1845 = vpop.f32.mrf.mxu0
    %v1846 = vadd.f32 %v1669, %v1845
    %1847 = vmatmul.bf16.gmra.mxu0 %v1722
    %v1848 = vpop.f32.mrf.mxu0
    %v1849 = vadd.f32 %v1669, %v1848
    %v1850 = vpop.f32.mrf.mxu0
    %v1851 = vadd.f32 %v1669, %v1850
    %1852 = vmatmul.bf16.gmra.mxu0 %v1725
    %v1853 = vpop.f32.mrf.mxu0
    %v1854 = vadd.f32 %v1669, %v1853
    %v1855 = vpop.f32.mrf.mxu0
    %v1856 = vadd.f32 %v1669, %v1855
    %1857 = vmatmul.bf16.gmra.mxu0 %v1728
    %v1858 = vpop.f32.mrf.mxu0
    %v1859 = vadd.f32 %v1669, %v1858
    %v1860 = vpop.f32.mrf.mxu0
    %v1861 = vadd.f32 %v1669, %v1860
    %1862 = vmatmul.bf16.gmra.mxu0 %v1731
    %v1863 = vpop.f32.mrf.mxu0
    %v1864 = vadd.f32 %v1669, %v1863
    %v1865 = vpop.f32.mrf.mxu0
    %v1866 = vadd.f32 %v1669, %v1865
    %1867 = vmatmul.bf16.gmra.mxu0 %v1734
    %v1868 = vpop.f32.mrf.mxu0
    %v1869 = vadd.f32 %v1669, %v1868
    %v1870 = vpop.f32.mrf.mxu0
    %v1871 = vadd.f32 %v1669, %v1870
    %1872 = vmatmul.bf16.gmra.mxu0 %v1737
    %v1873 = vpop.f32.mrf.mxu0
    %v1874 = vadd.f32 %v1669, %v1873
    %v1875 = vpop.f32.mrf.mxu0
    %v1876 = vadd.f32 %v1669, %v1875
    %1877 = vmatmul.bf16.gmra.mxu0 %v1740
    %v1878 = vpop.f32.mrf.mxu0
    %v1879 = vadd.f32 %v1669, %v1878
    %v1880 = vpop.f32.mrf.mxu0
    %v1881 = vadd.f32 %v1669, %v1880
    %1882 = vmatmul.bf16.gmra.mxu0 %v1743
    %v1883 = vpop.f32.mrf.mxu0
    %v1884 = vadd.f32 %v1669, %v1883
    %v1885 = vpop.f32.mrf.mxu0
    %v1886 = vadd.f32 %v1669, %v1885
    %1887 = vmatmul.bf16.gmra.mxu0 %v1746
    %v1888 = vpop.f32.mrf.mxu0
    %v1889 = vadd.f32 %v1669, %v1888
    %v1890 = vpop.f32.mrf.mxu0
    %v1891 = vadd.f32 %v1669, %v1890
    %1892 = vmatmul.bf16.gmra.mxu0 %v1749
    %v1893 = vpop.f32.mrf.mxu0
    %v1894 = vadd.f32 %v1669, %v1893
    %v1895 = vpop.f32.mrf.mxu0
    %v1896 = vadd.f32 %v1669, %v1895
    %1897 = vmatmul.bf16.gmra.mxu0 %v1752
    %v1898 = vpop.f32.mrf.mxu0
    %v1899 = vadd.f32 %v1669, %v1898
    %v1900 = vpop.f32.mrf.mxu0
    %v1901 = vadd.f32 %v1669, %v1900
    %1902 = vmatmul.bf16.gmra.mxu0 %v1755
    %v1903 = vpop.f32.mrf.mxu0
    %v1904 = vadd.f32 %v1669, %v1903
    %v1905 = vpop.f32.mrf.mxu0
    %v1906 = vadd.f32 %v1669, %v1905
    %1907 = vmatmul.bf16.gmra.mxu0 %v1758
    %v1908 = vpop.f32.mrf.mxu0
    %v1909 = vadd.f32 %v1669, %v1908
    %v1910 = vpop.f32.mrf.mxu0
    %v1911 = vadd.f32 %v1669, %v1910
    %1912 = vmatmul.bf16.gmra.mxu0 %v1761
    %v1913 = vpop.f32.mrf.mxu0
    %v1914 = vadd.f32 %v1669, %v1913
    %v1915 = vpop.f32.mrf.mxu0
    %v1916 = vadd.f32 %v1669, %v1915
    %1917 = vmatmul.bf16.gmra.mxu0 %v1764
    %v1918 = vpop.f32.mrf.mxu0
    %v1919 = vadd.f32 %v1669, %v1918
    %v1920 = vpop.f32.mrf.mxu0
    %v1921 = vadd.f32 %v1669, %v1920
    %1922 = vmatmul.bf16.gmra.mxu0 %v1767
    %v1923 = vpop.f32.mrf.mxu0
    %v1924 = vadd.f32 %v1669, %v1923
    %v1925 = vpop.f32.mrf.mxu0
    %v1926 = vadd.f32 %v1669, %v1925
    %1927 = vmatmul.bf16.gmra.mxu0 %v1770
    %v1928 = vpop.f32.mrf.mxu0
    %v1929 = vadd.f32 %v1669, %v1928
    %v1930 = vpop.f32.mrf.mxu0
    %v1931 = vadd.f32 %v1669, %v1930
    %1932 = vmatmul.bf16.gmra.mxu0 %v1773
    %v1933 = vpop.f32.mrf.mxu0
    %v1934 = vadd.f32 %v1669, %v1933
    %v1935 = vpop.f32.mrf.mxu0
    %v1936 = vadd.f32 %v1669, %v1935
    %1937 = vmatmul.bf16.gmra.mxu0 %v1776
    %v1938 = vpop.f32.mrf.mxu0
    %v1939 = vadd.f32 %v1669, %v1938
    %v1940 = vpop.f32.mrf.mxu0
    %v1941 = vadd.f32 %v1669, %v1940
    %1942 = vmatmul.bf16.gmra.mxu0 %v1779
    %v1943 = vpop.f32.mrf.mxu0
    %v1944 = vadd.f32 %v1669, %v1943
    %v1945 = vpop.f32.mrf.mxu0
    %v1946 = vadd.f32 %v1669, %v1945
    %1947 = vmatmul.bf16.gmra.mxu0 %v1782
    %v1948 = vpop.f32.mrf.mxu0
    %v1949 = vadd.f32 %v1669, %v1948
    %v1950 = vpop.f32.mrf.mxu0
    %v1951 = vadd.f32 %v1669, %v1950
    %1952 = vdwg.mxu0
    %v1953 = vadd.f32 %v1794, %v1083
    %v1954 = vadd.f32 %v1796, %v1085
    %v1955 = vadd.f32 %v1799, %v1088
    %v1956 = vadd.f32 %v1801, %v1090
    %v1957 = vadd.f32 %v1804, %v1093
    %v1958 = vadd.f32 %v1806, %v1095
    %v1959 = vadd.f32 %v1809, %v1098
    %v1960 = vadd.f32 %v1811, %v1100
    %v1961 = vadd.f32 %v1814, %v1103
    %v1962 = vadd.f32 %v1816, %v1105
    %v1963 = vadd.f32 %v1819, %v1108
    %v1964 = vadd.f32 %v1821, %v1110
    %v1965 = vadd.f32 %v1824, %v1113
    %v1966 = vadd.f32 %v1826, %v1115
    %v1967 = vadd.f32 %v1829, %v1118
    %v1968 = vadd.f32 %v1831, %v1120
    %v1969 = vadd.f32 %v1834, %v1123
    %v1970 = vadd.f32 %v1836, %v1125
    %v1971 = vadd.f32 %v1839, %v1128
    %v1972 = vadd.f32 %v1841, %v1130
    %v1973 = vadd.f32 %v1844, %v1133
    %v1974 = vadd.f32 %v1846, %v1135
    %v1975 = vadd.f32 %v1849, %v1138
    %v1976 = vadd.f32 %v1851, %v1140
    %v1977 = vadd.f32 %v1854, %v1143
    %v1978 = vadd.f32 %v1856, %v1145
    %v1979 = vadd.f32 %v1859, %v1148
    %v1980 = vadd.f32 %v1861, %v1150
    %v1981 = vadd.f32 %v1864, %v1153
    %v1982 = vadd.f32 %v1866, %v1155
    %v1983 = vadd.f32 %v1869, %v1158
    %v1984 = vadd.f32 %v1871, %v1160
    %v1985 = vadd.f32 %v1874, %v1163
    %v1986 = vadd.f32 %v1876, %v1165
    %v1987 = vadd.f32 %v1879, %v1168
    %v1988 = vadd.f32 %v1881, %v1170
    %v1989 = vadd.f32 %v1884, %v1173
    %v1990 = vadd.f32 %v1886, %v1175
    %v1991 = vadd.f32 %v1889, %v1178
    %v1992 = vadd.f32 %v1891, %v1180
    %v1993 = vadd.f32 %v1894, %v1183
    %v1994 = vadd.f32 %v1896, %v1185
    %v1995 = vadd.f32 %v1899, %v1188
    %v1996 = vadd.f32 %v1901, %v1190
    %v1997 = vadd.f32 %v1904, %v1193
    %v1998 = vadd.f32 %v1906, %v1195
    %v1999 = vadd.f32 %v1909, %v1198
    %v2000 = vadd.f32 %v1911, %v1200
    %v2001 = vadd.f32 %v1914, %v1203
    %v2002 = vadd.f32 %v1916, %v1205
    %v2003 = vadd.f32 %v1919, %v1208
    %v2004 = vadd.f32 %v1921, %v1210
    %v2005 = vadd.f32 %v1924, %v1213
    %v2006 = vadd.f32 %v1926, %v1215
    %v2007 = vadd.f32 %v1929, %v1218
    %v2008 = vadd.f32 %v1931, %v1220
    %v2009 = vadd.f32 %v1934, %v1223
    %v2010 = vadd.f32 %v1936, %v1225
    %v2011 = vadd.f32 %v1939, %v1228
    %v2012 = vadd.f32 %v1941, %v1230
    %v2013 = vadd.f32 %v1944, %v1233
    %v2014 = vadd.f32 %v1946, %v1235
    %v2015 = vadd.f32 %v1949, %v1238
    %v2016 = vadd.f32 %v1951, %v1240
    %v2017 = vmax.f32 %v1953, 0.0
    %v2018 = vmax.f32 %v1954, 0.0
    %v2019 = vmax.f32 %v1955, 0.0
    %v2020 = vmax.f32 %v1956, 0.0
    %v2021 = vmax.f32 %v1957, 0.0
    %v2022 = vmax.f32 %v1958, 0.0
    %v2023 = vmax.f32 %v1959, 0.0
    %v2024 = vmax.f32 %v1960, 0.0
    %v2025 = vmax.f32 %v1961, 0.0
    %v2026 = vmax.f32 %v1962, 0.0
    %v2027 = vmax.f32 %v1963, 0.0
    %v2028 = vmax.f32 %v1964, 0.0
    %v2029 = vmax.f32 %v1965, 0.0
    %v2030 = vmax.f32 %v1966, 0.0
    %v2031 = vmax.f32 %v1967, 0.0
    %v2032 = vmax.f32 %v1968, 0.0
    %v2033 = vmax.f32 %v1969, 0.0
    %v2034 = vmax.f32 %v1970, 0.0
    %v2035 = vmax.f32 %v1971, 0.0
    %v2036 = vmax.f32 %v1972, 0.0
    %v2037 = vmax.f32 %v1973, 0.0
    %v2038 = vmax.f32 %v1974, 0.0
    %v2039 = vmax.f32 %v1975, 0.0
    %v2040 = vmax.f32 %v1976, 0.0
    %v2041 = vmax.f32 %v1977, 0.0
    %v2042 = vmax.f32 %v1978, 0.0
    %v2043 = vmax.f32 %v1979, 0.0
    %v2044 = vmax.f32 %v1980, 0.0
    %v2045 = vmax.f32 %v1981, 0.0
    %v2046 = vmax.f32 %v1982, 0.0
    %v2047 = vmax.f32 %v1983, 0.0
    %v2048 = vmax.f32 %v1984, 0.0
    %v2049 = vmax.f32 %v1985, 0.0
    %v2050 = vmax.f32 %v1986, 0.0
    %v2051 = vmax.f32 %v1987, 0.0
    %v2052 = vmax.f32 %v1988, 0.0
    %v2053 = vmax.f32 %v1989, 0.0
    %v2054 = vmax.f32 %v1990, 0.0
    %v2055 = vmax.f32 %v1991, 0.0
    %v2056 = vmax.f32 %v1992, 0.0
    %v2057 = vmax.f32 %v1993, 0.0
    %v2058 = vmax.f32 %v1994, 0.0
    %v2059 = vmax.f32 %v1995, 0.0
    %v2060 = vmax.f32 %v1996, 0.0
    %v2061 = vmax.f32 %v1997, 0.0
    %v2062 = vmax.f32 %v1998, 0.0
    %v2063 = vmax.f32 %v1999, 0.0
    %v2064 = vmax.f32 %v2000, 0.0
    %v2065 = vmax.f32 %v2001, 0.0
    %v2066 = vmax.f32 %v2002, 0.0
    %v2067 = vmax.f32 %v2003, 0.0
    %v2068 = vmax.f32 %v2004, 0.0
    %v2069 = vmax.f32 %v2005, 0.0
    %v2070 = vmax.f32 %v2006, 0.0
    %v2071 = vmax.f32 %v2007, 0.0
    %v2072 = vmax.f32 %v2008, 0.0
    %v2073 = vmax.f32 %v2009, 0.0
    %v2074 = vmax.f32 %v2010, 0.0
    %v2075 = vmax.f32 %v2011, 0.0
    %v2076 = vmax.f32 %v2012, 0.0
    %v2077 = vmax.f32 %v2013, 0.0
    %v2078 = vmax.f32 %v2014, 0.0
    %v2079 = vmax.f32 %v2015, 0.0
    %v2080 = vmax.f32 %v2016, 0.0
    %v2081 = vpack.c.bf16 %v2018, %v2017
    %v2082 = vpack.c.bf16 %v2020, %v2019
    %v2083 = vpack.c.bf16 %v2022, %v2021
    %v2084 = vpack.c.bf16 %v2024, %v2023
    %v2085 = vpack.c.bf16 %v2026, %v2025
    %v2086 = vpack.c.bf16 %v2028, %v2027
    %v2087 = vpack.c.bf16 %v2030, %v2029
    %v2088 = vpack.c.bf16 %v2032, %v2031
    %v2089 = vpack.c.bf16 %v2034, %v2033
    %v2090 = vpack.c.bf16 %v2036, %v2035
    %v2091 = vpack.c.bf16 %v2038, %v2037
    %v2092 = vpack.c.bf16 %v2040, %v2039
    %v2093 = vpack.c.bf16 %v2042, %v2041
    %v2094 = vpack.c.bf16 %v2044, %v2043
    %v2095 = vpack.c.bf16 %v2046, %v2045
    %v2096 = vpack.c.bf16 %v2048, %v2047
    %v2097 = vpack.c.bf16 %v2050, %v2049
    %v2098 = vpack.c.bf16 %v2052, %v2051
    %v2099 = vpack.c.bf16 %v2054, %v2053
    %v2100 = vpack.c.bf16 %v2056, %v2055
    %v2101 = vpack.c.bf16 %v2058, %v2057
    %v2102 = vpack.c.bf16 %v2060, %v2059
    %v2103 = vpack.c.bf16 %v2062, %v2061
    %v2104 = vpack.c.bf16 %v2064, %v2063
    %v2105 = vpack.c.bf16 %v2066, %v2065
    %v2106 = vpack.c.bf16 %v2068, %v2067
    %v2107 = vpack.c.bf16 %v2070, %v2069
    %v2108 = vpack.c.bf16 %v2072, %v2071
    %v2109 = vpack.c.bf16 %v2074, %v2073
    %v2110 = vpack.c.bf16 %v2076, %v2075
    %v2111 = vpack.c.bf16 %v2078, %v2077
    %v2112 = vpack.c.bf16 %v2080, %v2079
    %s2113 = scalar_lea.vmem %s3, 48
    %v2114 = vld [vmem:[%s2113] sm:$0xf]
    %v2115 = vld [vmem:[%s2113 + $0x4] sm:$0xf]
    %v2116 = vld [vmem:[%s2113 + $0x8] sm:$0xf]
    %v2117 = vld [vmem:[%s2113 + $0xc] sm:$0xf]
    %v2118 = vld [vmem:[%s2113 + $0x10] sm:$0xf]
    %v2119 = vld [vmem:[%s2113 + $0x14] sm:$0xf]
    %v2120 = vld [vmem:[%s4 + $0x2] sm:$0x1]
    %v2121 = vperm.slane %v2120, 0
    %v2128 = vunpack.c.l.b16 %v2114
    %v2129 = vunpack.c.l.b16 %v2115
    %v2130 = vunpack.c.l.b16 %v2116
    %v2131 = vunpack.c.l.b16 %v2117
    %v2132 = vunpack.c.l.b16 %v2118
    %v2133 = vunpack.c.l.b16 %v2119
    %v2134 = vpack.c.b16 %v2129, %v2128
    %v2135 = vpack.c.b16 %v2131, %v2130
    %v2136 = vpack.c.b16 %v2133, %v2132
    %v2141 = vsel %vm976, %v2081, 0
    %v2144 = vsel %vm976, %v2082, 0
    %v2147 = vsel %vm976, %v2083, 0
    %v2150 = vsel %vm976, %v2084, 0
    %v2153 = vsel %vm976, %v2085, 0
    %v2156 = vsel %vm976, %v2086, 0
    %v2159 = vsel %vm976, %v2087, 0
    %v2162 = vsel %vm976, %v2088, 0
    %v2165 = vsel %vm976, %v2089, 0
    %v2168 = vsel %vm976, %v2090, 0
    %v2171 = vsel %vm976, %v2091, 0
    %v2174 = vsel %vm976, %v2092, 0
    %v2177 = vsel %vm976, %v2093, 0
    %v2180 = vsel %vm976, %v2094, 0
    %v2183 = vsel %vm976, %v2095, 0
    %v2186 = vsel %vm976, %v2096, 0
    %v2189 = vsel %vm976, %v2097, 0
    %v2192 = vsel %vm976, %v2098, 0
    %v2195 = vsel %vm976, %v2099, 0
    %v2198 = vsel %vm976, %v2100, 0
    %v2201 = vsel %vm976, %v2101, 0
    %v2204 = vsel %vm976, %v2102, 0
    %v2207 = vsel %vm976, %v2103, 0
    %v2210 = vsel %vm976, %v2104, 0
    %v2213 = vsel %vm976, %v2105, 0
    %v2216 = vsel %vm976, %v2106, 0
    %v2219 = vsel %vm976, %v2107, 0
    %v2222 = vsel %vm976, %v2108, 0
    %v2225 = vsel %vm976, %v2109, 0
    %v2228 = vsel %vm976, %v2110, 0
    %v2231 = vsel %vm976, %v2111, 0
    %v2234 = vsel %vm976, %v2112, 0
    %2236 = vmatpush.bf16.msra.mxu0 0
    %2237 = vmatpush.bf16.msra.mxu0 0
    %2238 = vmatpush.bf16.msra.mxu0 0
    %2239 = vmatpush.bf16.msra.mxu0 0
    %2240 = vmatpush.bf16.msra.mxu0 0
    %2241 = vmatpush.bf16.msra.mxu0 %v2136
    %2242 = vmatpush.bf16.msra.mxu0 %v2135
    %2243 = vmatpush.bf16.msra.mxu0 %v2134
    %2244 = vmatmul.bf16.gmra.mxu0 %v2141
    %v2245 = vpop.f32.mrf.mxu0
    %v2246 = vadd.f32 %v2121, %v2245
    %v2247 = vpop.f32.mrf.mxu0
    %v2248 = vadd.f32 %v2121, %v2247
    %2249 = vmatmul.bf16.gmra.mxu0 %v2144
    %v2250 = vpop.f32.mrf.mxu0
    %v2251 = vadd.f32 %v2121, %v2250
    %v2252 = vpop.f32.mrf.mxu0
    %v2253 = vadd.f32 %v2121, %v2252
    %2254 = vmatmul.bf16.gmra.mxu0 %v2147
    %v2255 = vpop.f32.mrf.mxu0
    %v2256 = vadd.f32 %v2121, %v2255
    %v2257 = vpop.f32.mrf.mxu0
    %v2258 = vadd.f32 %v2121, %v2257
    %2259 = vmatmul.bf16.gmra.mxu0 %v2150
    %v2260 = vpop.f32.mrf.mxu0
    %v2261 = vadd.f32 %v2121, %v2260
    %v2262 = vpop.f32.mrf.mxu0
    %v2263 = vadd.f32 %v2121, %v2262
    %2264 = vmatmul.bf16.gmra.mxu0 %v2153
    %v2265 = vpop.f32.mrf.mxu0
    %v2266 = vadd.f32 %v2121, %v2265
    %v2267 = vpop.f32.mrf.mxu0
    %v2268 = vadd.f32 %v2121, %v2267
    %2269 = vmatmul.bf16.gmra.mxu0 %v2156
    %v2270 = vpop.f32.mrf.mxu0
    %v2271 = vadd.f32 %v2121, %v2270
    %v2272 = vpop.f32.mrf.mxu0
    %v2273 = vadd.f32 %v2121, %v2272
    %2274 = vmatmul.bf16.gmra.mxu0 %v2159
    %v2275 = vpop.f32.mrf.mxu0
    %v2276 = vadd.f32 %v2121, %v2275
    %v2277 = vpop.f32.mrf.mxu0
    %v2278 = vadd.f32 %v2121, %v2277
    %2279 = vmatmul.bf16.gmra.mxu0 %v2162
    %v2280 = vpop.f32.mrf.mxu0
    %v2281 = vadd.f32 %v2121, %v2280
    %v2282 = vpop.f32.mrf.mxu0
    %v2283 = vadd.f32 %v2121, %v2282
    %2284 = vmatmul.bf16.gmra.mxu0 %v2165
    %v2285 = vpop.f32.mrf.mxu0
    %v2286 = vadd.f32 %v2121, %v2285
    %v2287 = vpop.f32.mrf.mxu0
    %v2288 = vadd.f32 %v2121, %v2287
    %2289 = vmatmul.bf16.gmra.mxu0 %v2168
    %v2290 = vpop.f32.mrf.mxu0
    %v2291 = vadd.f32 %v2121, %v2290
    %v2292 = vpop.f32.mrf.mxu0
    %v2293 = vadd.f32 %v2121, %v2292
    %2294 = vmatmul.bf16.gmra.mxu0 %v2171
    %v2295 = vpop.f32.mrf.mxu0
    %v2296 = vadd.f32 %v2121, %v2295
    %v2297 = vpop.f32.mrf.mxu0
    %v2298 = vadd.f32 %v2121, %v2297
    %2299 = vmatmul.bf16.gmra.mxu0 %v2174
    %v2300 = vpop.f32.mrf.mxu0
    %v2301 = vadd.f32 %v2121, %v2300
    %v2302 = vpop.f32.mrf.mxu0
    %v2303 = vadd.f32 %v2121, %v2302
    %2304 = vmatmul.bf16.gmra.mxu0 %v2177
    %v2305 = vpop.f32.mrf.mxu0
    %v2306 = vadd.f32 %v2121, %v2305
    %v2307 = vpop.f32.mrf.mxu0
    %v2308 = vadd.f32 %v2121, %v2307
    %2309 = vmatmul.bf16.gmra.mxu0 %v2180
    %v2310 = vpop.f32.mrf.mxu0
    %v2311 = vadd.f32 %v2121, %v2310
    %v2312 = vpop.f32.mrf.mxu0
    %v2313 = vadd.f32 %v2121, %v2312
    %2314 = vmatmul.bf16.gmra.mxu0 %v2183
    %v2315 = vpop.f32.mrf.mxu0
    %v2316 = vadd.f32 %v2121, %v2315
    %v2317 = vpop.f32.mrf.mxu0
    %v2318 = vadd.f32 %v2121, %v2317
    %2319 = vmatmul.bf16.gmra.mxu0 %v2186
    %v2320 = vpop.f32.mrf.mxu0
    %v2321 = vadd.f32 %v2121, %v2320
    %v2322 = vpop.f32.mrf.mxu0
    %v2323 = vadd.f32 %v2121, %v2322
    %2324 = vmatmul.bf16.gmra.mxu0 %v2189
    %v2325 = vpop.f32.mrf.mxu0
    %v2326 = vadd.f32 %v2121, %v2325
    %v2327 = vpop.f32.mrf.mxu0
    %v2328 = vadd.f32 %v2121, %v2327
    %2329 = vmatmul.bf16.gmra.mxu0 %v2192
    %v2330 = vpop.f32.mrf.mxu0
    %v2331 = vadd.f32 %v2121, %v2330
    %v2332 = vpop.f32.mrf.mxu0
    %v2333 = vadd.f32 %v2121, %v2332
    %2334 = vmatmul.bf16.gmra.mxu0 %v2195
    %v2335 = vpop.f32.mrf.mxu0
    %v2336 = vadd.f32 %v2121, %v2335
    %v2337 = vpop.f32.mrf.mxu0
    %v2338 = vadd.f32 %v2121, %v2337
    %2339 = vmatmul.bf16.gmra.mxu0 %v2198
    %v2340 = vpop.f32.mrf.mxu0
    %v2341 = vadd.f32 %v2121, %v2340
    %v2342 = vpop.f32.mrf.mxu0
    %v2343 = vadd.f32 %v2121, %v2342
    %2344 = vmatmul.bf16.gmra.mxu0 %v2201
    %v2345 = vpop.f32.mrf.mxu0
    %v2346 = vadd.f32 %v2121, %v2345
    %v2347 = vpop.f32.mrf.mxu0
    %v2348 = vadd.f32 %v2121, %v2347
    %2349 = vmatmul.bf16.gmra.mxu0 %v2204
    %v2350 = vpop.f32.mrf.mxu0
    %v2351 = vadd.f32 %v2121, %v2350
    %v2352 = vpop.f32.mrf.mxu0
    %v2353 = vadd.f32 %v2121, %v2352
    %2354 = vmatmul.bf16.gmra.mxu0 %v2207
    %v2355 = vpop.f32.mrf.mxu0
    %v2356 = vadd.f32 %v2121, %v2355
    %v2357 = vpop.f32.mrf.mxu0
    %v2358 = vadd.f32 %v2121, %v2357
    %2359 = vmatmul.bf16.gmra.mxu0 %v2210
    %v2360 = vpop.f32.mrf.mxu0
    %v2361 = vadd.f32 %v2121, %v2360
    %v2362 = vpop.f32.mrf.mxu0
    %v2363 = vadd.f32 %v2121, %v2362
    %2364 = vmatmul.bf16.gmra.mxu0 %v2213
    %v2365 = vpop.f32.mrf.mxu0
    %v2366 = vadd.f32 %v2121, %v2365
    %v2367 = vpop.f32.mrf.mxu0
    %v2368 = vadd.f32 %v2121, %v2367
    %2369 = vmatmul.bf16.gmra.mxu0 %v2216
    %v2370 = vpop.f32.mrf.mxu0
    %v2371 = vadd.f32 %v2121, %v2370
    %v2372 = vpop.f32.mrf.mxu0
    %v2373 = vadd.f32 %v2121, %v2372
    %2374 = vmatmul.bf16.gmra.mxu0 %v2219
    %v2375 = vpop.f32.mrf.mxu0
    %v2376 = vadd.f32 %v2121, %v2375
    %v2377 = vpop.f32.mrf.mxu0
    %v2378 = vadd.f32 %v2121, %v2377
    %2379 = vmatmul.bf16.gmra.mxu0 %v2222
    %v2380 = vpop.f32.mrf.mxu0
    %v2381 = vadd.f32 %v2121, %v2380
    %v2382 = vpop.f32.mrf.mxu0
    %v2383 = vadd.f32 %v2121, %v2382
    %2384 = vmatmul.bf16.gmra.mxu0 %v2225
    %v2385 = vpop.f32.mrf.mxu0
    %v2386 = vadd.f32 %v2121, %v2385
    %v2387 = vpop.f32.mrf.mxu0
    %v2388 = vadd.f32 %v2121, %v2387
    %2389 = vmatmul.bf16.gmra.mxu0 %v2228
    %v2390 = vpop.f32.mrf.mxu0
    %v2391 = vadd.f32 %v2121, %v2390
    %v2392 = vpop.f32.mrf.mxu0
    %v2393 = vadd.f32 %v2121, %v2392
    %2394 = vmatmul.bf16.gmra.mxu0 %v2231
    %v2395 = vpop.f32.mrf.mxu0
    %v2396 = vadd.f32 %v2121, %v2395
    %v2397 = vpop.f32.mrf.mxu0
    %v2398 = vadd.f32 %v2121, %v2397
    %2399 = vmatmul.bf16.gmra.mxu0 %v2234
    %v2400 = vpop.f32.mrf.mxu0
    %v2401 = vadd.f32 %v2121, %v2400
    %v2402 = vpop.f32.mrf.mxu0
    %v2403 = vadd.f32 %v2121, %v2402
    %2404 = vdwg.mxu0
    %v2405 = vmax.f32 %v2246, 0.0
    %v2406 = vmax.f32 %v2248, 0.0
    %v2407 = vmax.f32 %v2251, 0.0
    %v2408 = vmax.f32 %v2253, 0.0
    %v2409 = vmax.f32 %v2256, 0.0
    %v2410 = vmax.f32 %v2258, 0.0
    %v2411 = vmax.f32 %v2261, 0.0
    %v2412 = vmax.f32 %v2263, 0.0
    %v2413 = vmax.f32 %v2266, 0.0
    %v2414 = vmax.f32 %v2268, 0.0
    %v2415 = vmax.f32 %v2271, 0.0
    %v2416 = vmax.f32 %v2273, 0.0
    %v2417 = vmax.f32 %v2276, 0.0
    %v2418 = vmax.f32 %v2278, 0.0
    %v2419 = vmax.f32 %v2281, 0.0
    %v2420 = vmax.f32 %v2283, 0.0
    %v2421 = vmax.f32 %v2286, 0.0
    %v2422 = vmax.f32 %v2288, 0.0
    %v2423 = vmax.f32 %v2291, 0.0
    %v2424 = vmax.f32 %v2293, 0.0
    %v2425 = vmax.f32 %v2296, 0.0
    %v2426 = vmax.f32 %v2298, 0.0
    %v2427 = vmax.f32 %v2301, 0.0
    %v2428 = vmax.f32 %v2303, 0.0
    %v2429 = vmax.f32 %v2306, 0.0
    %v2430 = vmax.f32 %v2308, 0.0
    %v2431 = vmax.f32 %v2311, 0.0
    %v2432 = vmax.f32 %v2313, 0.0
    %v2433 = vmax.f32 %v2316, 0.0
    %v2434 = vmax.f32 %v2318, 0.0
    %v2435 = vmax.f32 %v2321, 0.0
    %v2436 = vmax.f32 %v2323, 0.0
    %v2437 = vmax.f32 %v2326, 0.0
    %v2438 = vmax.f32 %v2328, 0.0
    %v2439 = vmax.f32 %v2331, 0.0
    %v2440 = vmax.f32 %v2333, 0.0
    %v2441 = vmax.f32 %v2336, 0.0
    %v2442 = vmax.f32 %v2338, 0.0
    %v2443 = vmax.f32 %v2341, 0.0
    %v2444 = vmax.f32 %v2343, 0.0
    %v2445 = vmax.f32 %v2346, 0.0
    %v2446 = vmax.f32 %v2348, 0.0
    %v2447 = vmax.f32 %v2351, 0.0
    %v2448 = vmax.f32 %v2353, 0.0
    %v2449 = vmax.f32 %v2356, 0.0
    %v2450 = vmax.f32 %v2358, 0.0
    %v2451 = vmax.f32 %v2361, 0.0
    %v2452 = vmax.f32 %v2363, 0.0
    %v2453 = vmax.f32 %v2366, 0.0
    %v2454 = vmax.f32 %v2368, 0.0
    %v2455 = vmax.f32 %v2371, 0.0
    %v2456 = vmax.f32 %v2373, 0.0
    %v2457 = vmax.f32 %v2376, 0.0
    %v2458 = vmax.f32 %v2378, 0.0
    %v2459 = vmax.f32 %v2381, 0.0
    %v2460 = vmax.f32 %v2383, 0.0
    %v2461 = vmax.f32 %v2386, 0.0
    %v2462 = vmax.f32 %v2388, 0.0
    %v2463 = vmax.f32 %v2391, 0.0
    %v2464 = vmax.f32 %v2393, 0.0
    %v2465 = vmax.f32 %v2396, 0.0
    %v2466 = vmax.f32 %v2398, 0.0
    %v2467 = vmax.f32 %v2401, 0.0
    %v2468 = vmax.f32 %v2403, 0.0
    %v2469 = vpack.c.bf16 %v2406, %v2405
    %v2470 = vpack.c.bf16 %v2408, %v2407
    %v2471 = vpack.c.bf16 %v2410, %v2409
    %v2472 = vpack.c.bf16 %v2412, %v2411
    %v2473 = vpack.c.bf16 %v2414, %v2413
    %v2474 = vpack.c.bf16 %v2416, %v2415
    %v2475 = vpack.c.bf16 %v2418, %v2417
    %v2476 = vpack.c.bf16 %v2420, %v2419
    %v2477 = vpack.c.bf16 %v2422, %v2421
    %v2478 = vpack.c.bf16 %v2424, %v2423
    %v2479 = vpack.c.bf16 %v2426, %v2425
    %v2480 = vpack.c.bf16 %v2428, %v2427
    %v2481 = vpack.c.bf16 %v2430, %v2429
    %v2482 = vpack.c.bf16 %v2432, %v2431
    %v2483 = vpack.c.bf16 %v2434, %v2433
    %v2484 = vpack.c.bf16 %v2436, %v2435
    %v2485 = vpack.c.bf16 %v2438, %v2437
    %v2486 = vpack.c.bf16 %v2440, %v2439
    %v2487 = vpack.c.bf16 %v2442, %v2441
    %v2488 = vpack.c.bf16 %v2444, %v2443
    %v2489 = vpack.c.bf16 %v2446, %v2445
    %v2490 = vpack.c.bf16 %v2448, %v2447
    %v2491 = vpack.c.bf16 %v2450, %v2449
    %v2492 = vpack.c.bf16 %v2452, %v2451
    %v2493 = vpack.c.bf16 %v2454, %v2453
    %v2494 = vpack.c.bf16 %v2456, %v2455
    %v2495 = vpack.c.bf16 %v2458, %v2457
    %v2496 = vpack.c.bf16 %v2460, %v2459
    %v2497 = vpack.c.bf16 %v2462, %v2461
    %v2498 = vpack.c.bf16 %v2464, %v2463
    %v2499 = vpack.c.bf16 %v2466, %v2465
    %v2500 = vpack.c.bf16 %v2468, %v2467
    %s2501 = scalar_lea.vmem %s3, 72
    %v2502 = vld [vmem:[%s2501] sm:$0xf]
    %v2503 = vld [vmem:[%s2501 + $0x4] sm:$0xf]
    %v2504 = vld [vmem:[%s2501 + $0x8] sm:$0xf]
    %v2505 = vld [vmem:[%s2501 + $0xc] sm:$0xf]
    %v2506 = vld [vmem:[%s2501 + $0x10] sm:$0xf]
    %v2507 = vld [vmem:[%s2501 + $0x14] sm:$0xf]
    %v2508 = vld [vmem:[%s4 + $0x3] sm:$0x1]
    %v2509 = vperm.slane %v2508, 0
    %v2516 = vunpack.c.l.b16 %v2502
    %v2517 = vunpack.c.l.b16 %v2503
    %v2518 = vunpack.c.l.b16 %v2504
    %v2519 = vunpack.c.l.b16 %v2505
    %v2520 = vunpack.c.l.b16 %v2506
    %v2521 = vunpack.c.l.b16 %v2507
    %v2522 = vpack.c.b16 %v2517, %v2516
    %v2523 = vpack.c.b16 %v2519, %v2518
    %v2524 = vpack.c.b16 %v2521, %v2520
    %v2529 = vsel %vm976, %v2469, 0
    %v2532 = vsel %vm976, %v2470, 0
    %v2535 = vsel %vm976, %v2471, 0
    %v2538 = vsel %vm976, %v2472, 0
    %v2541 = vsel %vm976, %v2473, 0
    %v2544 = vsel %vm976, %v2474, 0
    %v2547 = vsel %vm976, %v2475, 0
    %v2550 = vsel %vm976, %v2476, 0
    %v2553 = vsel %vm976, %v2477, 0
    %v2556 = vsel %vm976, %v2478, 0
    %v2559 = vsel %vm976, %v2479, 0
    %v2562 = vsel %vm976, %v2480, 0
    %v2565 = vsel %vm976, %v2481, 0
    %v2568 = vsel %vm976, %v2482, 0
    %v2571 = vsel %vm976, %v2483, 0
    %v2574 = vsel %vm976, %v2484, 0
    %v2577 = vsel %vm976, %v2485, 0
    %v2580 = vsel %vm976, %v2486, 0
    %v2583 = vsel %vm976, %v2487, 0
    %v2586 = vsel %vm976, %v2488, 0
    %v2589 = vsel %vm976, %v2489, 0
    %v2592 = vsel %vm976, %v2490, 0
    %v2595 = vsel %vm976, %v2491, 0
    %v2598 = vsel %vm976, %v2492, 0
    %v2601 = vsel %vm976, %v2493, 0
    %v2604 = vsel %vm976, %v2494, 0
    %v2607 = vsel %vm976, %v2495, 0
    %v2610 = vsel %vm976, %v2496, 0
    %v2613 = vsel %vm976, %v2497, 0
    %v2616 = vsel %vm976, %v2498, 0
    %v2619 = vsel %vm976, %v2499, 0
    %v2622 = vsel %vm976, %v2500, 0
    %2624 = vmatpush.bf16.msra.mxu0 0
    %2625 = vmatpush.bf16.msra.mxu0 0
    %2626 = vmatpush.bf16.msra.mxu0 0
    %2627 = vmatpush.bf16.msra.mxu0 0
    %2628 = vmatpush.bf16.msra.mxu0 0
    %2629 = vmatpush.bf16.msra.mxu0 %v2524
    %2630 = vmatpush.bf16.msra.mxu0 %v2523
    %2631 = vmatpush.bf16.msra.mxu0 %v2522
    %2632 = vmatmul.bf16.gmra.mxu0 %v2529
    %v2633 = vpop.f32.mrf.mxu0
    %v2634 = vadd.f32 %v2509, %v2633
    %v2635 = vpop.f32.mrf.mxu0
    %v2636 = vadd.f32 %v2509, %v2635
    %2637 = vmatmul.bf16.gmra.mxu0 %v2532
    %v2638 = vpop.f32.mrf.mxu0
    %v2639 = vadd.f32 %v2509, %v2638
    %v2640 = vpop.f32.mrf.mxu0
    %v2641 = vadd.f32 %v2509, %v2640
    %2642 = vmatmul.bf16.gmra.mxu0 %v2535
    %v2643 = vpop.f32.mrf.mxu0
    %v2644 = vadd.f32 %v2509, %v2643
    %v2645 = vpop.f32.mrf.mxu0
    %v2646 = vadd.f32 %v2509, %v2645
    %2647 = vmatmul.bf16.gmra.mxu0 %v2538
    %v2648 = vpop.f32.mrf.mxu0
    %v2649 = vadd.f32 %v2509, %v2648
    %v2650 = vpop.f32.mrf.mxu0
    %v2651 = vadd.f32 %v2509, %v2650
    %2652 = vmatmul.bf16.gmra.mxu0 %v2541
    %v2653 = vpop.f32.mrf.mxu0
    %v2654 = vadd.f32 %v2509, %v2653
    %v2655 = vpop.f32.mrf.mxu0
    %v2656 = vadd.f32 %v2509, %v2655
    %2657 = vmatmul.bf16.gmra.mxu0 %v2544
    %v2658 = vpop.f32.mrf.mxu0
    %v2659 = vadd.f32 %v2509, %v2658
    %v2660 = vpop.f32.mrf.mxu0
    %v2661 = vadd.f32 %v2509, %v2660
    %2662 = vmatmul.bf16.gmra.mxu0 %v2547
    %v2663 = vpop.f32.mrf.mxu0
    %v2664 = vadd.f32 %v2509, %v2663
    %v2665 = vpop.f32.mrf.mxu0
    %v2666 = vadd.f32 %v2509, %v2665
    %2667 = vmatmul.bf16.gmra.mxu0 %v2550
    %v2668 = vpop.f32.mrf.mxu0
    %v2669 = vadd.f32 %v2509, %v2668
    %v2670 = vpop.f32.mrf.mxu0
    %v2671 = vadd.f32 %v2509, %v2670
    %2672 = vmatmul.bf16.gmra.mxu0 %v2553
    %v2673 = vpop.f32.mrf.mxu0
    %v2674 = vadd.f32 %v2509, %v2673
    %v2675 = vpop.f32.mrf.mxu0
    %v2676 = vadd.f32 %v2509, %v2675
    %2677 = vmatmul.bf16.gmra.mxu0 %v2556
    %v2678 = vpop.f32.mrf.mxu0
    %v2679 = vadd.f32 %v2509, %v2678
    %v2680 = vpop.f32.mrf.mxu0
    %v2681 = vadd.f32 %v2509, %v2680
    %2682 = vmatmul.bf16.gmra.mxu0 %v2559
    %v2683 = vpop.f32.mrf.mxu0
    %v2684 = vadd.f32 %v2509, %v2683
    %v2685 = vpop.f32.mrf.mxu0
    %v2686 = vadd.f32 %v2509, %v2685
    %2687 = vmatmul.bf16.gmra.mxu0 %v2562
    %v2688 = vpop.f32.mrf.mxu0
    %v2689 = vadd.f32 %v2509, %v2688
    %v2690 = vpop.f32.mrf.mxu0
    %v2691 = vadd.f32 %v2509, %v2690
    %2692 = vmatmul.bf16.gmra.mxu0 %v2565
    %v2693 = vpop.f32.mrf.mxu0
    %v2694 = vadd.f32 %v2509, %v2693
    %v2695 = vpop.f32.mrf.mxu0
    %v2696 = vadd.f32 %v2509, %v2695
    %2697 = vmatmul.bf16.gmra.mxu0 %v2568
    %v2698 = vpop.f32.mrf.mxu0
    %v2699 = vadd.f32 %v2509, %v2698
    %v2700 = vpop.f32.mrf.mxu0
    %v2701 = vadd.f32 %v2509, %v2700
    %2702 = vmatmul.bf16.gmra.mxu0 %v2571
    %v2703 = vpop.f32.mrf.mxu0
    %v2704 = vadd.f32 %v2509, %v2703
    %v2705 = vpop.f32.mrf.mxu0
    %v2706 = vadd.f32 %v2509, %v2705
    %2707 = vmatmul.bf16.gmra.mxu0 %v2574
    %v2708 = vpop.f32.mrf.mxu0
    %v2709 = vadd.f32 %v2509, %v2708
    %v2710 = vpop.f32.mrf.mxu0
    %v2711 = vadd.f32 %v2509, %v2710
    %2712 = vmatmul.bf16.gmra.mxu0 %v2577
    %v2713 = vpop.f32.mrf.mxu0
    %v2714 = vadd.f32 %v2509, %v2713
    %v2715 = vpop.f32.mrf.mxu0
    %v2716 = vadd.f32 %v2509, %v2715
    %2717 = vmatmul.bf16.gmra.mxu0 %v2580
    %v2718 = vpop.f32.mrf.mxu0
    %v2719 = vadd.f32 %v2509, %v2718
    %v2720 = vpop.f32.mrf.mxu0
    %v2721 = vadd.f32 %v2509, %v2720
    %2722 = vmatmul.bf16.gmra.mxu0 %v2583
    %v2723 = vpop.f32.mrf.mxu0
    %v2724 = vadd.f32 %v2509, %v2723
    %v2725 = vpop.f32.mrf.mxu0
    %v2726 = vadd.f32 %v2509, %v2725
    %2727 = vmatmul.bf16.gmra.mxu0 %v2586
    %v2728 = vpop.f32.mrf.mxu0
    %v2729 = vadd.f32 %v2509, %v2728
    %v2730 = vpop.f32.mrf.mxu0
    %v2731 = vadd.f32 %v2509, %v2730
    %2732 = vmatmul.bf16.gmra.mxu0 %v2589
    %v2733 = vpop.f32.mrf.mxu0
    %v2734 = vadd.f32 %v2509, %v2733
    %v2735 = vpop.f32.mrf.mxu0
    %v2736 = vadd.f32 %v2509, %v2735
    %2737 = vmatmul.bf16.gmra.mxu0 %v2592
    %v2738 = vpop.f32.mrf.mxu0
    %v2739 = vadd.f32 %v2509, %v2738
    %v2740 = vpop.f32.mrf.mxu0
    %v2741 = vadd.f32 %v2509, %v2740
    %2742 = vmatmul.bf16.gmra.mxu0 %v2595
    %v2743 = vpop.f32.mrf.mxu0
    %v2744 = vadd.f32 %v2509, %v2743
    %v2745 = vpop.f32.mrf.mxu0
    %v2746 = vadd.f32 %v2509, %v2745
    %2747 = vmatmul.bf16.gmra.mxu0 %v2598
    %v2748 = vpop.f32.mrf.mxu0
    %v2749 = vadd.f32 %v2509, %v2748
    %v2750 = vpop.f32.mrf.mxu0
    %v2751 = vadd.f32 %v2509, %v2750
    %2752 = vmatmul.bf16.gmra.mxu0 %v2601
    %v2753 = vpop.f32.mrf.mxu0
    %v2754 = vadd.f32 %v2509, %v2753
    %v2755 = vpop.f32.mrf.mxu0
    %v2756 = vadd.f32 %v2509, %v2755
    %2757 = vmatmul.bf16.gmra.mxu0 %v2604
    %v2758 = vpop.f32.mrf.mxu0
    %v2759 = vadd.f32 %v2509, %v2758
    %v2760 = vpop.f32.mrf.mxu0
    %v2761 = vadd.f32 %v2509, %v2760
    %2762 = vmatmul.bf16.gmra.mxu0 %v2607
    %v2763 = vpop.f32.mrf.mxu0
    %v2764 = vadd.f32 %v2509, %v2763
    %v2765 = vpop.f32.mrf.mxu0
    %v2766 = vadd.f32 %v2509, %v2765
    %2767 = vmatmul.bf16.gmra.mxu0 %v2610
    %v2768 = vpop.f32.mrf.mxu0
    %v2769 = vadd.f32 %v2509, %v2768
    %v2770 = vpop.f32.mrf.mxu0
    %v2771 = vadd.f32 %v2509, %v2770
    %2772 = vmatmul.bf16.gmra.mxu0 %v2613
    %v2773 = vpop.f32.mrf.mxu0
    %v2774 = vadd.f32 %v2509, %v2773
    %v2775 = vpop.f32.mrf.mxu0
    %v2776 = vadd.f32 %v2509, %v2775
    %2777 = vmatmul.bf16.gmra.mxu0 %v2616
    %v2778 = vpop.f32.mrf.mxu0
    %v2779 = vadd.f32 %v2509, %v2778
    %v2780 = vpop.f32.mrf.mxu0
    %v2781 = vadd.f32 %v2509, %v2780
    %2782 = vmatmul.bf16.gmra.mxu0 %v2619
    %v2783 = vpop.f32.mrf.mxu0
    %v2784 = vadd.f32 %v2509, %v2783
    %v2785 = vpop.f32.mrf.mxu0
    %v2786 = vadd.f32 %v2509, %v2785
    %2787 = vmatmul.bf16.gmra.mxu0 %v2622
    %v2788 = vpop.f32.mrf.mxu0
    %v2789 = vadd.f32 %v2509, %v2788
    %v2790 = vpop.f32.mrf.mxu0
    %v2791 = vadd.f32 %v2509, %v2790
    %2792 = vdwg.mxu0
    %v2793 = vadd.f32 %v2634, %v2017
    %v2794 = vadd.f32 %v2636, %v2018
    %v2795 = vadd.f32 %v2639, %v2019
    %v2796 = vadd.f32 %v2641, %v2020
    %v2797 = vadd.f32 %v2644, %v2021
    %v2798 = vadd.f32 %v2646, %v2022
    %v2799 = vadd.f32 %v2649, %v2023
    %v2800 = vadd.f32 %v2651, %v2024
    %v2801 = vadd.f32 %v2654, %v2025
    %v2802 = vadd.f32 %v2656, %v2026
    %v2803 = vadd.f32 %v2659, %v2027
    %v2804 = vadd.f32 %v2661, %v2028
    %v2805 = vadd.f32 %v2664, %v2029
    %v2806 = vadd.f32 %v2666, %v2030
    %v2807 = vadd.f32 %v2669, %v2031
    %v2808 = vadd.f32 %v2671, %v2032
    %v2809 = vadd.f32 %v2674, %v2033
    %v2810 = vadd.f32 %v2676, %v2034
    %v2811 = vadd.f32 %v2679, %v2035
    %v2812 = vadd.f32 %v2681, %v2036
    %v2813 = vadd.f32 %v2684, %v2037
    %v2814 = vadd.f32 %v2686, %v2038
    %v2815 = vadd.f32 %v2689, %v2039
    %v2816 = vadd.f32 %v2691, %v2040
    %v2817 = vadd.f32 %v2694, %v2041
    %v2818 = vadd.f32 %v2696, %v2042
    %v2819 = vadd.f32 %v2699, %v2043
    %v2820 = vadd.f32 %v2701, %v2044
    %v2821 = vadd.f32 %v2704, %v2045
    %v2822 = vadd.f32 %v2706, %v2046
    %v2823 = vadd.f32 %v2709, %v2047
    %v2824 = vadd.f32 %v2711, %v2048
    %v2825 = vadd.f32 %v2714, %v2049
    %v2826 = vadd.f32 %v2716, %v2050
    %v2827 = vadd.f32 %v2719, %v2051
    %v2828 = vadd.f32 %v2721, %v2052
    %v2829 = vadd.f32 %v2724, %v2053
    %v2830 = vadd.f32 %v2726, %v2054
    %v2831 = vadd.f32 %v2729, %v2055
    %v2832 = vadd.f32 %v2731, %v2056
    %v2833 = vadd.f32 %v2734, %v2057
    %v2834 = vadd.f32 %v2736, %v2058
    %v2835 = vadd.f32 %v2739, %v2059
    %v2836 = vadd.f32 %v2741, %v2060
    %v2837 = vadd.f32 %v2744, %v2061
    %v2838 = vadd.f32 %v2746, %v2062
    %v2839 = vadd.f32 %v2749, %v2063
    %v2840 = vadd.f32 %v2751, %v2064
    %v2841 = vadd.f32 %v2754, %v2065
    %v2842 = vadd.f32 %v2756, %v2066
    %v2843 = vadd.f32 %v2759, %v2067
    %v2844 = vadd.f32 %v2761, %v2068
    %v2845 = vadd.f32 %v2764, %v2069
    %v2846 = vadd.f32 %v2766, %v2070
    %v2847 = vadd.f32 %v2769, %v2071
    %v2848 = vadd.f32 %v2771, %v2072
    %v2849 = vadd.f32 %v2774, %v2073
    %v2850 = vadd.f32 %v2776, %v2074
    %v2851 = vadd.f32 %v2779, %v2075
    %v2852 = vadd.f32 %v2781, %v2076
    %v2853 = vadd.f32 %v2784, %v2077
    %v2854 = vadd.f32 %v2786, %v2078
    %v2855 = vadd.f32 %v2789, %v2079
    %v2856 = vadd.f32 %v2791, %v2080
    %v2857 = vmax.f32 %v2793, 0.0
    %v2858 = vmax.f32 %v2794, 0.0
    %v2859 = vmax.f32 %v2795, 0.0
    %v2860 = vmax.f32 %v2796, 0.0
    %v2861 = vmax.f32 %v2797, 0.0
    %v2862 = vmax.f32 %v2798, 0.0
    %v2863 = vmax.f32 %v2799, 0.0
    %v2864 = vmax.f32 %v2800, 0.0
    %v2865 = vmax.f32 %v2801, 0.0
    %v2866 = vmax.f32 %v2802, 0.0
    %v2867 = vmax.f32 %v2803, 0.0
    %v2868 = vmax.f32 %v2804, 0.0
    %v2869 = vmax.f32 %v2805, 0.0
    %v2870 = vmax.f32 %v2806, 0.0
    %v2871 = vmax.f32 %v2807, 0.0
    %v2872 = vmax.f32 %v2808, 0.0
    %v2873 = vmax.f32 %v2809, 0.0
    %v2874 = vmax.f32 %v2810, 0.0
    %v2875 = vmax.f32 %v2811, 0.0
    %v2876 = vmax.f32 %v2812, 0.0
    %v2877 = vmax.f32 %v2813, 0.0
    %v2878 = vmax.f32 %v2814, 0.0
    %v2879 = vmax.f32 %v2815, 0.0
    %v2880 = vmax.f32 %v2816, 0.0
    %v2881 = vmax.f32 %v2817, 0.0
    %v2882 = vmax.f32 %v2818, 0.0
    %v2883 = vmax.f32 %v2819, 0.0
    %v2884 = vmax.f32 %v2820, 0.0
    %v2885 = vmax.f32 %v2821, 0.0
    %v2886 = vmax.f32 %v2822, 0.0
    %v2887 = vmax.f32 %v2823, 0.0
    %v2888 = vmax.f32 %v2824, 0.0
    %v2889 = vmax.f32 %v2825, 0.0
    %v2890 = vmax.f32 %v2826, 0.0
    %v2891 = vmax.f32 %v2827, 0.0
    %v2892 = vmax.f32 %v2828, 0.0
    %v2893 = vmax.f32 %v2829, 0.0
    %v2894 = vmax.f32 %v2830, 0.0
    %v2895 = vmax.f32 %v2831, 0.0
    %v2896 = vmax.f32 %v2832, 0.0
    %v2897 = vmax.f32 %v2833, 0.0
    %v2898 = vmax.f32 %v2834, 0.0
    %v2899 = vmax.f32 %v2835, 0.0
    %v2900 = vmax.f32 %v2836, 0.0
    %v2901 = vmax.f32 %v2837, 0.0
    %v2902 = vmax.f32 %v2838, 0.0
    %v2903 = vmax.f32 %v2839, 0.0
    %v2904 = vmax.f32 %v2840, 0.0
    %v2905 = vmax.f32 %v2841, 0.0
    %v2906 = vmax.f32 %v2842, 0.0
    %v2907 = vmax.f32 %v2843, 0.0
    %v2908 = vmax.f32 %v2844, 0.0
    %v2909 = vmax.f32 %v2845, 0.0
    %v2910 = vmax.f32 %v2846, 0.0
    %v2911 = vmax.f32 %v2847, 0.0
    %v2912 = vmax.f32 %v2848, 0.0
    %v2913 = vmax.f32 %v2849, 0.0
    %v2914 = vmax.f32 %v2850, 0.0
    %v2915 = vmax.f32 %v2851, 0.0
    %v2916 = vmax.f32 %v2852, 0.0
    %v2917 = vmax.f32 %v2853, 0.0
    %v2918 = vmax.f32 %v2854, 0.0
    %v2919 = vmax.f32 %v2855, 0.0
    %v2920 = vmax.f32 %v2856, 0.0
    %v2921 = vpack.c.bf16 %v2858, %v2857
    %v2922 = vpack.c.bf16 %v2860, %v2859
    %v2923 = vpack.c.bf16 %v2862, %v2861
    %v2924 = vpack.c.bf16 %v2864, %v2863
    %v2925 = vpack.c.bf16 %v2866, %v2865
    %v2926 = vpack.c.bf16 %v2868, %v2867
    %v2927 = vpack.c.bf16 %v2870, %v2869
    %v2928 = vpack.c.bf16 %v2872, %v2871
    %v2929 = vpack.c.bf16 %v2874, %v2873
    %v2930 = vpack.c.bf16 %v2876, %v2875
    %v2931 = vpack.c.bf16 %v2878, %v2877
    %v2932 = vpack.c.bf16 %v2880, %v2879
    %v2933 = vpack.c.bf16 %v2882, %v2881
    %v2934 = vpack.c.bf16 %v2884, %v2883
    %v2935 = vpack.c.bf16 %v2886, %v2885
    %v2936 = vpack.c.bf16 %v2888, %v2887
    %v2937 = vpack.c.bf16 %v2890, %v2889
    %v2938 = vpack.c.bf16 %v2892, %v2891
    %v2939 = vpack.c.bf16 %v2894, %v2893
    %v2940 = vpack.c.bf16 %v2896, %v2895
    %v2941 = vpack.c.bf16 %v2898, %v2897
    %v2942 = vpack.c.bf16 %v2900, %v2899
    %v2943 = vpack.c.bf16 %v2902, %v2901
    %v2944 = vpack.c.bf16 %v2904, %v2903
    %v2945 = vpack.c.bf16 %v2906, %v2905
    %v2946 = vpack.c.bf16 %v2908, %v2907
    %v2947 = vpack.c.bf16 %v2910, %v2909
    %v2948 = vpack.c.bf16 %v2912, %v2911
    %v2949 = vpack.c.bf16 %v2914, %v2913
    %v2950 = vpack.c.bf16 %v2916, %v2915
    %v2951 = vpack.c.bf16 %v2918, %v2917
    %v2952 = vpack.c.bf16 %v2920, %v2919
    %s2953 = scalar_lea.vmem %s3, 96
    %v2954 = vld [vmem:[%s2953] sm:$0xf]
    %v2955 = vld [vmem:[%s2953 + $0x4] sm:$0xf]
    %v2956 = vld [vmem:[%s2953 + $0x8] sm:$0xf]
    %v2957 = vld [vmem:[%s2953 + $0xc] sm:$0xf]
    %v2958 = vld [vmem:[%s2953 + $0x10] sm:$0xf]
    %v2959 = vld [vmem:[%s2953 + $0x14] sm:$0xf]
    %v2960 = vld [vmem:[%s4 + $0x4] sm:$0x1]
    %v2961 = vperm.slane %v2960, 0
    %v2968 = vunpack.c.l.b16 %v2954
    %v2969 = vunpack.c.l.b16 %v2955
    %v2970 = vunpack.c.l.b16 %v2956
    %v2971 = vunpack.c.l.b16 %v2957
    %v2972 = vunpack.c.l.b16 %v2958
    %v2973 = vunpack.c.l.b16 %v2959
    %v2974 = vpack.c.b16 %v2969, %v2968
    %v2975 = vpack.c.b16 %v2971, %v2970
    %v2976 = vpack.c.b16 %v2973, %v2972
    %v2981 = vsel %vm976, %v2921, 0
    %v2984 = vsel %vm976, %v2922, 0
    %v2987 = vsel %vm976, %v2923, 0
    %v2990 = vsel %vm976, %v2924, 0
    %v2993 = vsel %vm976, %v2925, 0
    %v2996 = vsel %vm976, %v2926, 0
    %v2999 = vsel %vm976, %v2927, 0
    %v3002 = vsel %vm976, %v2928, 0
    %v3005 = vsel %vm976, %v2929, 0
    %v3008 = vsel %vm976, %v2930, 0
    %v3011 = vsel %vm976, %v2931, 0
    %v3014 = vsel %vm976, %v2932, 0
    %v3017 = vsel %vm976, %v2933, 0
    %v3020 = vsel %vm976, %v2934, 0
    %v3023 = vsel %vm976, %v2935, 0
    %v3026 = vsel %vm976, %v2936, 0
    %v3029 = vsel %vm976, %v2937, 0
    %v3032 = vsel %vm976, %v2938, 0
    %v3035 = vsel %vm976, %v2939, 0
    %v3038 = vsel %vm976, %v2940, 0
    %v3041 = vsel %vm976, %v2941, 0
    %v3044 = vsel %vm976, %v2942, 0
    %v3047 = vsel %vm976, %v2943, 0
    %v3050 = vsel %vm976, %v2944, 0
    %v3053 = vsel %vm976, %v2945, 0
    %v3056 = vsel %vm976, %v2946, 0
    %v3059 = vsel %vm976, %v2947, 0
    %v3062 = vsel %vm976, %v2948, 0
    %v3065 = vsel %vm976, %v2949, 0
    %v3068 = vsel %vm976, %v2950, 0
    %v3071 = vsel %vm976, %v2951, 0
    %v3074 = vsel %vm976, %v2952, 0
    %3076 = vmatpush.bf16.msra.mxu0 0
    %3077 = vmatpush.bf16.msra.mxu0 0
    %3078 = vmatpush.bf16.msra.mxu0 0
    %3079 = vmatpush.bf16.msra.mxu0 0
    %3080 = vmatpush.bf16.msra.mxu0 0
    %3081 = vmatpush.bf16.msra.mxu0 %v2976
    %3082 = vmatpush.bf16.msra.mxu0 %v2975
    %3083 = vmatpush.bf16.msra.mxu0 %v2974
    %3084 = vmatmul.bf16.gmra.mxu0 %v2981
    %v3085 = vpop.f32.mrf.mxu0
    %v3086 = vadd.f32 %v2961, %v3085
    %v3087 = vpop.f32.mrf.mxu0
    %v3088 = vadd.f32 %v2961, %v3087
    %3089 = vmatmul.bf16.gmra.mxu0 %v2984
    %v3090 = vpop.f32.mrf.mxu0
    %v3091 = vadd.f32 %v2961, %v3090
    %v3092 = vpop.f32.mrf.mxu0
    %v3093 = vadd.f32 %v2961, %v3092
    %3094 = vmatmul.bf16.gmra.mxu0 %v2987
    %v3095 = vpop.f32.mrf.mxu0
    %v3096 = vadd.f32 %v2961, %v3095
    %v3097 = vpop.f32.mrf.mxu0
    %v3098 = vadd.f32 %v2961, %v3097
    %3099 = vmatmul.bf16.gmra.mxu0 %v2990
    %v3100 = vpop.f32.mrf.mxu0
    %v3101 = vadd.f32 %v2961, %v3100
    %v3102 = vpop.f32.mrf.mxu0
    %v3103 = vadd.f32 %v2961, %v3102
    %3104 = vmatmul.bf16.gmra.mxu0 %v2993
    %v3105 = vpop.f32.mrf.mxu0
    %v3106 = vadd.f32 %v2961, %v3105
    %v3107 = vpop.f32.mrf.mxu0
    %v3108 = vadd.f32 %v2961, %v3107
    %3109 = vmatmul.bf16.gmra.mxu0 %v2996
    %v3110 = vpop.f32.mrf.mxu0
    %v3111 = vadd.f32 %v2961, %v3110
    %v3112 = vpop.f32.mrf.mxu0
    %v3113 = vadd.f32 %v2961, %v3112
    %3114 = vmatmul.bf16.gmra.mxu0 %v2999
    %v3115 = vpop.f32.mrf.mxu0
    %v3116 = vadd.f32 %v2961, %v3115
    %v3117 = vpop.f32.mrf.mxu0
    %v3118 = vadd.f32 %v2961, %v3117
    %3119 = vmatmul.bf16.gmra.mxu0 %v3002
    %v3120 = vpop.f32.mrf.mxu0
    %v3121 = vadd.f32 %v2961, %v3120
    %v3122 = vpop.f32.mrf.mxu0
    %v3123 = vadd.f32 %v2961, %v3122
    %3124 = vmatmul.bf16.gmra.mxu0 %v3005
    %v3125 = vpop.f32.mrf.mxu0
    %v3126 = vadd.f32 %v2961, %v3125
    %v3127 = vpop.f32.mrf.mxu0
    %v3128 = vadd.f32 %v2961, %v3127
    %3129 = vmatmul.bf16.gmra.mxu0 %v3008
    %v3130 = vpop.f32.mrf.mxu0
    %v3131 = vadd.f32 %v2961, %v3130
    %v3132 = vpop.f32.mrf.mxu0
    %v3133 = vadd.f32 %v2961, %v3132
    %3134 = vmatmul.bf16.gmra.mxu0 %v3011
    %v3135 = vpop.f32.mrf.mxu0
    %v3136 = vadd.f32 %v2961, %v3135
    %v3137 = vpop.f32.mrf.mxu0
    %v3138 = vadd.f32 %v2961, %v3137
    %3139 = vmatmul.bf16.gmra.mxu0 %v3014
    %v3140 = vpop.f32.mrf.mxu0
    %v3141 = vadd.f32 %v2961, %v3140
    %v3142 = vpop.f32.mrf.mxu0
    %v3143 = vadd.f32 %v2961, %v3142
    %3144 = vmatmul.bf16.gmra.mxu0 %v3017
    %v3145 = vpop.f32.mrf.mxu0
    %v3146 = vadd.f32 %v2961, %v3145
    %v3147 = vpop.f32.mrf.mxu0
    %v3148 = vadd.f32 %v2961, %v3147
    %3149 = vmatmul.bf16.gmra.mxu0 %v3020
    %v3150 = vpop.f32.mrf.mxu0
    %v3151 = vadd.f32 %v2961, %v3150
    %v3152 = vpop.f32.mrf.mxu0
    %v3153 = vadd.f32 %v2961, %v3152
    %3154 = vmatmul.bf16.gmra.mxu0 %v3023
    %v3155 = vpop.f32.mrf.mxu0
    %v3156 = vadd.f32 %v2961, %v3155
    %v3157 = vpop.f32.mrf.mxu0
    %v3158 = vadd.f32 %v2961, %v3157
    %3159 = vmatmul.bf16.gmra.mxu0 %v3026
    %v3160 = vpop.f32.mrf.mxu0
    %v3161 = vadd.f32 %v2961, %v3160
    %v3162 = vpop.f32.mrf.mxu0
    %v3163 = vadd.f32 %v2961, %v3162
    %3164 = vmatmul.bf16.gmra.mxu0 %v3029
    %v3165 = vpop.f32.mrf.mxu0
    %v3166 = vadd.f32 %v2961, %v3165
    %v3167 = vpop.f32.mrf.mxu0
    %v3168 = vadd.f32 %v2961, %v3167
    %3169 = vmatmul.bf16.gmra.mxu0 %v3032
    %v3170 = vpop.f32.mrf.mxu0
    %v3171 = vadd.f32 %v2961, %v3170
    %v3172 = vpop.f32.mrf.mxu0
    %v3173 = vadd.f32 %v2961, %v3172
    %3174 = vmatmul.bf16.gmra.mxu0 %v3035
    %v3175 = vpop.f32.mrf.mxu0
    %v3176 = vadd.f32 %v2961, %v3175
    %v3177 = vpop.f32.mrf.mxu0
    %v3178 = vadd.f32 %v2961, %v3177
    %3179 = vmatmul.bf16.gmra.mxu0 %v3038
    %v3180 = vpop.f32.mrf.mxu0
    %v3181 = vadd.f32 %v2961, %v3180
    %v3182 = vpop.f32.mrf.mxu0
    %v3183 = vadd.f32 %v2961, %v3182
    %3184 = vmatmul.bf16.gmra.mxu0 %v3041
    %v3185 = vpop.f32.mrf.mxu0
    %v3186 = vadd.f32 %v2961, %v3185
    %v3187 = vpop.f32.mrf.mxu0
    %v3188 = vadd.f32 %v2961, %v3187
    %3189 = vmatmul.bf16.gmra.mxu0 %v3044
    %v3190 = vpop.f32.mrf.mxu0
    %v3191 = vadd.f32 %v2961, %v3190
    %v3192 = vpop.f32.mrf.mxu0
    %v3193 = vadd.f32 %v2961, %v3192
    %3194 = vmatmul.bf16.gmra.mxu0 %v3047
    %v3195 = vpop.f32.mrf.mxu0
    %v3196 = vadd.f32 %v2961, %v3195
    %v3197 = vpop.f32.mrf.mxu0
    %v3198 = vadd.f32 %v2961, %v3197
    %3199 = vmatmul.bf16.gmra.mxu0 %v3050
    %v3200 = vpop.f32.mrf.mxu0
    %v3201 = vadd.f32 %v2961, %v3200
    %v3202 = vpop.f32.mrf.mxu0
    %v3203 = vadd.f32 %v2961, %v3202
    %3204 = vmatmul.bf16.gmra.mxu0 %v3053
    %v3205 = vpop.f32.mrf.mxu0
    %v3206 = vadd.f32 %v2961, %v3205
    %v3207 = vpop.f32.mrf.mxu0
    %v3208 = vadd.f32 %v2961, %v3207
    %3209 = vmatmul.bf16.gmra.mxu0 %v3056
    %v3210 = vpop.f32.mrf.mxu0
    %v3211 = vadd.f32 %v2961, %v3210
    %v3212 = vpop.f32.mrf.mxu0
    %v3213 = vadd.f32 %v2961, %v3212
    %3214 = vmatmul.bf16.gmra.mxu0 %v3059
    %v3215 = vpop.f32.mrf.mxu0
    %v3216 = vadd.f32 %v2961, %v3215
    %v3217 = vpop.f32.mrf.mxu0
    %v3218 = vadd.f32 %v2961, %v3217
    %3219 = vmatmul.bf16.gmra.mxu0 %v3062
    %v3220 = vpop.f32.mrf.mxu0
    %v3221 = vadd.f32 %v2961, %v3220
    %v3222 = vpop.f32.mrf.mxu0
    %v3223 = vadd.f32 %v2961, %v3222
    %3224 = vmatmul.bf16.gmra.mxu0 %v3065
    %v3225 = vpop.f32.mrf.mxu0
    %v3226 = vadd.f32 %v2961, %v3225
    %v3227 = vpop.f32.mrf.mxu0
    %v3228 = vadd.f32 %v2961, %v3227
    %3229 = vmatmul.bf16.gmra.mxu0 %v3068
    %v3230 = vpop.f32.mrf.mxu0
    %v3231 = vadd.f32 %v2961, %v3230
    %v3232 = vpop.f32.mrf.mxu0
    %v3233 = vadd.f32 %v2961, %v3232
    %3234 = vmatmul.bf16.gmra.mxu0 %v3071
    %v3235 = vpop.f32.mrf.mxu0
    %v3236 = vadd.f32 %v2961, %v3235
    %v3237 = vpop.f32.mrf.mxu0
    %v3238 = vadd.f32 %v2961, %v3237
    %3239 = vmatmul.bf16.gmra.mxu0 %v3074
    %v3240 = vpop.f32.mrf.mxu0
    %v3241 = vadd.f32 %v2961, %v3240
    %v3242 = vpop.f32.mrf.mxu0
    %v3243 = vadd.f32 %v2961, %v3242
    %3244 = vdwg.mxu0
    %v3245 = vpack.c.bf16 %v3088, %v3086
    %v3246 = vpack.c.bf16 %v3093, %v3091
    %v3247 = vpack.c.bf16 %v3098, %v3096
    %v3248 = vpack.c.bf16 %v3103, %v3101
    %v3249 = vpack.c.bf16 %v3108, %v3106
    %v3250 = vpack.c.bf16 %v3113, %v3111
    %v3251 = vpack.c.bf16 %v3118, %v3116
    %v3252 = vpack.c.bf16 %v3123, %v3121
    %v3253 = vpack.c.bf16 %v3128, %v3126
    %v3254 = vpack.c.bf16 %v3133, %v3131
    %v3255 = vpack.c.bf16 %v3138, %v3136
    %v3256 = vpack.c.bf16 %v3143, %v3141
    %v3257 = vpack.c.bf16 %v3148, %v3146
    %v3258 = vpack.c.bf16 %v3153, %v3151
    %v3259 = vpack.c.bf16 %v3158, %v3156
    %v3260 = vpack.c.bf16 %v3163, %v3161
    %v3261 = vpack.c.bf16 %v3168, %v3166
    %v3262 = vpack.c.bf16 %v3173, %v3171
    %v3263 = vpack.c.bf16 %v3178, %v3176
    %v3264 = vpack.c.bf16 %v3183, %v3181
    %v3265 = vpack.c.bf16 %v3188, %v3186
    %v3266 = vpack.c.bf16 %v3193, %v3191
    %v3267 = vpack.c.bf16 %v3198, %v3196
    %v3268 = vpack.c.bf16 %v3203, %v3201
    %v3269 = vpack.c.bf16 %v3208, %v3206
    %v3270 = vpack.c.bf16 %v3213, %v3211
    %v3271 = vpack.c.bf16 %v3218, %v3216
    %v3272 = vpack.c.bf16 %v3223, %v3221
    %v3273 = vpack.c.bf16 %v3228, %v3226
    %v3274 = vpack.c.bf16 %v3233, %v3231
    %v3275 = vpack.c.bf16 %v3238, %v3236
    %v3276 = vpack.c.bf16 %v3243, %v3241
    %s3277 = scalar_lea.vmem %s3, 120
    %v3278 = vld [vmem:[%s3277] sm:$0xf]
    %v3279 = vld [vmem:[%s3277 + $0x4] sm:$0xf]
    %v3280 = vld [vmem:[%s3277 + $0x8] sm:$0xf]
    %v3281 = vld [vmem:[%s3277 + $0xc] sm:$0xf]
    %v3282 = vld [vmem:[%s3277 + $0x10] sm:$0xf]
    %v3283 = vld [vmem:[%s3277 + $0x14] sm:$0xf]
    %v3284 = vld [vmem:[%s4 + $0x5] sm:$0x1]
    %v3285 = vperm.slane %v3284, 0
    %v3292 = vunpack.c.l.b16 %v3278
    %v3293 = vunpack.c.l.b16 %v3279
    %v3294 = vunpack.c.l.b16 %v3280
    %v3295 = vunpack.c.l.b16 %v3281
    %v3296 = vunpack.c.l.b16 %v3282
    %v3297 = vunpack.c.l.b16 %v3283
    %v3298 = vpack.c.b16 %v3293, %v3292
    %v3299 = vpack.c.b16 %v3295, %v3294
    %v3300 = vpack.c.b16 %v3297, %v3296
    %v3305 = vsel %vm976, %v3245, 0
    %v3308 = vsel %vm976, %v3246, 0
    %v3311 = vsel %vm976, %v3247, 0
    %v3314 = vsel %vm976, %v3248, 0
    %v3317 = vsel %vm976, %v3249, 0
    %v3320 = vsel %vm976, %v3250, 0
    %v3323 = vsel %vm976, %v3251, 0
    %v3326 = vsel %vm976, %v3252, 0
    %v3329 = vsel %vm976, %v3253, 0
    %v3332 = vsel %vm976, %v3254, 0
    %v3335 = vsel %vm976, %v3255, 0
    %v3338 = vsel %vm976, %v3256, 0
    %v3341 = vsel %vm976, %v3257, 0
    %v3344 = vsel %vm976, %v3258, 0
    %v3347 = vsel %vm976, %v3259, 0
    %v3350 = vsel %vm976, %v3260, 0
    %v3353 = vsel %vm976, %v3261, 0
    %v3356 = vsel %vm976, %v3262, 0
    %v3359 = vsel %vm976, %v3263, 0
    %v3362 = vsel %vm976, %v3264, 0
    %v3365 = vsel %vm976, %v3265, 0
    %v3368 = vsel %vm976, %v3266, 0
    %v3371 = vsel %vm976, %v3267, 0
    %v3374 = vsel %vm976, %v3268, 0
    %v3377 = vsel %vm976, %v3269, 0
    %v3380 = vsel %vm976, %v3270, 0
    %v3383 = vsel %vm976, %v3271, 0
    %v3386 = vsel %vm976, %v3272, 0
    %v3389 = vsel %vm976, %v3273, 0
    %v3392 = vsel %vm976, %v3274, 0
    %v3395 = vsel %vm976, %v3275, 0
    %v3398 = vsel %vm976, %v3276, 0
    %3400 = vmatpush.bf16.msra.mxu0 0
    %3401 = vmatpush.bf16.msra.mxu0 0
    %3402 = vmatpush.bf16.msra.mxu0 0
    %3403 = vmatpush.bf16.msra.mxu0 0
    %3404 = vmatpush.bf16.msra.mxu0 0
    %3405 = vmatpush.bf16.msra.mxu0 %v3300
    %3406 = vmatpush.bf16.msra.mxu0 %v3299
    %3407 = vmatpush.bf16.msra.mxu0 %v3298
    %3408 = vmatmul.bf16.gmra.mxu0 %v3305
    %v3409 = vpop.f32.mrf.mxu0
    %v3410 = vadd.f32 %v3285, %v3409
    %v3411 = vpop.f32.mrf.mxu0
    %v3412 = vadd.f32 %v3285, %v3411
    %3413 = vmatmul.bf16.gmra.mxu0 %v3308
    %v3414 = vpop.f32.mrf.mxu0
    %v3415 = vadd.f32 %v3285, %v3414
    %v3416 = vpop.f32.mrf.mxu0
    %v3417 = vadd.f32 %v3285, %v3416
    %3418 = vmatmul.bf16.gmra.mxu0 %v3311
    %v3419 = vpop.f32.mrf.mxu0
    %v3420 = vadd.f32 %v3285, %v3419
    %v3421 = vpop.f32.mrf.mxu0
    %v3422 = vadd.f32 %v3285, %v3421
    %3423 = vmatmul.bf16.gmra.mxu0 %v3314
    %v3424 = vpop.f32.mrf.mxu0
    %v3425 = vadd.f32 %v3285, %v3424
    %v3426 = vpop.f32.mrf.mxu0
    %v3427 = vadd.f32 %v3285, %v3426
    %3428 = vmatmul.bf16.gmra.mxu0 %v3317
    %v3429 = vpop.f32.mrf.mxu0
    %v3430 = vadd.f32 %v3285, %v3429
    %v3431 = vpop.f32.mrf.mxu0
    %v3432 = vadd.f32 %v3285, %v3431
    %3433 = vmatmul.bf16.gmra.mxu0 %v3320
    %v3434 = vpop.f32.mrf.mxu0
    %v3435 = vadd.f32 %v3285, %v3434
    %v3436 = vpop.f32.mrf.mxu0
    %v3437 = vadd.f32 %v3285, %v3436
    %3438 = vmatmul.bf16.gmra.mxu0 %v3323
    %v3439 = vpop.f32.mrf.mxu0
    %v3440 = vadd.f32 %v3285, %v3439
    %v3441 = vpop.f32.mrf.mxu0
    %v3442 = vadd.f32 %v3285, %v3441
    %3443 = vmatmul.bf16.gmra.mxu0 %v3326
    %v3444 = vpop.f32.mrf.mxu0
    %v3445 = vadd.f32 %v3285, %v3444
    %v3446 = vpop.f32.mrf.mxu0
    %v3447 = vadd.f32 %v3285, %v3446
    %3448 = vmatmul.bf16.gmra.mxu0 %v3329
    %v3449 = vpop.f32.mrf.mxu0
    %v3450 = vadd.f32 %v3285, %v3449
    %v3451 = vpop.f32.mrf.mxu0
    %v3452 = vadd.f32 %v3285, %v3451
    %3453 = vmatmul.bf16.gmra.mxu0 %v3332
    %v3454 = vpop.f32.mrf.mxu0
    %v3455 = vadd.f32 %v3285, %v3454
    %v3456 = vpop.f32.mrf.mxu0
    %v3457 = vadd.f32 %v3285, %v3456
    %3458 = vmatmul.bf16.gmra.mxu0 %v3335
    %v3459 = vpop.f32.mrf.mxu0
    %v3460 = vadd.f32 %v3285, %v3459
    %v3461 = vpop.f32.mrf.mxu0
    %v3462 = vadd.f32 %v3285, %v3461
    %3463 = vmatmul.bf16.gmra.mxu0 %v3338
    %v3464 = vpop.f32.mrf.mxu0
    %v3465 = vadd.f32 %v3285, %v3464
    %v3466 = vpop.f32.mrf.mxu0
    %v3467 = vadd.f32 %v3285, %v3466
    %3468 = vmatmul.bf16.gmra.mxu0 %v3341
    %v3469 = vpop.f32.mrf.mxu0
    %v3470 = vadd.f32 %v3285, %v3469
    %v3471 = vpop.f32.mrf.mxu0
    %v3472 = vadd.f32 %v3285, %v3471
    %3473 = vmatmul.bf16.gmra.mxu0 %v3344
    %v3474 = vpop.f32.mrf.mxu0
    %v3475 = vadd.f32 %v3285, %v3474
    %v3476 = vpop.f32.mrf.mxu0
    %v3477 = vadd.f32 %v3285, %v3476
    %3478 = vmatmul.bf16.gmra.mxu0 %v3347
    %v3479 = vpop.f32.mrf.mxu0
    %v3480 = vadd.f32 %v3285, %v3479
    %v3481 = vpop.f32.mrf.mxu0
    %v3482 = vadd.f32 %v3285, %v3481
    %3483 = vmatmul.bf16.gmra.mxu0 %v3350
    %v3484 = vpop.f32.mrf.mxu0
    %v3485 = vadd.f32 %v3285, %v3484
    %v3486 = vpop.f32.mrf.mxu0
    %v3487 = vadd.f32 %v3285, %v3486
    %3488 = vmatmul.bf16.gmra.mxu0 %v3353
    %v3489 = vpop.f32.mrf.mxu0
    %v3490 = vadd.f32 %v3285, %v3489
    %v3491 = vpop.f32.mrf.mxu0
    %v3492 = vadd.f32 %v3285, %v3491
    %3493 = vmatmul.bf16.gmra.mxu0 %v3356
    %v3494 = vpop.f32.mrf.mxu0
    %v3495 = vadd.f32 %v3285, %v3494
    %v3496 = vpop.f32.mrf.mxu0
    %v3497 = vadd.f32 %v3285, %v3496
    %3498 = vmatmul.bf16.gmra.mxu0 %v3359
    %v3499 = vpop.f32.mrf.mxu0
    %v3500 = vadd.f32 %v3285, %v3499
    %v3501 = vpop.f32.mrf.mxu0
    %v3502 = vadd.f32 %v3285, %v3501
    %3503 = vmatmul.bf16.gmra.mxu0 %v3362
    %v3504 = vpop.f32.mrf.mxu0
    %v3505 = vadd.f32 %v3285, %v3504
    %v3506 = vpop.f32.mrf.mxu0
    %v3507 = vadd.f32 %v3285, %v3506
    %3508 = vmatmul.bf16.gmra.mxu0 %v3365
    %v3509 = vpop.f32.mrf.mxu0
    %v3510 = vadd.f32 %v3285, %v3509
    %v3511 = vpop.f32.mrf.mxu0
    %v3512 = vadd.f32 %v3285, %v3511
    %3513 = vmatmul.bf16.gmra.mxu0 %v3368
    %v3514 = vpop.f32.mrf.mxu0
    %v3515 = vadd.f32 %v3285, %v3514
    %v3516 = vpop.f32.mrf.mxu0
    %v3517 = vadd.f32 %v3285, %v3516
    %3518 = vmatmul.bf16.gmra.mxu0 %v3371
    %v3519 = vpop.f32.mrf.mxu0
    %v3520 = vadd.f32 %v3285, %v3519
    %v3521 = vpop.f32.mrf.mxu0
    %v3522 = vadd.f32 %v3285, %v3521
    %3523 = vmatmul.bf16.gmra.mxu0 %v3374
    %v3524 = vpop.f32.mrf.mxu0
    %v3525 = vadd.f32 %v3285, %v3524
    %v3526 = vpop.f32.mrf.mxu0
    %v3527 = vadd.f32 %v3285, %v3526
    %3528 = vmatmul.bf16.gmra.mxu0 %v3377
    %v3529 = vpop.f32.mrf.mxu0
    %v3530 = vadd.f32 %v3285, %v3529
    %v3531 = vpop.f32.mrf.mxu0
    %v3532 = vadd.f32 %v3285, %v3531
    %3533 = vmatmul.bf16.gmra.mxu0 %v3380
    %v3534 = vpop.f32.mrf.mxu0
    %v3535 = vadd.f32 %v3285, %v3534
    %v3536 = vpop.f32.mrf.mxu0
    %v3537 = vadd.f32 %v3285, %v3536
    %3538 = vmatmul.bf16.gmra.mxu0 %v3383
    %v3539 = vpop.f32.mrf.mxu0
    %v3540 = vadd.f32 %v3285, %v3539
    %v3541 = vpop.f32.mrf.mxu0
    %v3542 = vadd.f32 %v3285, %v3541
    %3543 = vmatmul.bf16.gmra.mxu0 %v3386
    %v3544 = vpop.f32.mrf.mxu0
    %v3545 = vadd.f32 %v3285, %v3544
    %v3546 = vpop.f32.mrf.mxu0
    %v3547 = vadd.f32 %v3285, %v3546
    %3548 = vmatmul.bf16.gmra.mxu0 %v3389
    %v3549 = vpop.f32.mrf.mxu0
    %v3550 = vadd.f32 %v3285, %v3549
    %v3551 = vpop.f32.mrf.mxu0
    %v3552 = vadd.f32 %v3285, %v3551
    %3553 = vmatmul.bf16.gmra.mxu0 %v3392
    %v3554 = vpop.f32.mrf.mxu0
    %v3555 = vadd.f32 %v3285, %v3554
    %v3556 = vpop.f32.mrf.mxu0
    %v3557 = vadd.f32 %v3285, %v3556
    %3558 = vmatmul.bf16.gmra.mxu0 %v3395
    %v3559 = vpop.f32.mrf.mxu0
    %v3560 = vadd.f32 %v3285, %v3559
    %v3561 = vpop.f32.mrf.mxu0
    %v3562 = vadd.f32 %v3285, %v3561
    %3563 = vmatmul.bf16.gmra.mxu0 %v3398
    %v3564 = vpop.f32.mrf.mxu0
    %v3565 = vadd.f32 %v3285, %v3564
    %v3566 = vpop.f32.mrf.mxu0
    %v3567 = vadd.f32 %v3285, %v3566
    %3568 = vdwg.mxu0
    %v3569 = vmax.f32 %v3410, 0.0
    %v3570 = vmax.f32 %v3412, 0.0
    %v3571 = vmax.f32 %v3415, 0.0
    %v3572 = vmax.f32 %v3417, 0.0
    %v3573 = vmax.f32 %v3420, 0.0
    %v3574 = vmax.f32 %v3422, 0.0
    %v3575 = vmax.f32 %v3425, 0.0
    %v3576 = vmax.f32 %v3427, 0.0
    %v3577 = vmax.f32 %v3430, 0.0
    %v3578 = vmax.f32 %v3432, 0.0
    %v3579 = vmax.f32 %v3435, 0.0
    %v3580 = vmax.f32 %v3437, 0.0
    %v3581 = vmax.f32 %v3440, 0.0
    %v3582 = vmax.f32 %v3442, 0.0
    %v3583 = vmax.f32 %v3445, 0.0
    %v3584 = vmax.f32 %v3447, 0.0
    %v3585 = vmax.f32 %v3450, 0.0
    %v3586 = vmax.f32 %v3452, 0.0
    %v3587 = vmax.f32 %v3455, 0.0
    %v3588 = vmax.f32 %v3457, 0.0
    %v3589 = vmax.f32 %v3460, 0.0
    %v3590 = vmax.f32 %v3462, 0.0
    %v3591 = vmax.f32 %v3465, 0.0
    %v3592 = vmax.f32 %v3467, 0.0
    %v3593 = vmax.f32 %v3470, 0.0
    %v3594 = vmax.f32 %v3472, 0.0
    %v3595 = vmax.f32 %v3475, 0.0
    %v3596 = vmax.f32 %v3477, 0.0
    %v3597 = vmax.f32 %v3480, 0.0
    %v3598 = vmax.f32 %v3482, 0.0
    %v3599 = vmax.f32 %v3485, 0.0
    %v3600 = vmax.f32 %v3487, 0.0
    %v3601 = vmax.f32 %v3490, 0.0
    %v3602 = vmax.f32 %v3492, 0.0
    %v3603 = vmax.f32 %v3495, 0.0
    %v3604 = vmax.f32 %v3497, 0.0
    %v3605 = vmax.f32 %v3500, 0.0
    %v3606 = vmax.f32 %v3502, 0.0
    %v3607 = vmax.f32 %v3505, 0.0
    %v3608 = vmax.f32 %v3507, 0.0
    %v3609 = vmax.f32 %v3510, 0.0
    %v3610 = vmax.f32 %v3512, 0.0
    %v3611 = vmax.f32 %v3515, 0.0
    %v3612 = vmax.f32 %v3517, 0.0
    %v3613 = vmax.f32 %v3520, 0.0
    %v3614 = vmax.f32 %v3522, 0.0
    %v3615 = vmax.f32 %v3525, 0.0
    %v3616 = vmax.f32 %v3527, 0.0
    %v3617 = vmax.f32 %v3530, 0.0
    %v3618 = vmax.f32 %v3532, 0.0
    %v3619 = vmax.f32 %v3535, 0.0
    %v3620 = vmax.f32 %v3537, 0.0
    %v3621 = vmax.f32 %v3540, 0.0
    %v3622 = vmax.f32 %v3542, 0.0
    %v3623 = vmax.f32 %v3545, 0.0
    %v3624 = vmax.f32 %v3547, 0.0
    %v3625 = vmax.f32 %v3550, 0.0
    %v3626 = vmax.f32 %v3552, 0.0
    %v3627 = vmax.f32 %v3555, 0.0
    %v3628 = vmax.f32 %v3557, 0.0
    %v3629 = vmax.f32 %v3560, 0.0
    %v3630 = vmax.f32 %v3562, 0.0
    %v3631 = vmax.f32 %v3565, 0.0
    %v3632 = vmax.f32 %v3567, 0.0
    %v3633 = vpack.c.bf16 %v3570, %v3569
    %v3634 = vpack.c.bf16 %v3572, %v3571
    %v3635 = vpack.c.bf16 %v3574, %v3573
    %v3636 = vpack.c.bf16 %v3576, %v3575
    %v3637 = vpack.c.bf16 %v3578, %v3577
    %v3638 = vpack.c.bf16 %v3580, %v3579
    %v3639 = vpack.c.bf16 %v3582, %v3581
    %v3640 = vpack.c.bf16 %v3584, %v3583
    %v3641 = vpack.c.bf16 %v3586, %v3585
    %v3642 = vpack.c.bf16 %v3588, %v3587
    %v3643 = vpack.c.bf16 %v3590, %v3589
    %v3644 = vpack.c.bf16 %v3592, %v3591
    %v3645 = vpack.c.bf16 %v3594, %v3593
    %v3646 = vpack.c.bf16 %v3596, %v3595
    %v3647 = vpack.c.bf16 %v3598, %v3597
    %v3648 = vpack.c.bf16 %v3600, %v3599
    %v3649 = vpack.c.bf16 %v3602, %v3601
    %v3650 = vpack.c.bf16 %v3604, %v3603
    %v3651 = vpack.c.bf16 %v3606, %v3605
    %v3652 = vpack.c.bf16 %v3608, %v3607
    %v3653 = vpack.c.bf16 %v3610, %v3609
    %v3654 = vpack.c.bf16 %v3612, %v3611
    %v3655 = vpack.c.bf16 %v3614, %v3613
    %v3656 = vpack.c.bf16 %v3616, %v3615
    %v3657 = vpack.c.bf16 %v3618, %v3617
    %v3658 = vpack.c.bf16 %v3620, %v3619
    %v3659 = vpack.c.bf16 %v3622, %v3621
    %v3660 = vpack.c.bf16 %v3624, %v3623
    %v3661 = vpack.c.bf16 %v3626, %v3625
    %v3662 = vpack.c.bf16 %v3628, %v3627
    %v3663 = vpack.c.bf16 %v3630, %v3629
    %v3664 = vpack.c.bf16 %v3632, %v3631
    %s3665 = scalar_lea.vmem %s3, 144
    %v3666 = vld [vmem:[%s3665] sm:$0xf]
    %v3667 = vld [vmem:[%s3665 + $0x4] sm:$0xf]
    %v3668 = vld [vmem:[%s3665 + $0x8] sm:$0xf]
    %v3669 = vld [vmem:[%s3665 + $0xc] sm:$0xf]
    %v3670 = vld [vmem:[%s3665 + $0x10] sm:$0xf]
    %v3671 = vld [vmem:[%s3665 + $0x14] sm:$0xf]
    %v3672 = vld [vmem:[%s4 + $0x6] sm:$0x1]
    %v3673 = vperm.slane %v3672, 0
    %v3680 = vunpack.c.l.b16 %v3666
    %v3681 = vunpack.c.l.b16 %v3667
    %v3682 = vunpack.c.l.b16 %v3668
    %v3683 = vunpack.c.l.b16 %v3669
    %v3684 = vunpack.c.l.b16 %v3670
    %v3685 = vunpack.c.l.b16 %v3671
    %v3686 = vpack.c.b16 %v3681, %v3680
    %v3687 = vpack.c.b16 %v3683, %v3682
    %v3688 = vpack.c.b16 %v3685, %v3684
    %v3693 = vsel %vm976, %v3633, 0
    %v3696 = vsel %vm976, %v3634, 0
    %v3699 = vsel %vm976, %v3635, 0
    %v3702 = vsel %vm976, %v3636, 0
    %v3705 = vsel %vm976, %v3637, 0
    %v3708 = vsel %vm976, %v3638, 0
    %v3711 = vsel %vm976, %v3639, 0
    %v3714 = vsel %vm976, %v3640, 0
    %v3717 = vsel %vm976, %v3641, 0
    %v3720 = vsel %vm976, %v3642, 0
    %v3723 = vsel %vm976, %v3643, 0
    %v3726 = vsel %vm976, %v3644, 0
    %v3729 = vsel %vm976, %v3645, 0
    %v3732 = vsel %vm976, %v3646, 0
    %v3735 = vsel %vm976, %v3647, 0
    %v3738 = vsel %vm976, %v3648, 0
    %v3741 = vsel %vm976, %v3649, 0
    %v3744 = vsel %vm976, %v3650, 0
    %v3747 = vsel %vm976, %v3651, 0
    %v3750 = vsel %vm976, %v3652, 0
    %v3753 = vsel %vm976, %v3653, 0
    %v3756 = vsel %vm976, %v3654, 0
    %v3759 = vsel %vm976, %v3655, 0
    %v3762 = vsel %vm976, %v3656, 0
    %v3765 = vsel %vm976, %v3657, 0
    %v3768 = vsel %vm976, %v3658, 0
    %v3771 = vsel %vm976, %v3659, 0
    %v3774 = vsel %vm976, %v3660, 0
    %v3777 = vsel %vm976, %v3661, 0
    %v3780 = vsel %vm976, %v3662, 0
    %v3783 = vsel %vm976, %v3663, 0
    %v3786 = vsel %vm976, %v3664, 0
    %3788 = vmatpush.bf16.msra.mxu0 0
    %3789 = vmatpush.bf16.msra.mxu0 0
    %3790 = vmatpush.bf16.msra.mxu0 0
    %3791 = vmatpush.bf16.msra.mxu0 0
    %3792 = vmatpush.bf16.msra.mxu0 0
    %3793 = vmatpush.bf16.msra.mxu0 %v3688
    %3794 = vmatpush.bf16.msra.mxu0 %v3687
    %3795 = vmatpush.bf16.msra.mxu0 %v3686
    %3796 = vmatmul.bf16.gmra.mxu0 %v3693
    %v3797 = vpop.f32.mrf.mxu0
    %v3798 = vadd.f32 %v3673, %v3797
    %v3799 = vpop.f32.mrf.mxu0
    %v3800 = vadd.f32 %v3673, %v3799
    %3801 = vmatmul.bf16.gmra.mxu0 %v3696
    %v3802 = vpop.f32.mrf.mxu0
    %v3803 = vadd.f32 %v3673, %v3802
    %v3804 = vpop.f32.mrf.mxu0
    %v3805 = vadd.f32 %v3673, %v3804
    %3806 = vmatmul.bf16.gmra.mxu0 %v3699
    %v3807 = vpop.f32.mrf.mxu0
    %v3808 = vadd.f32 %v3673, %v3807
    %v3809 = vpop.f32.mrf.mxu0
    %v3810 = vadd.f32 %v3673, %v3809
    %3811 = vmatmul.bf16.gmra.mxu0 %v3702
    %v3812 = vpop.f32.mrf.mxu0
    %v3813 = vadd.f32 %v3673, %v3812
    %v3814 = vpop.f32.mrf.mxu0
    %v3815 = vadd.f32 %v3673, %v3814
    %3816 = vmatmul.bf16.gmra.mxu0 %v3705
    %v3817 = vpop.f32.mrf.mxu0
    %v3818 = vadd.f32 %v3673, %v3817
    %v3819 = vpop.f32.mrf.mxu0
    %v3820 = vadd.f32 %v3673, %v3819
    %3821 = vmatmul.bf16.gmra.mxu0 %v3708
    %v3822 = vpop.f32.mrf.mxu0
    %v3823 = vadd.f32 %v3673, %v3822
    %v3824 = vpop.f32.mrf.mxu0
    %v3825 = vadd.f32 %v3673, %v3824
    %3826 = vmatmul.bf16.gmra.mxu0 %v3711
    %v3827 = vpop.f32.mrf.mxu0
    %v3828 = vadd.f32 %v3673, %v3827
    %v3829 = vpop.f32.mrf.mxu0
    %v3830 = vadd.f32 %v3673, %v3829
    %3831 = vmatmul.bf16.gmra.mxu0 %v3714
    %v3832 = vpop.f32.mrf.mxu0
    %v3833 = vadd.f32 %v3673, %v3832
    %v3834 = vpop.f32.mrf.mxu0
    %v3835 = vadd.f32 %v3673, %v3834
    %3836 = vmatmul.bf16.gmra.mxu0 %v3717
    %v3837 = vpop.f32.mrf.mxu0
    %v3838 = vadd.f32 %v3673, %v3837
    %v3839 = vpop.f32.mrf.mxu0
    %v3840 = vadd.f32 %v3673, %v3839
    %3841 = vmatmul.bf16.gmra.mxu0 %v3720
    %v3842 = vpop.f32.mrf.mxu0
    %v3843 = vadd.f32 %v3673, %v3842
    %v3844 = vpop.f32.mrf.mxu0
    %v3845 = vadd.f32 %v3673, %v3844
    %3846 = vmatmul.bf16.gmra.mxu0 %v3723
    %v3847 = vpop.f32.mrf.mxu0
    %v3848 = vadd.f32 %v3673, %v3847
    %v3849 = vpop.f32.mrf.mxu0
    %v3850 = vadd.f32 %v3673, %v3849
    %3851 = vmatmul.bf16.gmra.mxu0 %v3726
    %v3852 = vpop.f32.mrf.mxu0
    %v3853 = vadd.f32 %v3673, %v3852
    %v3854 = vpop.f32.mrf.mxu0
    %v3855 = vadd.f32 %v3673, %v3854
    %3856 = vmatmul.bf16.gmra.mxu0 %v3729
    %v3857 = vpop.f32.mrf.mxu0
    %v3858 = vadd.f32 %v3673, %v3857
    %v3859 = vpop.f32.mrf.mxu0
    %v3860 = vadd.f32 %v3673, %v3859
    %3861 = vmatmul.bf16.gmra.mxu0 %v3732
    %v3862 = vpop.f32.mrf.mxu0
    %v3863 = vadd.f32 %v3673, %v3862
    %v3864 = vpop.f32.mrf.mxu0
    %v3865 = vadd.f32 %v3673, %v3864
    %3866 = vmatmul.bf16.gmra.mxu0 %v3735
    %v3867 = vpop.f32.mrf.mxu0
    %v3868 = vadd.f32 %v3673, %v3867
    %v3869 = vpop.f32.mrf.mxu0
    %v3870 = vadd.f32 %v3673, %v3869
    %3871 = vmatmul.bf16.gmra.mxu0 %v3738
    %v3872 = vpop.f32.mrf.mxu0
    %v3873 = vadd.f32 %v3673, %v3872
    %v3874 = vpop.f32.mrf.mxu0
    %v3875 = vadd.f32 %v3673, %v3874
    %3876 = vmatmul.bf16.gmra.mxu0 %v3741
    %v3877 = vpop.f32.mrf.mxu0
    %v3878 = vadd.f32 %v3673, %v3877
    %v3879 = vpop.f32.mrf.mxu0
    %v3880 = vadd.f32 %v3673, %v3879
    %3881 = vmatmul.bf16.gmra.mxu0 %v3744
    %v3882 = vpop.f32.mrf.mxu0
    %v3883 = vadd.f32 %v3673, %v3882
    %v3884 = vpop.f32.mrf.mxu0
    %v3885 = vadd.f32 %v3673, %v3884
    %3886 = vmatmul.bf16.gmra.mxu0 %v3747
    %v3887 = vpop.f32.mrf.mxu0
    %v3888 = vadd.f32 %v3673, %v3887
    %v3889 = vpop.f32.mrf.mxu0
    %v3890 = vadd.f32 %v3673, %v3889
    %3891 = vmatmul.bf16.gmra.mxu0 %v3750
    %v3892 = vpop.f32.mrf.mxu0
    %v3893 = vadd.f32 %v3673, %v3892
    %v3894 = vpop.f32.mrf.mxu0
    %v3895 = vadd.f32 %v3673, %v3894
    %3896 = vmatmul.bf16.gmra.mxu0 %v3753
    %v3897 = vpop.f32.mrf.mxu0
    %v3898 = vadd.f32 %v3673, %v3897
    %v3899 = vpop.f32.mrf.mxu0
    %v3900 = vadd.f32 %v3673, %v3899
    %3901 = vmatmul.bf16.gmra.mxu0 %v3756
    %v3902 = vpop.f32.mrf.mxu0
    %v3903 = vadd.f32 %v3673, %v3902
    %v3904 = vpop.f32.mrf.mxu0
    %v3905 = vadd.f32 %v3673, %v3904
    %3906 = vmatmul.bf16.gmra.mxu0 %v3759
    %v3907 = vpop.f32.mrf.mxu0
    %v3908 = vadd.f32 %v3673, %v3907
    %v3909 = vpop.f32.mrf.mxu0
    %v3910 = vadd.f32 %v3673, %v3909
    %3911 = vmatmul.bf16.gmra.mxu0 %v3762
    %v3912 = vpop.f32.mrf.mxu0
    %v3913 = vadd.f32 %v3673, %v3912
    %v3914 = vpop.f32.mrf.mxu0
    %v3915 = vadd.f32 %v3673, %v3914
    %3916 = vmatmul.bf16.gmra.mxu0 %v3765
    %v3917 = vpop.f32.mrf.mxu0
    %v3918 = vadd.f32 %v3673, %v3917
    %v3919 = vpop.f32.mrf.mxu0
    %v3920 = vadd.f32 %v3673, %v3919
    %3921 = vmatmul.bf16.gmra.mxu0 %v3768
    %v3922 = vpop.f32.mrf.mxu0
    %v3923 = vadd.f32 %v3673, %v3922
    %v3924 = vpop.f32.mrf.mxu0
    %v3925 = vadd.f32 %v3673, %v3924
    %3926 = vmatmul.bf16.gmra.mxu0 %v3771
    %v3927 = vpop.f32.mrf.mxu0
    %v3928 = vadd.f32 %v3673, %v3927
    %v3929 = vpop.f32.mrf.mxu0
    %v3930 = vadd.f32 %v3673, %v3929
    %3931 = vmatmul.bf16.gmra.mxu0 %v3774
    %v3932 = vpop.f32.mrf.mxu0
    %v3933 = vadd.f32 %v3673, %v3932
    %v3934 = vpop.f32.mrf.mxu0
    %v3935 = vadd.f32 %v3673, %v3934
    %3936 = vmatmul.bf16.gmra.mxu0 %v3777
    %v3937 = vpop.f32.mrf.mxu0
    %v3938 = vadd.f32 %v3673, %v3937
    %v3939 = vpop.f32.mrf.mxu0
    %v3940 = vadd.f32 %v3673, %v3939
    %3941 = vmatmul.bf16.gmra.mxu0 %v3780
    %v3942 = vpop.f32.mrf.mxu0
    %v3943 = vadd.f32 %v3673, %v3942
    %v3944 = vpop.f32.mrf.mxu0
    %v3945 = vadd.f32 %v3673, %v3944
    %3946 = vmatmul.bf16.gmra.mxu0 %v3783
    %v3947 = vpop.f32.mrf.mxu0
    %v3948 = vadd.f32 %v3673, %v3947
    %v3949 = vpop.f32.mrf.mxu0
    %v3950 = vadd.f32 %v3673, %v3949
    %3951 = vmatmul.bf16.gmra.mxu0 %v3786
    %v3952 = vpop.f32.mrf.mxu0
    %v3953 = vadd.f32 %v3673, %v3952
    %v3954 = vpop.f32.mrf.mxu0
    %v3955 = vadd.f32 %v3673, %v3954
    %3956 = vdwg.mxu0
    %v3957 = vadd.f32 %v3798, %v3086
    %v3958 = vadd.f32 %v3800, %v3088
    %v3959 = vadd.f32 %v3803, %v3091
    %v3960 = vadd.f32 %v3805, %v3093
    %v3961 = vadd.f32 %v3808, %v3096
    %v3962 = vadd.f32 %v3810, %v3098
    %v3963 = vadd.f32 %v3813, %v3101
    %v3964 = vadd.f32 %v3815, %v3103
    %v3965 = vadd.f32 %v3818, %v3106
    %v3966 = vadd.f32 %v3820, %v3108
    %v3967 = vadd.f32 %v3823, %v3111
    %v3968 = vadd.f32 %v3825, %v3113
    %v3969 = vadd.f32 %v3828, %v3116
    %v3970 = vadd.f32 %v3830, %v3118
    %v3971 = vadd.f32 %v3833, %v3121
    %v3972 = vadd.f32 %v3835, %v3123
    %v3973 = vadd.f32 %v3838, %v3126
    %v3974 = vadd.f32 %v3840, %v3128
    %v3975 = vadd.f32 %v3843, %v3131
    %v3976 = vadd.f32 %v3845, %v3133
    %v3977 = vadd.f32 %v3848, %v3136
    %v3978 = vadd.f32 %v3850, %v3138
    %v3979 = vadd.f32 %v3853, %v3141
    %v3980 = vadd.f32 %v3855, %v3143
    %v3981 = vadd.f32 %v3858, %v3146
    %v3982 = vadd.f32 %v3860, %v3148
    %v3983 = vadd.f32 %v3863, %v3151
    %v3984 = vadd.f32 %v3865, %v3153
    %v3985 = vadd.f32 %v3868, %v3156
    %v3986 = vadd.f32 %v3870, %v3158
    %v3987 = vadd.f32 %v3873, %v3161
    %v3988 = vadd.f32 %v3875, %v3163
    %v3989 = vadd.f32 %v3878, %v3166
    %v3990 = vadd.f32 %v3880, %v3168
    %v3991 = vadd.f32 %v3883, %v3171
    %v3992 = vadd.f32 %v3885, %v3173
    %v3993 = vadd.f32 %v3888, %v3176
    %v3994 = vadd.f32 %v3890, %v3178
    %v3995 = vadd.f32 %v3893, %v3181
    %v3996 = vadd.f32 %v3895, %v3183
    %v3997 = vadd.f32 %v3898, %v3186
    %v3998 = vadd.f32 %v3900, %v3188
    %v3999 = vadd.f32 %v3903, %v3191
    %v4000 = vadd.f32 %v3905, %v3193
    %v4001 = vadd.f32 %v3908, %v3196
    %v4002 = vadd.f32 %v3910, %v3198
    %v4003 = vadd.f32 %v3913, %v3201
    %v4004 = vadd.f32 %v3915, %v3203
    %v4005 = vadd.f32 %v3918, %v3206
    %v4006 = vadd.f32 %v3920, %v3208
    %v4007 = vadd.f32 %v3923, %v3211
    %v4008 = vadd.f32 %v3925, %v3213
    %v4009 = vadd.f32 %v3928, %v3216
    %v4010 = vadd.f32 %v3930, %v3218
    %v4011 = vadd.f32 %v3933, %v3221
    %v4012 = vadd.f32 %v3935, %v3223
    %v4013 = vadd.f32 %v3938, %v3226
    %v4014 = vadd.f32 %v3940, %v3228
    %v4015 = vadd.f32 %v3943, %v3231
    %v4016 = vadd.f32 %v3945, %v3233
    %v4017 = vadd.f32 %v3948, %v3236
    %v4018 = vadd.f32 %v3950, %v3238
    %v4019 = vadd.f32 %v3953, %v3241
    %v4020 = vadd.f32 %v3955, %v3243
    %v4021 = vmax.f32 %v3957, 0.0
    %v4022 = vmax.f32 %v3958, 0.0
    %v4023 = vmax.f32 %v3959, 0.0
    %v4024 = vmax.f32 %v3960, 0.0
    %v4025 = vmax.f32 %v3961, 0.0
    %v4026 = vmax.f32 %v3962, 0.0
    %v4027 = vmax.f32 %v3963, 0.0
    %v4028 = vmax.f32 %v3964, 0.0
    %v4029 = vmax.f32 %v3965, 0.0
    %v4030 = vmax.f32 %v3966, 0.0
    %v4031 = vmax.f32 %v3967, 0.0
    %v4032 = vmax.f32 %v3968, 0.0
    %v4033 = vmax.f32 %v3969, 0.0
    %v4034 = vmax.f32 %v3970, 0.0
    %v4035 = vmax.f32 %v3971, 0.0
    %v4036 = vmax.f32 %v3972, 0.0
    %v4037 = vmax.f32 %v3973, 0.0
    %v4038 = vmax.f32 %v3974, 0.0
    %v4039 = vmax.f32 %v3975, 0.0
    %v4040 = vmax.f32 %v3976, 0.0
    %v4041 = vmax.f32 %v3977, 0.0
    %v4042 = vmax.f32 %v3978, 0.0
    %v4043 = vmax.f32 %v3979, 0.0
    %v4044 = vmax.f32 %v3980, 0.0
    %v4045 = vmax.f32 %v3981, 0.0
    %v4046 = vmax.f32 %v3982, 0.0
    %v4047 = vmax.f32 %v3983, 0.0
    %v4048 = vmax.f32 %v3984, 0.0
    %v4049 = vmax.f32 %v3985, 0.0
    %v4050 = vmax.f32 %v3986, 0.0
    %v4051 = vmax.f32 %v3987, 0.0
    %v4052 = vmax.f32 %v3988, 0.0
    %v4053 = vmax.f32 %v3989, 0.0
    %v4054 = vmax.f32 %v3990, 0.0
    %v4055 = vmax.f32 %v3991, 0.0
    %v4056 = vmax.f32 %v3992, 0.0
    %v4057 = vmax.f32 %v3993, 0.0
    %v4058 = vmax.f32 %v3994, 0.0
    %v4059 = vmax.f32 %v3995, 0.0
    %v4060 = vmax.f32 %v3996, 0.0
    %v4061 = vmax.f32 %v3997, 0.0
    %v4062 = vmax.f32 %v3998, 0.0
    %v4063 = vmax.f32 %v3999, 0.0
    %v4064 = vmax.f32 %v4000, 0.0
    %v4065 = vmax.f32 %v4001, 0.0
    %v4066 = vmax.f32 %v4002, 0.0
    %v4067 = vmax.f32 %v4003, 0.0
    %v4068 = vmax.f32 %v4004, 0.0
    %v4069 = vmax.f32 %v4005, 0.0
    %v4070 = vmax.f32 %v4006, 0.0
    %v4071 = vmax.f32 %v4007, 0.0
    %v4072 = vmax.f32 %v4008, 0.0
    %v4073 = vmax.f32 %v4009, 0.0
    %v4074 = vmax.f32 %v4010, 0.0
    %v4075 = vmax.f32 %v4011, 0.0
    %v4076 = vmax.f32 %v4012, 0.0
    %v4077 = vmax.f32 %v4013, 0.0
    %v4078 = vmax.f32 %v4014, 0.0
    %v4079 = vmax.f32 %v4015, 0.0
    %v4080 = vmax.f32 %v4016, 0.0
    %v4081 = vmax.f32 %v4017, 0.0
    %v4082 = vmax.f32 %v4018, 0.0
    %v4083 = vmax.f32 %v4019, 0.0
    %v4084 = vmax.f32 %v4020, 0.0
    %v4085 = vpack.c.bf16 %v4022, %v4021
    %v4086 = vpack.c.bf16 %v4024, %v4023
    %v4087 = vpack.c.bf16 %v4026, %v4025
    %v4088 = vpack.c.bf16 %v4028, %v4027
    %v4089 = vpack.c.bf16 %v4030, %v4029
    %v4090 = vpack.c.bf16 %v4032, %v4031
    %v4091 = vpack.c.bf16 %v4034, %v4033
    %v4092 = vpack.c.bf16 %v4036, %v4035
    %v4093 = vpack.c.bf16 %v4038, %v4037
    %v4094 = vpack.c.bf16 %v4040, %v4039
    %v4095 = vpack.c.bf16 %v4042, %v4041
    %v4096 = vpack.c.bf16 %v4044, %v4043
    %v4097 = vpack.c.bf16 %v4046, %v4045
    %v4098 = vpack.c.bf16 %v4048, %v4047
    %v4099 = vpack.c.bf16 %v4050, %v4049
    %v4100 = vpack.c.bf16 %v4052, %v4051
    %v4101 = vpack.c.bf16 %v4054, %v4053
    %v4102 = vpack.c.bf16 %v4056, %v4055
    %v4103 = vpack.c.bf16 %v4058, %v4057
    %v4104 = vpack.c.bf16 %v4060, %v4059
    %v4105 = vpack.c.bf16 %v4062, %v4061
    %v4106 = vpack.c.bf16 %v4064, %v4063
    %v4107 = vpack.c.bf16 %v4066, %v4065
    %v4108 = vpack.c.bf16 %v4068, %v4067
    %v4109 = vpack.c.bf16 %v4070, %v4069
    %v4110 = vpack.c.bf16 %v4072, %v4071
    %v4111 = vpack.c.bf16 %v4074, %v4073
    %v4112 = vpack.c.bf16 %v4076, %v4075
    %v4113 = vpack.c.bf16 %v4078, %v4077
    %v4114 = vpack.c.bf16 %v4080, %v4079
    %v4115 = vpack.c.bf16 %v4082, %v4081
    %v4116 = vpack.c.bf16 %v4084, %v4083
    %s4117 = scalar_lea.vmem %s3, 168
    %v4118 = vld [vmem:[%s4117] sm:$0xf]
    %v4119 = vld [vmem:[%s4117 + $0x4] sm:$0xf]
    %v4120 = vld [vmem:[%s4117 + $0x8] sm:$0xf]
    %v4121 = vld [vmem:[%s4117 + $0xc] sm:$0xf]
    %v4122 = vld [vmem:[%s4117 + $0x10] sm:$0xf]
    %v4123 = vld [vmem:[%s4117 + $0x14] sm:$0xf]
    %v4124 = vld [vmem:[%s4 + $0x7] sm:$0x1]
    %v4125 = vperm.slane %v4124, 0
    %v4132 = vunpack.c.l.b16 %v4118
    %v4133 = vunpack.c.l.b16 %v4119
    %v4134 = vunpack.c.l.b16 %v4120
    %v4135 = vunpack.c.l.b16 %v4121
    %v4136 = vunpack.c.l.b16 %v4122
    %v4137 = vunpack.c.l.b16 %v4123
    %v4138 = vpack.c.b16 %v4133, %v4132
    %v4139 = vpack.c.b16 %v4135, %v4134
    %v4140 = vpack.c.b16 %v4137, %v4136
    %v4145 = vsel %vm976, %v4085, 0
    %v4148 = vsel %vm976, %v4086, 0
    %v4151 = vsel %vm976, %v4087, 0
    %v4154 = vsel %vm976, %v4088, 0
    %v4157 = vsel %vm976, %v4089, 0
    %v4160 = vsel %vm976, %v4090, 0
    %v4163 = vsel %vm976, %v4091, 0
    %v4166 = vsel %vm976, %v4092, 0
    %v4169 = vsel %vm976, %v4093, 0
    %v4172 = vsel %vm976, %v4094, 0
    %v4175 = vsel %vm976, %v4095, 0
    %v4178 = vsel %vm976, %v4096, 0
    %v4181 = vsel %vm976, %v4097, 0
    %v4184 = vsel %vm976, %v4098, 0
    %v4187 = vsel %vm976, %v4099, 0
    %v4190 = vsel %vm976, %v4100, 0
    %v4193 = vsel %vm976, %v4101, 0
    %v4196 = vsel %vm976, %v4102, 0
    %v4199 = vsel %vm976, %v4103, 0
    %v4202 = vsel %vm976, %v4104, 0
    %v4205 = vsel %vm976, %v4105, 0
    %v4208 = vsel %vm976, %v4106, 0
    %v4211 = vsel %vm976, %v4107, 0
    %v4214 = vsel %vm976, %v4108, 0
    %v4217 = vsel %vm976, %v4109, 0
    %v4220 = vsel %vm976, %v4110, 0
    %v4223 = vsel %vm976, %v4111, 0
    %v4226 = vsel %vm976, %v4112, 0
    %v4229 = vsel %vm976, %v4113, 0
    %v4232 = vsel %vm976, %v4114, 0
    %v4235 = vsel %vm976, %v4115, 0
    %v4238 = vsel %vm976, %v4116, 0
    %4240 = vmatpush.bf16.msra.mxu0 0
    %4241 = vmatpush.bf16.msra.mxu0 0
    %4242 = vmatpush.bf16.msra.mxu0 0
    %4243 = vmatpush.bf16.msra.mxu0 0
    %4244 = vmatpush.bf16.msra.mxu0 0
    %4245 = vmatpush.bf16.msra.mxu0 %v4140
    %4246 = vmatpush.bf16.msra.mxu0 %v4139
    %4247 = vmatpush.bf16.msra.mxu0 %v4138
    %4248 = vmatmul.bf16.gmra.mxu0 %v4145
    %v4249 = vpop.f32.mrf.mxu0
    %v4250 = vadd.f32 %v4125, %v4249
    %v4251 = vpop.f32.mrf.mxu0
    %v4252 = vadd.f32 %v4125, %v4251
    %4253 = vmatmul.bf16.gmra.mxu0 %v4148
    %v4254 = vpop.f32.mrf.mxu0
    %v4255 = vadd.f32 %v4125, %v4254
    %v4256 = vpop.f32.mrf.mxu0
    %v4257 = vadd.f32 %v4125, %v4256
    %4258 = vmatmul.bf16.gmra.mxu0 %v4151
    %v4259 = vpop.f32.mrf.mxu0
    %v4260 = vadd.f32 %v4125, %v4259
    %v4261 = vpop.f32.mrf.mxu0
    %v4262 = vadd.f32 %v4125, %v4261
    %4263 = vmatmul.bf16.gmra.mxu0 %v4154
    %v4264 = vpop.f32.mrf.mxu0
    %v4265 = vadd.f32 %v4125, %v4264
    %v4266 = vpop.f32.mrf.mxu0
    %v4267 = vadd.f32 %v4125, %v4266
    %4268 = vmatmul.bf16.gmra.mxu0 %v4157
    %v4269 = vpop.f32.mrf.mxu0
    %v4270 = vadd.f32 %v4125, %v4269
    %v4271 = vpop.f32.mrf.mxu0
    %v4272 = vadd.f32 %v4125, %v4271
    %4273 = vmatmul.bf16.gmra.mxu0 %v4160
    %v4274 = vpop.f32.mrf.mxu0
    %v4275 = vadd.f32 %v4125, %v4274
    %v4276 = vpop.f32.mrf.mxu0
    %v4277 = vadd.f32 %v4125, %v4276
    %4278 = vmatmul.bf16.gmra.mxu0 %v4163
    %v4279 = vpop.f32.mrf.mxu0
    %v4280 = vadd.f32 %v4125, %v4279
    %v4281 = vpop.f32.mrf.mxu0
    %v4282 = vadd.f32 %v4125, %v4281
    %4283 = vmatmul.bf16.gmra.mxu0 %v4166
    %v4284 = vpop.f32.mrf.mxu0
    %v4285 = vadd.f32 %v4125, %v4284
    %v4286 = vpop.f32.mrf.mxu0
    %v4287 = vadd.f32 %v4125, %v4286
    %4288 = vmatmul.bf16.gmra.mxu0 %v4169
    %v4289 = vpop.f32.mrf.mxu0
    %v4290 = vadd.f32 %v4125, %v4289
    %v4291 = vpop.f32.mrf.mxu0
    %v4292 = vadd.f32 %v4125, %v4291
    %4293 = vmatmul.bf16.gmra.mxu0 %v4172
    %v4294 = vpop.f32.mrf.mxu0
    %v4295 = vadd.f32 %v4125, %v4294
    %v4296 = vpop.f32.mrf.mxu0
    %v4297 = vadd.f32 %v4125, %v4296
    %4298 = vmatmul.bf16.gmra.mxu0 %v4175
    %v4299 = vpop.f32.mrf.mxu0
    %v4300 = vadd.f32 %v4125, %v4299
    %v4301 = vpop.f32.mrf.mxu0
    %v4302 = vadd.f32 %v4125, %v4301
    %4303 = vmatmul.bf16.gmra.mxu0 %v4178
    %v4304 = vpop.f32.mrf.mxu0
    %v4305 = vadd.f32 %v4125, %v4304
    %v4306 = vpop.f32.mrf.mxu0
    %v4307 = vadd.f32 %v4125, %v4306
    %4308 = vmatmul.bf16.gmra.mxu0 %v4181
    %v4309 = vpop.f32.mrf.mxu0
    %v4310 = vadd.f32 %v4125, %v4309
    %v4311 = vpop.f32.mrf.mxu0
    %v4312 = vadd.f32 %v4125, %v4311
    %4313 = vmatmul.bf16.gmra.mxu0 %v4184
    %v4314 = vpop.f32.mrf.mxu0
    %v4315 = vadd.f32 %v4125, %v4314
    %v4316 = vpop.f32.mrf.mxu0
    %v4317 = vadd.f32 %v4125, %v4316
    %4318 = vmatmul.bf16.gmra.mxu0 %v4187
    %v4319 = vpop.f32.mrf.mxu0
    %v4320 = vadd.f32 %v4125, %v4319
    %v4321 = vpop.f32.mrf.mxu0
    %v4322 = vadd.f32 %v4125, %v4321
    %4323 = vmatmul.bf16.gmra.mxu0 %v4190
    %v4324 = vpop.f32.mrf.mxu0
    %v4325 = vadd.f32 %v4125, %v4324
    %v4326 = vpop.f32.mrf.mxu0
    %v4327 = vadd.f32 %v4125, %v4326
    %4328 = vmatmul.bf16.gmra.mxu0 %v4193
    %v4329 = vpop.f32.mrf.mxu0
    %v4330 = vadd.f32 %v4125, %v4329
    %v4331 = vpop.f32.mrf.mxu0
    %v4332 = vadd.f32 %v4125, %v4331
    %4333 = vmatmul.bf16.gmra.mxu0 %v4196
    %v4334 = vpop.f32.mrf.mxu0
    %v4335 = vadd.f32 %v4125, %v4334
    %v4336 = vpop.f32.mrf.mxu0
    %v4337 = vadd.f32 %v4125, %v4336
    %4338 = vmatmul.bf16.gmra.mxu0 %v4199
    %v4339 = vpop.f32.mrf.mxu0
    %v4340 = vadd.f32 %v4125, %v4339
    %v4341 = vpop.f32.mrf.mxu0
    %v4342 = vadd.f32 %v4125, %v4341
    %4343 = vmatmul.bf16.gmra.mxu0 %v4202
    %v4344 = vpop.f32.mrf.mxu0
    %v4345 = vadd.f32 %v4125, %v4344
    %v4346 = vpop.f32.mrf.mxu0
    %v4347 = vadd.f32 %v4125, %v4346
    %4348 = vmatmul.bf16.gmra.mxu0 %v4205
    %v4349 = vpop.f32.mrf.mxu0
    %v4350 = vadd.f32 %v4125, %v4349
    %v4351 = vpop.f32.mrf.mxu0
    %v4352 = vadd.f32 %v4125, %v4351
    %4353 = vmatmul.bf16.gmra.mxu0 %v4208
    %v4354 = vpop.f32.mrf.mxu0
    %v4355 = vadd.f32 %v4125, %v4354
    %v4356 = vpop.f32.mrf.mxu0
    %v4357 = vadd.f32 %v4125, %v4356
    %4358 = vmatmul.bf16.gmra.mxu0 %v4211
    %v4359 = vpop.f32.mrf.mxu0
    %v4360 = vadd.f32 %v4125, %v4359
    %v4361 = vpop.f32.mrf.mxu0
    %v4362 = vadd.f32 %v4125, %v4361
    %4363 = vmatmul.bf16.gmra.mxu0 %v4214
    %v4364 = vpop.f32.mrf.mxu0
    %v4365 = vadd.f32 %v4125, %v4364
    %v4366 = vpop.f32.mrf.mxu0
    %v4367 = vadd.f32 %v4125, %v4366
    %4368 = vmatmul.bf16.gmra.mxu0 %v4217
    %v4369 = vpop.f32.mrf.mxu0
    %v4370 = vadd.f32 %v4125, %v4369
    %v4371 = vpop.f32.mrf.mxu0
    %v4372 = vadd.f32 %v4125, %v4371
    %4373 = vmatmul.bf16.gmra.mxu0 %v4220
    %v4374 = vpop.f32.mrf.mxu0
    %v4375 = vadd.f32 %v4125, %v4374
    %v4376 = vpop.f32.mrf.mxu0
    %v4377 = vadd.f32 %v4125, %v4376
    %4378 = vmatmul.bf16.gmra.mxu0 %v4223
    %v4379 = vpop.f32.mrf.mxu0
    %v4380 = vadd.f32 %v4125, %v4379
    %v4381 = vpop.f32.mrf.mxu0
    %v4382 = vadd.f32 %v4125, %v4381
    %4383 = vmatmul.bf16.gmra.mxu0 %v4226
    %v4384 = vpop.f32.mrf.mxu0
    %v4385 = vadd.f32 %v4125, %v4384
    %v4386 = vpop.f32.mrf.mxu0
    %v4387 = vadd.f32 %v4125, %v4386
    %4388 = vmatmul.bf16.gmra.mxu0 %v4229
    %v4389 = vpop.f32.mrf.mxu0
    %v4390 = vadd.f32 %v4125, %v4389
    %v4391 = vpop.f32.mrf.mxu0
    %v4392 = vadd.f32 %v4125, %v4391
    %4393 = vmatmul.bf16.gmra.mxu0 %v4232
    %v4394 = vpop.f32.mrf.mxu0
    %v4395 = vadd.f32 %v4125, %v4394
    %v4396 = vpop.f32.mrf.mxu0
    %v4397 = vadd.f32 %v4125, %v4396
    %4398 = vmatmul.bf16.gmra.mxu0 %v4235
    %v4399 = vpop.f32.mrf.mxu0
    %v4400 = vadd.f32 %v4125, %v4399
    %v4401 = vpop.f32.mrf.mxu0
    %v4402 = vadd.f32 %v4125, %v4401
    %4403 = vmatmul.bf16.gmra.mxu0 %v4238
    %v4404 = vpop.f32.mrf.mxu0
    %v4405 = vadd.f32 %v4125, %v4404
    %v4406 = vpop.f32.mrf.mxu0
    %v4407 = vadd.f32 %v4125, %v4406
    %4408 = vdwg.mxu0
    %v4409 = vmax.f32 %v4250, 0.0
    %v4410 = vmax.f32 %v4252, 0.0
    %v4411 = vmax.f32 %v4255, 0.0
    %v4412 = vmax.f32 %v4257, 0.0
    %v4413 = vmax.f32 %v4260, 0.0
    %v4414 = vmax.f32 %v4262, 0.0
    %v4415 = vmax.f32 %v4265, 0.0
    %v4416 = vmax.f32 %v4267, 0.0
    %v4417 = vmax.f32 %v4270, 0.0
    %v4418 = vmax.f32 %v4272, 0.0
    %v4419 = vmax.f32 %v4275, 0.0
    %v4420 = vmax.f32 %v4277, 0.0
    %v4421 = vmax.f32 %v4280, 0.0
    %v4422 = vmax.f32 %v4282, 0.0
    %v4423 = vmax.f32 %v4285, 0.0
    %v4424 = vmax.f32 %v4287, 0.0
    %v4425 = vmax.f32 %v4290, 0.0
    %v4426 = vmax.f32 %v4292, 0.0
    %v4427 = vmax.f32 %v4295, 0.0
    %v4428 = vmax.f32 %v4297, 0.0
    %v4429 = vmax.f32 %v4300, 0.0
    %v4430 = vmax.f32 %v4302, 0.0
    %v4431 = vmax.f32 %v4305, 0.0
    %v4432 = vmax.f32 %v4307, 0.0
    %v4433 = vmax.f32 %v4310, 0.0
    %v4434 = vmax.f32 %v4312, 0.0
    %v4435 = vmax.f32 %v4315, 0.0
    %v4436 = vmax.f32 %v4317, 0.0
    %v4437 = vmax.f32 %v4320, 0.0
    %v4438 = vmax.f32 %v4322, 0.0
    %v4439 = vmax.f32 %v4325, 0.0
    %v4440 = vmax.f32 %v4327, 0.0
    %v4441 = vmax.f32 %v4330, 0.0
    %v4442 = vmax.f32 %v4332, 0.0
    %v4443 = vmax.f32 %v4335, 0.0
    %v4444 = vmax.f32 %v4337, 0.0
    %v4445 = vmax.f32 %v4340, 0.0
    %v4446 = vmax.f32 %v4342, 0.0
    %v4447 = vmax.f32 %v4345, 0.0
    %v4448 = vmax.f32 %v4347, 0.0
    %v4449 = vmax.f32 %v4350, 0.0
    %v4450 = vmax.f32 %v4352, 0.0
    %v4451 = vmax.f32 %v4355, 0.0
    %v4452 = vmax.f32 %v4357, 0.0
    %v4453 = vmax.f32 %v4360, 0.0
    %v4454 = vmax.f32 %v4362, 0.0
    %v4455 = vmax.f32 %v4365, 0.0
    %v4456 = vmax.f32 %v4367, 0.0
    %v4457 = vmax.f32 %v4370, 0.0
    %v4458 = vmax.f32 %v4372, 0.0
    %v4459 = vmax.f32 %v4375, 0.0
    %v4460 = vmax.f32 %v4377, 0.0
    %v4461 = vmax.f32 %v4380, 0.0
    %v4462 = vmax.f32 %v4382, 0.0
    %v4463 = vmax.f32 %v4385, 0.0
    %v4464 = vmax.f32 %v4387, 0.0
    %v4465 = vmax.f32 %v4390, 0.0
    %v4466 = vmax.f32 %v4392, 0.0
    %v4467 = vmax.f32 %v4395, 0.0
    %v4468 = vmax.f32 %v4397, 0.0
    %v4469 = vmax.f32 %v4400, 0.0
    %v4470 = vmax.f32 %v4402, 0.0
    %v4471 = vmax.f32 %v4405, 0.0
    %v4472 = vmax.f32 %v4407, 0.0
    %v4473 = vpack.c.bf16 %v4410, %v4409
    %v4474 = vpack.c.bf16 %v4412, %v4411
    %v4475 = vpack.c.bf16 %v4414, %v4413
    %v4476 = vpack.c.bf16 %v4416, %v4415
    %v4477 = vpack.c.bf16 %v4418, %v4417
    %v4478 = vpack.c.bf16 %v4420, %v4419
    %v4479 = vpack.c.bf16 %v4422, %v4421
    %v4480 = vpack.c.bf16 %v4424, %v4423
    %v4481 = vpack.c.bf16 %v4426, %v4425
    %v4482 = vpack.c.bf16 %v4428, %v4427
    %v4483 = vpack.c.bf16 %v4430, %v4429
    %v4484 = vpack.c.bf16 %v4432, %v4431
    %v4485 = vpack.c.bf16 %v4434, %v4433
    %v4486 = vpack.c.bf16 %v4436, %v4435
    %v4487 = vpack.c.bf16 %v4438, %v4437
    %v4488 = vpack.c.bf16 %v4440, %v4439
    %v4489 = vpack.c.bf16 %v4442, %v4441
    %v4490 = vpack.c.bf16 %v4444, %v4443
    %v4491 = vpack.c.bf16 %v4446, %v4445
    %v4492 = vpack.c.bf16 %v4448, %v4447
    %v4493 = vpack.c.bf16 %v4450, %v4449
    %v4494 = vpack.c.bf16 %v4452, %v4451
    %v4495 = vpack.c.bf16 %v4454, %v4453
    %v4496 = vpack.c.bf16 %v4456, %v4455
    %v4497 = vpack.c.bf16 %v4458, %v4457
    %v4498 = vpack.c.bf16 %v4460, %v4459
    %v4499 = vpack.c.bf16 %v4462, %v4461
    %v4500 = vpack.c.bf16 %v4464, %v4463
    %v4501 = vpack.c.bf16 %v4466, %v4465
    %v4502 = vpack.c.bf16 %v4468, %v4467
    %v4503 = vpack.c.bf16 %v4470, %v4469
    %v4504 = vpack.c.bf16 %v4472, %v4471
    %s4505 = scalar_lea.vmem %s3, 192
    %v4506 = vld [vmem:[%s4505] sm:$0xf]
    %v4507 = vld [vmem:[%s4505 + $0x4] sm:$0xf]
    %v4508 = vld [vmem:[%s4505 + $0x8] sm:$0xf]
    %v4509 = vld [vmem:[%s4505 + $0xc] sm:$0xf]
    %v4510 = vld [vmem:[%s4505 + $0x10] sm:$0xf]
    %v4511 = vld [vmem:[%s4505 + $0x14] sm:$0xf]
    %v4512 = vld [vmem:[%s4 + $0x8] sm:$0x1]
    %v4513 = vperm.slane %v4512, 0
    %v4520 = vunpack.c.l.b16 %v4506
    %v4521 = vunpack.c.l.b16 %v4507
    %v4522 = vunpack.c.l.b16 %v4508
    %v4523 = vunpack.c.l.b16 %v4509
    %v4524 = vunpack.c.l.b16 %v4510
    %v4525 = vunpack.c.l.b16 %v4511
    %v4526 = vpack.c.b16 %v4521, %v4520
    %v4527 = vpack.c.b16 %v4523, %v4522
    %v4528 = vpack.c.b16 %v4525, %v4524
    %v4533 = vsel %vm976, %v4473, 0
    %v4536 = vsel %vm976, %v4474, 0
    %v4539 = vsel %vm976, %v4475, 0
    %v4542 = vsel %vm976, %v4476, 0
    %v4545 = vsel %vm976, %v4477, 0
    %v4548 = vsel %vm976, %v4478, 0
    %v4551 = vsel %vm976, %v4479, 0
    %v4554 = vsel %vm976, %v4480, 0
    %v4557 = vsel %vm976, %v4481, 0
    %v4560 = vsel %vm976, %v4482, 0
    %v4563 = vsel %vm976, %v4483, 0
    %v4566 = vsel %vm976, %v4484, 0
    %v4569 = vsel %vm976, %v4485, 0
    %v4572 = vsel %vm976, %v4486, 0
    %v4575 = vsel %vm976, %v4487, 0
    %v4578 = vsel %vm976, %v4488, 0
    %v4581 = vsel %vm976, %v4489, 0
    %v4584 = vsel %vm976, %v4490, 0
    %v4587 = vsel %vm976, %v4491, 0
    %v4590 = vsel %vm976, %v4492, 0
    %v4593 = vsel %vm976, %v4493, 0
    %v4596 = vsel %vm976, %v4494, 0
    %v4599 = vsel %vm976, %v4495, 0
    %v4602 = vsel %vm976, %v4496, 0
    %v4605 = vsel %vm976, %v4497, 0
    %v4608 = vsel %vm976, %v4498, 0
    %v4611 = vsel %vm976, %v4499, 0
    %v4614 = vsel %vm976, %v4500, 0
    %v4617 = vsel %vm976, %v4501, 0
    %v4620 = vsel %vm976, %v4502, 0
    %v4623 = vsel %vm976, %v4503, 0
    %v4626 = vsel %vm976, %v4504, 0
    %4628 = vmatpush.bf16.msra.mxu0 0
    %4629 = vmatpush.bf16.msra.mxu0 0
    %4630 = vmatpush.bf16.msra.mxu0 0
    %4631 = vmatpush.bf16.msra.mxu0 0
    %4632 = vmatpush.bf16.msra.mxu0 0
    %4633 = vmatpush.bf16.msra.mxu0 %v4528
    %4634 = vmatpush.bf16.msra.mxu0 %v4527
    %4635 = vmatpush.bf16.msra.mxu0 %v4526
    %4636 = vmatmul.bf16.gmra.mxu0 %v4533
    %v4637 = vpop.f32.mrf.mxu0
    %v4638 = vadd.f32 %v4513, %v4637
    %v4639 = vpop.f32.mrf.mxu0
    %v4640 = vadd.f32 %v4513, %v4639
    %4641 = vmatmul.bf16.gmra.mxu0 %v4536
    %v4642 = vpop.f32.mrf.mxu0
    %v4643 = vadd.f32 %v4513, %v4642
    %v4644 = vpop.f32.mrf.mxu0
    %v4645 = vadd.f32 %v4513, %v4644
    %4646 = vmatmul.bf16.gmra.mxu0 %v4539
    %v4647 = vpop.f32.mrf.mxu0
    %v4648 = vadd.f32 %v4513, %v4647
    %v4649 = vpop.f32.mrf.mxu0
    %v4650 = vadd.f32 %v4513, %v4649
    %4651 = vmatmul.bf16.gmra.mxu0 %v4542
    %v4652 = vpop.f32.mrf.mxu0
    %v4653 = vadd.f32 %v4513, %v4652
    %v4654 = vpop.f32.mrf.mxu0
    %v4655 = vadd.f32 %v4513, %v4654
    %4656 = vmatmul.bf16.gmra.mxu0 %v4545
    %v4657 = vpop.f32.mrf.mxu0
    %v4658 = vadd.f32 %v4513, %v4657
    %v4659 = vpop.f32.mrf.mxu0
    %v4660 = vadd.f32 %v4513, %v4659
    %4661 = vmatmul.bf16.gmra.mxu0 %v4548
    %v4662 = vpop.f32.mrf.mxu0
    %v4663 = vadd.f32 %v4513, %v4662
    %v4664 = vpop.f32.mrf.mxu0
    %v4665 = vadd.f32 %v4513, %v4664
    %4666 = vmatmul.bf16.gmra.mxu0 %v4551
    %v4667 = vpop.f32.mrf.mxu0
    %v4668 = vadd.f32 %v4513, %v4667
    %v4669 = vpop.f32.mrf.mxu0
    %v4670 = vadd.f32 %v4513, %v4669
    %4671 = vmatmul.bf16.gmra.mxu0 %v4554
    %v4672 = vpop.f32.mrf.mxu0
    %v4673 = vadd.f32 %v4513, %v4672
    %v4674 = vpop.f32.mrf.mxu0
    %v4675 = vadd.f32 %v4513, %v4674
    %4676 = vmatmul.bf16.gmra.mxu0 %v4557
    %v4677 = vpop.f32.mrf.mxu0
    %v4678 = vadd.f32 %v4513, %v4677
    %v4679 = vpop.f32.mrf.mxu0
    %v4680 = vadd.f32 %v4513, %v4679
    %4681 = vmatmul.bf16.gmra.mxu0 %v4560
    %v4682 = vpop.f32.mrf.mxu0
    %v4683 = vadd.f32 %v4513, %v4682
    %v4684 = vpop.f32.mrf.mxu0
    %v4685 = vadd.f32 %v4513, %v4684
    %4686 = vmatmul.bf16.gmra.mxu0 %v4563
    %v4687 = vpop.f32.mrf.mxu0
    %v4688 = vadd.f32 %v4513, %v4687
    %v4689 = vpop.f32.mrf.mxu0
    %v4690 = vadd.f32 %v4513, %v4689
    %4691 = vmatmul.bf16.gmra.mxu0 %v4566
    %v4692 = vpop.f32.mrf.mxu0
    %v4693 = vadd.f32 %v4513, %v4692
    %v4694 = vpop.f32.mrf.mxu0
    %v4695 = vadd.f32 %v4513, %v4694
    %4696 = vmatmul.bf16.gmra.mxu0 %v4569
    %v4697 = vpop.f32.mrf.mxu0
    %v4698 = vadd.f32 %v4513, %v4697
    %v4699 = vpop.f32.mrf.mxu0
    %v4700 = vadd.f32 %v4513, %v4699
    %4701 = vmatmul.bf16.gmra.mxu0 %v4572
    %v4702 = vpop.f32.mrf.mxu0
    %v4703 = vadd.f32 %v4513, %v4702
    %v4704 = vpop.f32.mrf.mxu0
    %v4705 = vadd.f32 %v4513, %v4704
    %4706 = vmatmul.bf16.gmra.mxu0 %v4575
    %v4707 = vpop.f32.mrf.mxu0
    %v4708 = vadd.f32 %v4513, %v4707
    %v4709 = vpop.f32.mrf.mxu0
    %v4710 = vadd.f32 %v4513, %v4709
    %4711 = vmatmul.bf16.gmra.mxu0 %v4578
    %v4712 = vpop.f32.mrf.mxu0
    %v4713 = vadd.f32 %v4513, %v4712
    %v4714 = vpop.f32.mrf.mxu0
    %v4715 = vadd.f32 %v4513, %v4714
    %4716 = vmatmul.bf16.gmra.mxu0 %v4581
    %v4717 = vpop.f32.mrf.mxu0
    %v4718 = vadd.f32 %v4513, %v4717
    %v4719 = vpop.f32.mrf.mxu0
    %v4720 = vadd.f32 %v4513, %v4719
    %4721 = vmatmul.bf16.gmra.mxu0 %v4584
    %v4722 = vpop.f32.mrf.mxu0
    %v4723 = vadd.f32 %v4513, %v4722
    %v4724 = vpop.f32.mrf.mxu0
    %v4725 = vadd.f32 %v4513, %v4724
    %4726 = vmatmul.bf16.gmra.mxu0 %v4587
    %v4727 = vpop.f32.mrf.mxu0
    %v4728 = vadd.f32 %v4513, %v4727
    %v4729 = vpop.f32.mrf.mxu0
    %v4730 = vadd.f32 %v4513, %v4729
    %4731 = vmatmul.bf16.gmra.mxu0 %v4590
    %v4732 = vpop.f32.mrf.mxu0
    %v4733 = vadd.f32 %v4513, %v4732
    %v4734 = vpop.f32.mrf.mxu0
    %v4735 = vadd.f32 %v4513, %v4734
    %4736 = vmatmul.bf16.gmra.mxu0 %v4593
    %v4737 = vpop.f32.mrf.mxu0
    %v4738 = vadd.f32 %v4513, %v4737
    %v4739 = vpop.f32.mrf.mxu0
    %v4740 = vadd.f32 %v4513, %v4739
    %4741 = vmatmul.bf16.gmra.mxu0 %v4596
    %v4742 = vpop.f32.mrf.mxu0
    %v4743 = vadd.f32 %v4513, %v4742
    %v4744 = vpop.f32.mrf.mxu0
    %v4745 = vadd.f32 %v4513, %v4744
    %4746 = vmatmul.bf16.gmra.mxu0 %v4599
    %v4747 = vpop.f32.mrf.mxu0
    %v4748 = vadd.f32 %v4513, %v4747
    %v4749 = vpop.f32.mrf.mxu0
    %v4750 = vadd.f32 %v4513, %v4749
    %4751 = vmatmul.bf16.gmra.mxu0 %v4602
    %v4752 = vpop.f32.mrf.mxu0
    %v4753 = vadd.f32 %v4513, %v4752
    %v4754 = vpop.f32.mrf.mxu0
    %v4755 = vadd.f32 %v4513, %v4754
    %4756 = vmatmul.bf16.gmra.mxu0 %v4605
    %v4757 = vpop.f32.mrf.mxu0
    %v4758 = vadd.f32 %v4513, %v4757
    %v4759 = vpop.f32.mrf.mxu0
    %v4760 = vadd.f32 %v4513, %v4759
    %4761 = vmatmul.bf16.gmra.mxu0 %v4608
    %v4762 = vpop.f32.mrf.mxu0
    %v4763 = vadd.f32 %v4513, %v4762
    %v4764 = vpop.f32.mrf.mxu0
    %v4765 = vadd.f32 %v4513, %v4764
    %4766 = vmatmul.bf16.gmra.mxu0 %v4611
    %v4767 = vpop.f32.mrf.mxu0
    %v4768 = vadd.f32 %v4513, %v4767
    %v4769 = vpop.f32.mrf.mxu0
    %v4770 = vadd.f32 %v4513, %v4769
    %4771 = vmatmul.bf16.gmra.mxu0 %v4614
    %v4772 = vpop.f32.mrf.mxu0
    %v4773 = vadd.f32 %v4513, %v4772
    %v4774 = vpop.f32.mrf.mxu0
    %v4775 = vadd.f32 %v4513, %v4774
    %4776 = vmatmul.bf16.gmra.mxu0 %v4617
    %v4777 = vpop.f32.mrf.mxu0
    %v4778 = vadd.f32 %v4513, %v4777
    %v4779 = vpop.f32.mrf.mxu0
    %v4780 = vadd.f32 %v4513, %v4779
    %4781 = vmatmul.bf16.gmra.mxu0 %v4620
    %v4782 = vpop.f32.mrf.mxu0
    %v4783 = vadd.f32 %v4513, %v4782
    %v4784 = vpop.f32.mrf.mxu0
    %v4785 = vadd.f32 %v4513, %v4784
    %4786 = vmatmul.bf16.gmra.mxu0 %v4623
    %v4787 = vpop.f32.mrf.mxu0
    %v4788 = vadd.f32 %v4513, %v4787
    %v4789 = vpop.f32.mrf.mxu0
    %v4790 = vadd.f32 %v4513, %v4789
    %4791 = vmatmul.bf16.gmra.mxu0 %v4626
    %v4792 = vpop.f32.mrf.mxu0
    %v4793 = vadd.f32 %v4513, %v4792
    %v4794 = vpop.f32.mrf.mxu0
    %v4795 = vadd.f32 %v4513, %v4794
    %4796 = vdwg.mxu0
    %v4797 = vadd.f32 %v4638, %v4021
    %v4798 = vadd.f32 %v4640, %v4022
    %v4799 = vadd.f32 %v4643, %v4023
    %v4800 = vadd.f32 %v4645, %v4024
    %v4801 = vadd.f32 %v4648, %v4025
    %v4802 = vadd.f32 %v4650, %v4026
    %v4803 = vadd.f32 %v4653, %v4027
    %v4804 = vadd.f32 %v4655, %v4028
    %v4805 = vadd.f32 %v4658, %v4029
    %v4806 = vadd.f32 %v4660, %v4030
    %v4807 = vadd.f32 %v4663, %v4031
    %v4808 = vadd.f32 %v4665, %v4032
    %v4809 = vadd.f32 %v4668, %v4033
    %v4810 = vadd.f32 %v4670, %v4034
    %v4811 = vadd.f32 %v4673, %v4035
    %v4812 = vadd.f32 %v4675, %v4036
    %v4813 = vadd.f32 %v4678, %v4037
    %v4814 = vadd.f32 %v4680, %v4038
    %v4815 = vadd.f32 %v4683, %v4039
    %v4816 = vadd.f32 %v4685, %v4040
    %v4817 = vadd.f32 %v4688, %v4041
    %v4818 = vadd.f32 %v4690, %v4042
    %v4819 = vadd.f32 %v4693, %v4043
    %v4820 = vadd.f32 %v4695, %v4044
    %v4821 = vadd.f32 %v4698, %v4045
    %v4822 = vadd.f32 %v4700, %v4046
    %v4823 = vadd.f32 %v4703, %v4047
    %v4824 = vadd.f32 %v4705, %v4048
    %v4825 = vadd.f32 %v4708, %v4049
    %v4826 = vadd.f32 %v4710, %v4050
    %v4827 = vadd.f32 %v4713, %v4051
    %v4828 = vadd.f32 %v4715, %v4052
    %v4829 = vadd.f32 %v4718, %v4053
    %v4830 = vadd.f32 %v4720, %v4054
    %v4831 = vadd.f32 %v4723, %v4055
    %v4832 = vadd.f32 %v4725, %v4056
    %v4833 = vadd.f32 %v4728, %v4057
    %v4834 = vadd.f32 %v4730, %v4058
    %v4835 = vadd.f32 %v4733, %v4059
    %v4836 = vadd.f32 %v4735, %v4060
    %v4837 = vadd.f32 %v4738, %v4061
    %v4838 = vadd.f32 %v4740, %v4062
    %v4839 = vadd.f32 %v4743, %v4063
    %v4840 = vadd.f32 %v4745, %v4064
    %v4841 = vadd.f32 %v4748, %v4065
    %v4842 = vadd.f32 %v4750, %v4066
    %v4843 = vadd.f32 %v4753, %v4067
    %v4844 = vadd.f32 %v4755, %v4068
    %v4845 = vadd.f32 %v4758, %v4069
    %v4846 = vadd.f32 %v4760, %v4070
    %v4847 = vadd.f32 %v4763, %v4071
    %v4848 = vadd.f32 %v4765, %v4072
    %v4849 = vadd.f32 %v4768, %v4073
    %v4850 = vadd.f32 %v4770, %v4074
    %v4851 = vadd.f32 %v4773, %v4075
    %v4852 = vadd.f32 %v4775, %v4076
    %v4853 = vadd.f32 %v4778, %v4077
    %v4854 = vadd.f32 %v4780, %v4078
    %v4855 = vadd.f32 %v4783, %v4079
    %v4856 = vadd.f32 %v4785, %v4080
    %v4857 = vadd.f32 %v4788, %v4081
    %v4858 = vadd.f32 %v4790, %v4082
    %v4859 = vadd.f32 %v4793, %v4083
    %v4860 = vadd.f32 %v4795, %v4084
    %v4861 = vmax.f32 %v4797, 0.0
    %v4862 = vmax.f32 %v4798, 0.0
    %v4863 = vmax.f32 %v4799, 0.0
    %v4864 = vmax.f32 %v4800, 0.0
    %v4865 = vmax.f32 %v4801, 0.0
    %v4866 = vmax.f32 %v4802, 0.0
    %v4867 = vmax.f32 %v4803, 0.0
    %v4868 = vmax.f32 %v4804, 0.0
    %v4869 = vmax.f32 %v4805, 0.0
    %v4870 = vmax.f32 %v4806, 0.0
    %v4871 = vmax.f32 %v4807, 0.0
    %v4872 = vmax.f32 %v4808, 0.0
    %v4873 = vmax.f32 %v4809, 0.0
    %v4874 = vmax.f32 %v4810, 0.0
    %v4875 = vmax.f32 %v4811, 0.0
    %v4876 = vmax.f32 %v4812, 0.0
    %v4877 = vmax.f32 %v4813, 0.0
    %v4878 = vmax.f32 %v4814, 0.0
    %v4879 = vmax.f32 %v4815, 0.0
    %v4880 = vmax.f32 %v4816, 0.0
    %v4881 = vmax.f32 %v4817, 0.0
    %v4882 = vmax.f32 %v4818, 0.0
    %v4883 = vmax.f32 %v4819, 0.0
    %v4884 = vmax.f32 %v4820, 0.0
    %v4885 = vmax.f32 %v4821, 0.0
    %v4886 = vmax.f32 %v4822, 0.0
    %v4887 = vmax.f32 %v4823, 0.0
    %v4888 = vmax.f32 %v4824, 0.0
    %v4889 = vmax.f32 %v4825, 0.0
    %v4890 = vmax.f32 %v4826, 0.0
    %v4891 = vmax.f32 %v4827, 0.0
    %v4892 = vmax.f32 %v4828, 0.0
    %v4893 = vmax.f32 %v4829, 0.0
    %v4894 = vmax.f32 %v4830, 0.0
    %v4895 = vmax.f32 %v4831, 0.0
    %v4896 = vmax.f32 %v4832, 0.0
    %v4897 = vmax.f32 %v4833, 0.0
    %v4898 = vmax.f32 %v4834, 0.0
    %v4899 = vmax.f32 %v4835, 0.0
    %v4900 = vmax.f32 %v4836, 0.0
    %v4901 = vmax.f32 %v4837, 0.0
    %v4902 = vmax.f32 %v4838, 0.0
    %v4903 = vmax.f32 %v4839, 0.0
    %v4904 = vmax.f32 %v4840, 0.0
    %v4905 = vmax.f32 %v4841, 0.0
    %v4906 = vmax.f32 %v4842, 0.0
    %v4907 = vmax.f32 %v4843, 0.0
    %v4908 = vmax.f32 %v4844, 0.0
    %v4909 = vmax.f32 %v4845, 0.0
    %v4910 = vmax.f32 %v4846, 0.0
    %v4911 = vmax.f32 %v4847, 0.0
    %v4912 = vmax.f32 %v4848, 0.0
    %v4913 = vmax.f32 %v4849, 0.0
    %v4914 = vmax.f32 %v4850, 0.0
    %v4915 = vmax.f32 %v4851, 0.0
    %v4916 = vmax.f32 %v4852, 0.0
    %v4917 = vmax.f32 %v4853, 0.0
    %v4918 = vmax.f32 %v4854, 0.0
    %v4919 = vmax.f32 %v4855, 0.0
    %v4920 = vmax.f32 %v4856, 0.0
    %v4921 = vmax.f32 %v4857, 0.0
    %v4922 = vmax.f32 %v4858, 0.0
    %v4923 = vmax.f32 %v4859, 0.0
    %v4924 = vmax.f32 %v4860, 0.0
    %s4925 = scalar_lea.vmem %s3, 216
    %v4926 = vld [vmem:[%s4925] sm:$0xf]
    %v4927 = vld [vmem:[%s4 + $0x9] sm:$0x1]
    %v4928 = vpack.c.bf16 %v4862, %v4861
    %v4929 = vpack.c.bf16 %v4864, %v4863
    %v4930 = vpack.c.bf16 %v4866, %v4865
    %v4931 = vpack.c.bf16 %v4868, %v4867
    %v4932 = vpack.c.bf16 %v4870, %v4869
    %v4933 = vpack.c.bf16 %v4872, %v4871
    %v4934 = vpack.c.bf16 %v4874, %v4873
    %v4935 = vpack.c.bf16 %v4876, %v4875
    %v4936 = vpack.c.bf16 %v4878, %v4877
    %v4937 = vpack.c.bf16 %v4880, %v4879
    %v4938 = vpack.c.bf16 %v4882, %v4881
    %v4939 = vpack.c.bf16 %v4884, %v4883
    %v4940 = vpack.c.bf16 %v4886, %v4885
    %v4941 = vpack.c.bf16 %v4888, %v4887
    %v4942 = vpack.c.bf16 %v4890, %v4889
    %v4943 = vpack.c.bf16 %v4892, %v4891
    %v4944 = vpack.c.bf16 %v4894, %v4893
    %v4945 = vpack.c.bf16 %v4896, %v4895
    %v4946 = vpack.c.bf16 %v4898, %v4897
    %v4947 = vpack.c.bf16 %v4900, %v4899
    %v4948 = vpack.c.bf16 %v4902, %v4901
    %v4949 = vpack.c.bf16 %v4904, %v4903
    %v4950 = vpack.c.bf16 %v4906, %v4905
    %v4951 = vpack.c.bf16 %v4908, %v4907
    %v4952 = vpack.c.bf16 %v4910, %v4909
    %v4953 = vpack.c.bf16 %v4912, %v4911
    %v4954 = vpack.c.bf16 %v4914, %v4913
    %v4955 = vpack.c.bf16 %v4916, %v4915
    %v4956 = vpack.c.bf16 %v4918, %v4917
    %v4957 = vpack.c.bf16 %v4920, %v4919
    %v4958 = vpack.c.bf16 %v4922, %v4921
    %v4959 = vpack.c.bf16 %v4924, %v4923
    %4961 = vset.pattern.permute.xlu0 0
    %4962 = vperm.xlu0 %4961, %v4927
    %v4963 = vpop.permute.xlu0 %4962
    %v4966 = vsel %vm976, %v4926, 0
    %v4969 = vsel %vm976, %v4928, 0
    %v4972 = vsel %vm976, %v4929, 0
    %v4975 = vsel %vm976, %v4930, 0
    %v4978 = vsel %vm976, %v4931, 0
    %v4981 = vsel %vm976, %v4932, 0
    %v4984 = vsel %vm976, %v4933, 0
    %v4987 = vsel %vm976, %v4934, 0
    %v4990 = vsel %vm976, %v4935, 0
    %v4993 = vsel %vm976, %v4936, 0
    %v4996 = vsel %vm976, %v4937, 0
    %v4999 = vsel %vm976, %v4938, 0
    %v5002 = vsel %vm976, %v4939, 0
    %v5005 = vsel %vm976, %v4940, 0
    %v5008 = vsel %vm976, %v4941, 0
    %v5011 = vsel %vm976, %v4942, 0
    %v5014 = vsel %vm976, %v4943, 0
    %v5017 = vsel %vm976, %v4944, 0
    %v5020 = vsel %vm976, %v4945, 0
    %v5023 = vsel %vm976, %v4946, 0
    %v5026 = vsel %vm976, %v4947, 0
    %v5029 = vsel %vm976, %v4948, 0
    %v5032 = vsel %vm976, %v4949, 0
    %v5035 = vsel %vm976, %v4950, 0
    %v5038 = vsel %vm976, %v4951, 0
    %v5041 = vsel %vm976, %v4952, 0
    %v5044 = vsel %vm976, %v4953, 0
    %v5047 = vsel %vm976, %v4954, 0
    %v5050 = vsel %vm976, %v4955, 0
    %v5053 = vsel %vm976, %v4956, 0
    %v5056 = vsel %vm976, %v4957, 0
    %v5059 = vsel %vm976, %v4958, 0
    %v5062 = vsel %vm976, %v4959, 0
    %5064 = vmatpush.bf16.xpose.msra.mxu0 %v4990
    %5065 = vmatpush.bf16.xpose.msra.mxu0 %v4987
    %5066 = vmatpush.bf16.xpose.msra.mxu0 %v4984
    %5067 = vmatpush.bf16.xpose.msra.mxu0 %v4981
    %5068 = vmatpush.bf16.xpose.msra.mxu0 %v4978
    %5069 = vmatpush.bf16.xpose.msra.mxu0 %v4975
    %5070 = vmatpush.bf16.xpose.msra.mxu0 %v4972
    %5071 = vmatpush.bf16.xpose.msra.mxu0 %v4969
    %5072 = vmatmul.bf16.gmra.mxu0 %v4966
    %v5073 = vpop.f32.mrf.mxu0
    %v5074 = vadd.f32 %v4963, %v5073
    %v5075 = vpop.f32.mrf.mxu0
    %5076 = vdwg.mxu0
    %5077 = vmatpush.bf16.xpose.msra.mxu0 %v5014
    %5078 = vmatpush.bf16.xpose.msra.mxu0 %v5011
    %5079 = vmatpush.bf16.xpose.msra.mxu0 %v5008
    %5080 = vmatpush.bf16.xpose.msra.mxu0 %v5005
    %5081 = vmatpush.bf16.xpose.msra.mxu0 %v5002
    %5082 = vmatpush.bf16.xpose.msra.mxu0 %v4999
    %5083 = vmatpush.bf16.xpose.msra.mxu0 %v4996
    %5084 = vmatpush.bf16.xpose.msra.mxu0 %v4993
    %5085 = vmatmul.bf16.gmra.mxu0 %v4966
    %v5086 = vpop.f32.mrf.mxu0
    %v5087 = vadd.f32 %v4963, %v5086
    %v5088 = vpop.f32.mrf.mxu0
    %5089 = vdwg.mxu0
    %5090 = vmatpush.bf16.xpose.msra.mxu0 %v5038
    %5091 = vmatpush.bf16.xpose.msra.mxu0 %v5035
    %5092 = vmatpush.bf16.xpose.msra.mxu0 %v5032
    %5093 = vmatpush.bf16.xpose.msra.mxu0 %v5029
    %5094 = vmatpush.bf16.xpose.msra.mxu0 %v5026
    %5095 = vmatpush.bf16.xpose.msra.mxu0 %v5023
    %5096 = vmatpush.bf16.xpose.msra.mxu0 %v5020
    %5097 = vmatpush.bf16.xpose.msra.mxu0 %v5017
    %5098 = vmatmul.bf16.gmra.mxu0 %v4966
    %v5099 = vpop.f32.mrf.mxu0
    %v5100 = vadd.f32 %v4963, %v5099
    %v5101 = vpop.f32.mrf.mxu0
    %5102 = vdwg.mxu0
    %5103 = vmatpush.bf16.xpose.msra.mxu0 %v5062
    %5104 = vmatpush.bf16.xpose.msra.mxu0 %v5059
    %5105 = vmatpush.bf16.xpose.msra.mxu0 %v5056
    %5106 = vmatpush.bf16.xpose.msra.mxu0 %v5053
    %5107 = vmatpush.bf16.xpose.msra.mxu0 %v5050
    %5108 = vmatpush.bf16.xpose.msra.mxu0 %v5047
    %5109 = vmatpush.bf16.xpose.msra.mxu0 %v5044
    %5110 = vmatpush.bf16.xpose.msra.mxu0 %v5041
    %5111 = vmatmul.bf16.gmra.mxu0 %v4966
    %v5112 = vpop.f32.mrf.mxu0
    %v5113 = vadd.f32 %v4963, %v5112
    %v5114 = vpop.f32.mrf.mxu0
    %5115 = vdwg.mxu0
    %v5116 = vxor.u32 %v5074, 2147483648
    %v5117 = vxor.u32 %v5087, 2147483648
    %v5118 = vxor.u32 %v5100, 2147483648
    %v5119 = vxor.u32 %v5113, 2147483648
    %v5120 = vmul.f32 %v5116, 1.442695
    %v5121 = vpow.pop %v5120
    %v5122 = vmul.f32 %v5117, 1.442695
    %v5123 = vpow.pop %v5122
    %v5124 = vmul.f32 %v5118, 1.442695
    %v5125 = vpow.pop %v5124
    %v5126 = vmul.f32 %v5119, 1.442695
    %v5127 = vpow.pop %v5126
    %v5128 = vadd.f32 %v5121, 1.0
    %v5129 = vadd.f32 %v5123, 1.0
    %v5130 = vadd.f32 %v5125, 1.0
    %v5131 = vadd.f32 %v5127, 1.0
    %v5132 = vrcp.pop %v5128
    %v5133 = vmul.f32 %v5128, %v5132
    %v5134 = vsub.f32 1.0, %v5133
    %v5135 = vmul.f32 %v5132, %v5134
    %v5136 = vadd.f32 %v5132, %v5135
    %vm5137 = vweird.f32 %v5128
    %vm5138 = vweird.f32 %v5132
    %vm5139 = vmor %vm5137, %vm5138
    %v5140 = vsel %vm5139, %v5132, %v5136
    %v5141 = vand.u32 2147483647, %v5128
    %vm5142 = vcmp.eq.f32.partialorder %v5141, 8.507059e+37
    %v5143 = vand.u32 %v5128, 2147483648
    %v5144 = vor.u32 1.1754944e-38, %v5143
    %v5145 = vsel %vm5142, %v5144, %v5140
    %v5146 = vmul.f32 1.0, %v5145
    %v5147 = vrcp.pop %v5129
    %v5148 = vmul.f32 %v5129, %v5147
    %v5149 = vsub.f32 1.0, %v5148
    %v5150 = vmul.f32 %v5147, %v5149
    %v5151 = vadd.f32 %v5147, %v5150
    %vm5152 = vweird.f32 %v5129
    %vm5153 = vweird.f32 %v5147
    %vm5154 = vmor %vm5152, %vm5153
    %v5155 = vsel %vm5154, %v5147, %v5151
    %v5156 = vand.u32 2147483647, %v5129
    %vm5157 = vcmp.eq.f32.partialorder %v5156, 8.507059e+37
    %v5158 = vand.u32 %v5129, 2147483648
    %v5159 = vor.u32 1.1754944e-38, %v5158
    %v5160 = vsel %vm5157, %v5159, %v5155
    %v5161 = vmul.f32 1.0, %v5160
    %v5162 = vrcp.pop %v5130
    %v5163 = vmul.f32 %v5130, %v5162
    %v5164 = vsub.f32 1.0, %v5163
    %v5165 = vmul.f32 %v5162, %v5164
    %v5166 = vadd.f32 %v5162, %v5165
    %vm5167 = vweird.f32 %v5130
    %vm5168 = vweird.f32 %v5162
    %vm5169 = vmor %vm5167, %vm5168
    %v5170 = vsel %vm5169, %v5162, %v5166
    %v5171 = vand.u32 2147483647, %v5130
    %vm5172 = vcmp.eq.f32.partialorder %v5171, 8.507059e+37
    %v5173 = vand.u32 %v5130, 2147483648
    %v5174 = vor.u32 1.1754944e-38, %v5173
    %v5175 = vsel %vm5172, %v5174, %v5170
    %v5176 = vmul.f32 1.0, %v5175
    %v5177 = vrcp.pop %v5131
    %v5178 = vmul.f32 %v5131, %v5177
    %v5179 = vsub.f32 1.0, %v5178
    %v5180 = vmul.f32 %v5177, %v5179
    %v5181 = vadd.f32 %v5177, %v5180
    %vm5182 = vweird.f32 %v5131
    %vm5183 = vweird.f32 %v5177
    %vm5184 = vmor %vm5182, %vm5183
    %v5185 = vsel %vm5184, %v5177, %v5181
    %v5186 = vand.u32 2147483647, %v5131
    %vm5187 = vcmp.eq.f32.partialorder %v5186, 8.507059e+37
    %v5188 = vand.u32 %v5131, 2147483648
    %v5189 = vor.u32 1.1754944e-38, %v5188
    %v5190 = vsel %vm5187, %v5189, %v5185
    %v5191 = vmul.f32 1.0, %v5190
    %v5196 = vrot.slane %v5161, 7
    %v5197 = vrot.slane %v5176, 6
    %v5198 = vrot.slane %v5191, 5
    %vm5199 = vcmask 1040384
    %v5200 = vsel %vm5199, %v5146, %v5196
    %vm5201 = vcmask 1042434
    %v5202 = vsel %vm5201, %v5197, %v5198
    %vm5203 = vcmask 1041408
    %v5204 = vsel %vm5203, %v5200, %v5202
    %v5206 = vlaneseq
    %vm5207 = vcmp.ge.s32.totalorder %v5206, 0
    %vm5208 = vcmp.lt.s32.totalorder %v5206, 512
    %vm5209 = vmand %vm5207, %vm5208
    %5210 = vst.msk [vmem:[#allocation2] sm:$0xf] %vm5209, %v5204
    // Predicated region
    $region22: #{tpu_custom_call.1} parent=1 // pred_check
      _
    $region23: #{tpu_custom_call.1} parent=1 // pred_check_branch
      %5212 = sbr.rel (0) target = $region25
    $region24: #{tpu_custom_call.1} parent=1 // pred_region
      %5214 = vsyncadd [#allocation3], 0
      %s5216 = sshll.u32 [#allocation2], 4
      %s5217 = int_to_ptr.vmem [resolvable:$true] %s5216
      %s5218 = sshll.u32 %s5, 4
      %s5219 = int_to_ptr.hbm [resolvable:$true] %s5218
      %5221 = dma.vmem_to_hbm [thread:$0]  %s5217, 64, %s5219, [#allocation3]
    $region25: #{tpu_custom_call.1} parent=1 // pred_fallthru
      _
    // Predicated region
    $region26: #{tpu_custom_call.1} parent=1 // pred_check
      _
    $region27: #{tpu_custom_call.1} parent=1 // pred_check_branch
      %5223 = sbr.rel (0) target = $region29
    $region28: #{tpu_custom_call.1} parent=1 // pred_region
      %5225 = dma.done [#allocation3], 64
    $region29: #{tpu_custom_call.1} parent=1 // pred_fallthru
      _
    %5226 = vsyncpa [#allocation3], 1

</llo_original>
